<compile_context>
chip_gen: v6e
topology: v6e:2x2x1
jax: 0.10.0
libtpu: 0.0.40
codegen_flags: <defaults>
</compile_context>

<pallas_src>
import jax
import jax.numpy as jnp
from jax.experimental import pallas as pl
from jax.experimental.pallas import tpu as pltpu

# ---- model / problem sizes (small, consistent with the module) ----
INPUT_SIZE = 16
HIDDEN = 32
NUM_LAYERS = 2
NUM_REGIMES = 5
NUM_HEADS = 4
HEAD_DIM = HIDDEN // NUM_HEADS
OUT_PAD = 128          # lane-dense padded output width (sliced to NUM_REGIMES outside)
BATCH = 2
SEQ = 8


def _lstm_scan(gates_x, w_hh_t, out_buf, B, T, H):
    """Recurrent part of one LSTM layer.

    gates_x : (B, T, 4H) hoisted input projection (bias already folded in).
    w_hh_t  : (H, 4H)    pre-transposed recurrent weights.
    out_buf : VMEM ref (B, T, H) receiving h_t for every step.
    Returns the final hidden state h_T (B, H).
    PyTorch gate order: i, f, g, o.
    """
    h = jnp.zeros((B, H), jnp.float32)
    c = jnp.zeros((B, H), jnp.float32)
    for t in range(T):  # static unrolled time loop (T is small)
        g = gates_x[:, t, :] + jnp.dot(h, w_hh_t, preferred_element_type=jnp.float32)
        # 32-lane aligned static slices of the (B, 4H) gate vreg.
        i = jax.nn.sigmoid(g[:, 0 * H:1 * H])
        f = jax.nn.sigmoid(g[:, 1 * H:2 * H])
        gg = jnp.tanh(g[:, 2 * H:3 * H])
        o = jax.nn.sigmoid(g[:, 3 * H:4 * H])
        c = f * c + i * gg
        h = o * jnp.tanh(c)
        out_buf[:, t, :] = h
    return h


def regime_kernel(x_ref,
                  w_ih0_ref, w_hh0_ref, b_l0_ref,
                  w_ih1_ref, w_hh1_ref, b_l1_ref,
                  wq_ref, bq_ref, wkv_ref, bkv_ref,
                  hsum_ref, hexp_ref,
                  wf1_ref, bf1_ref, w2_ref, b_fc2_ref,
                  out_ref,
                  h1_buf, h2_buf):
    B, T, F = x_ref.shape
    H = HIDDEN
    f32 = jnp.float32

    # ---------------- LSTM layer 0 ----------------
    # Hoisted input projection: one (B*T, F) x (F, 4H) matmul, bias folded in.
    x2d = x_ref[...].reshape(B * T, F)
    gx0 = (jnp.dot(x2d, w_ih0_ref[...], preferred_element_type=f32)
           + b_l0_ref[...]).reshape(B, T, 4 * H)
    _lstm_scan(gx0, w_hh0_ref[...], h1_buf, B, T, H)

    # ---------------- LSTM layer 1 ----------------
    h1_2d = h1_buf[...].reshape(B * T, H)
    gx1 = (jnp.dot(h1_2d, w_ih1_ref[...], preferred_element_type=f32)
           + b_l1_ref[...]).reshape(B, T, 4 * H)
    h2_last = _lstm_scan(gx1, w_hh1_ref[...], h2_buf, B, T, H)   # == lstm_out[:, -1, :]

    # -------- Multi-head self-attention, last query position only --------
    kv2d = h2_buf[...].reshape(B * T, H)
    # Fused K|V projection: one (B*T, H) x (H, 2H) matmul, static lane split.
    kv = jnp.dot(kv2d, wkv_ref[...], preferred_element_type=f32) + bkv_ref[...]
    k = kv[:, :H].reshape(B, T, H)
    v = kv[:, H:].reshape(B, T, H)
    # 1/sqrt(head_dim) already folded into wq/bq in the wrapper.
    q = jnp.dot(h2_last, wq_ref[...], preferred_element_type=f32) + bq_ref[...]  # (B, H)

    # Fused per-head scores: s[b,t,h] = sum_{d in head h} q[b,d]*k[b,t,d]
    # via elementwise product + head-sum matrix (H, NUM_HEADS).
    prod = q[:, None, :] * k                                      # (B, T, H)
    s = jnp.dot(prod.reshape(B * T, H), hsum_ref[...],
                preferred_element_type=f32).reshape(B, T, NUM_HEADS)
    m = jnp.max(s, axis=1, keepdims=True)
    e = jnp.exp(s - m)
    denom = jnp.sum(e, axis=1, keepdims=True)
    p = e * pl.reciprocal(denom, approx=True)                     # (B, T, NUM_HEADS)

    # Context: expand probs back across head lanes and reduce over time.
    p_exp = jnp.dot(p.reshape(B * T, NUM_HEADS), hexp_ref[...],
                    preferred_element_type=f32).reshape(B, T, H)
    ctx = jnp.sum(p_exp * v, axis=1)                              # (B, H) heads concatenated

    # ---------------- MLP head (attention out_proj folded into fc1) ----------------
    z = jnp.dot(ctx, wf1_ref[...], preferred_element_type=f32) + bf1_ref[...]
    z = jnp.maximum(z, 0.0)                                       # ReLU
    logits = jnp.dot(z, w2_ref[...], preferred_element_type=f32) + b_fc2_ref[...]
    out_ref[...] = logits                                         # (B, OUT_PAD) lane-dense store


def _prepare_params(params):
    """Transpose / fold / fuse / pad PyTorch-convention params outside the kernel."""
    (w_ih0, w_hh0, b_ih0, b_hh0,
     w_ih1, w_hh1, b_ih1, b_hh1,
     wq, wk, wv, bq, bk, bv, wo, bo,
     w1, b1, w2, b2) = params

    H = HIDDEN
    scale = 1.0 / float(HEAD_DIM) ** 0.5
    # Pre-transposed LSTM weights, combined biases.
    w_ih0_t, w_hh0_t = w_ih0.T, w_hh0.T          # (F,4H), (H,4H)
    w_ih1_t, w_hh1_t = w_ih1.T, w_hh1.T          # (H,4H), (H,4H)
    bias0 = b_ih0 + b_hh0                        # (1,4H)
    bias1 = b_ih1 + b_hh1                        # (1,4H)
    # Attention projections: scale folded into q, K|V fused into one matrix.
    wq_s = wq.T * scale                          # (H, H)
    bq_s = bq * scale                            # (1, H)
    wkv_t = jnp.concatenate([wk.T, wv.T], axis=1)  # (H, 2H)
    bkv = jnp.concatenate([bk, bv], axis=1)        # (1, 2H)
    # Head-sum / head-expand matrices (block indicator over head lanes).
    head_ids = jnp.arange(H, dtype=jnp.int32) // HEAD_DIM
    hsum = (head_ids[:, None] == jnp.arange(NUM_HEADS, dtype=jnp.int32)[None, :]
            ).astype(jnp.float32)                # (H, NUM_HEADS)
    hexp = hsum.T                                # (NUM_HEADS, H)
    # out_proj has no nonlinearity before fc1 -> fold it into fc1.
    w1_t = w1.T                                  # (H, H//2)
    w_of1 = wo.T @ w1_t                          # (H, H//2)
    b_of1 = bo @ w1_t + b1                       # (1, H//2)
    # fc2 zero-padded to OUT_PAD lanes for a dense final store.
    w2_t = jnp.zeros((H // 2, OUT_PAD), jnp.float32).at[:, :NUM_REGIMES].set(w2.T)
    b2_p = jnp.zeros((1, OUT_PAD), jnp.float32).at[:, :NUM_REGIMES].set(b2)
    return (w_ih0_t, w_hh0_t, bias0,
            w_ih1_t, w_hh1_t, bias1,
            wq_s, bq_s, wkv_t, bkv,
            hsum, hexp,
            w_of1, b_of1, w2_t, b2_p)


def lstm_regime_predictor(x, params):
    """x: (B, T, INPUT_SIZE) float32 -> (B, NUM_REGIMES) float32."""
    B, T, F = x.shape
    prep = _prepare_params(params)

    # Grid over the batch axis ("parallel" -> both TensorCores on v7x). With a
    # tiny demo batch this degenerates to grid=(1,). For throughput, grow B.
    BB = 8 if (B % 8 == 0) else B
    grid = (B // BB,)

    x_spec = pl.BlockSpec((BB, T, F), lambda i: (i, 0, 0))
    weight_specs = [pl.BlockSpec(w.shape, lambda i: (0, 0)) for w in prep]
    out_spec = pl.BlockSpec((BB, OUT_PAD), lambda i: (i, 0))

    out_pad = pl.pallas_call(
        regime_kernel,
        out_shape=jax.ShapeDtypeStruct((B, OUT_PAD), jnp.float32),
        grid=grid,
        in_specs=[x_spec] + weight_specs,
        out_specs=out_spec,
        scratch_shapes=[pltpu.VMEM((BB, T, HIDDEN), jnp.float32),   # layer-0 h sequence
                        pltpu.VMEM((BB, T, HIDDEN), jnp.float32)],  # layer-1 h sequence
        compiler_params=pltpu.CompilerParams(
            dimension_semantics=("parallel",)),
    )(x, *prep)
    return out_pad[:, :NUM_REGIMES]


def init_params(key):
    """Deterministic synthetic parameters (PyTorch (out,in) convention)."""
    ks = jax.random.split(key, 16)

    def u(k, shape, scale):
        return jax.random.uniform(k, shape, jnp.float32, -scale, scale)

    H = HIDDEN
    s = 1.0 / float(H) ** 0.5
    # LSTM layer 0 / layer 1  (weights: (4H, in), biases stored as (1, 4H))
    w_ih0 = u(ks[0], (4 * H, INPUT_SIZE), s)
    w_hh0 = u(ks[1], (4 * H, H), s)
    b_ih0 = u(ks[2], (1, 4 * H), s)
    b_hh0 = u(ks[3], (1, 4 * H), s)
    w_ih1 = u(ks[4], (4 * H, H), s)
    w_hh1 = u(ks[5], (4 * H, H), s)
    b_ih1 = u(ks[6], (1, 4 * H), s)
    b_hh1 = u(ks[7], (1, 4 * H), s)
    # MultiheadAttention: in_proj split into q/k/v, plus out_proj
    wq = u(ks[8], (H, H), s)
    wk = u(ks[9], (H, H), s)
    wv = u(ks[10], (H, H), s)
    bq = jnp.zeros((1, H), jnp.float32)
    bk = jnp.zeros((1, H), jnp.float32)
    bv = jnp.zeros((1, H), jnp.float32)
    wo = u(ks[11], (H, H), s)
    bo = jnp.zeros((1, H), jnp.float32)
    # fc1 / fc2
    w1 = u(ks[12], (H // 2, H), s)
    b1 = u(ks[13], (1, H // 2), s)
    s2 = 1.0 / float(H // 2) ** 0.5
    w2 = u(ks[14], (NUM_REGIMES, H // 2), s2)
    b2 = u(ks[15], (1, NUM_REGIMES), s2)
    return (w_ih0, w_hh0, b_ih0, b_hh0,
            w_ih1, w_hh1, b_ih1, b_hh1,
            wq, wk, wv, bq, bk, bv, wo, bo,
            w1, b1, w2, b2)


if __name__ == "__main__":
    key = jax.random.PRNGKey(0)
    kx, kp = jax.random.split(key)
    x = jax.random.normal(kx, (BATCH, SEQ, INPUT_SIZE), jnp.float32)
    params = init_params(kp)

    out = jax.jit(lstm_regime_predictor)(x, params)
    out = jax.block_until_ready(out)
    assert out.shape == (BATCH, NUM_REGIMES)
    assert bool(jnp.all(jnp.isfinite(out)))
    print("KERNEL_OK")
</pallas_src>

<mosaic_0001>
module attributes {stable_mosaic.version = 11 : i64} {
  func.func @regime_kernel(%arg0: i32, %arg1: memref<2x8x16xf32, #tpu.memory_space<vmem>>, %arg2: memref<16x128xf32, #tpu.memory_space<vmem>>, %arg3: memref<32x128xf32, #tpu.memory_space<vmem>>, %arg4: memref<1x128xf32, #tpu.memory_space<vmem>>, %arg5: memref<32x128xf32, #tpu.memory_space<vmem>>, %arg6: memref<32x128xf32, #tpu.memory_space<vmem>>, %arg7: memref<1x128xf32, #tpu.memory_space<vmem>>, %arg8: memref<32x32xf32, #tpu.memory_space<vmem>>, %arg9: memref<1x32xf32, #tpu.memory_space<vmem>>, %arg10: memref<32x64xf32, #tpu.memory_space<vmem>>, %arg11: memref<1x64xf32, #tpu.memory_space<vmem>>, %arg12: memref<32x4xf32, #tpu.memory_space<vmem>>, %arg13: memref<4x32xf32, #tpu.memory_space<vmem>>, %arg14: memref<32x16xf32, #tpu.memory_space<vmem>>, %arg15: memref<1x16xf32, #tpu.memory_space<vmem>>, %arg16: memref<16x128xf32, #tpu.memory_space<vmem>>, %arg17: memref<1x128xf32, #tpu.memory_space<vmem>>, %arg18: memref<2x128xf32, #tpu.memory_space<vmem>>, %arg19: memref<2x8x32xf32, #tpu.memory_space<vmem>>, %arg20: memref<2x8x32xf32, #tpu.memory_space<vmem>>) attributes {dimension_semantics = [#tpu.dimension_semantics<parallel>], iteration_bounds = array<i64: 1>, scalar_prefetch = 0 : i64, scratch_operands = 2 : i64, tpu.core_type = #tpu.core_type<tc>, window_params = [{transform_indices = @transform_0, window_bounds = array<i64: 2, 8, 16>}, {pipeline_mode = #tpu.pipeline_mode<synchronous>, transform_indices = @transform_1, window_bounds = array<i64: 16, 128>}, {pipeline_mode = #tpu.pipeline_mode<synchronous>, transform_indices = @transform_2, window_bounds = array<i64: 32, 128>}, {pipeline_mode = #tpu.pipeline_mode<synchronous>, transform_indices = @transform_3, window_bounds = array<i64: 1, 128>}, {pipeline_mode = #tpu.pipeline_mode<synchronous>, transform_indices = @transform_4, window_bounds = array<i64: 32, 128>}, {pipeline_mode = #tpu.pipeline_mode<synchronous>, transform_indices = @transform_5, window_bounds = array<i64: 32, 128>}, {pipeline_mode = #tpu.pipeline_mode<synchronous>, transform_indices = @transform_6, window_bounds = array<i64: 1, 128>}, {pipeline_mode = #tpu.pipeline_mode<synchronous>, transform_indices = @transform_7, window_bounds = array<i64: 32, 32>}, {pipeline_mode = #tpu.pipeline_mode<synchronous>, transform_indices = @transform_8, window_bounds = array<i64: 1, 32>}, {pipeline_mode = #tpu.pipeline_mode<synchronous>, transform_indices = @transform_9, window_bounds = array<i64: 32, 64>}, {pipeline_mode = #tpu.pipeline_mode<synchronous>, transform_indices = @transform_10, window_bounds = array<i64: 1, 64>}, {pipeline_mode = #tpu.pipeline_mode<synchronous>, transform_indices = @transform_11, window_bounds = array<i64: 32, 4>}, {pipeline_mode = #tpu.pipeline_mode<synchronous>, transform_indices = @transform_12, window_bounds = array<i64: 4, 32>}, {pipeline_mode = #tpu.pipeline_mode<synchronous>, transform_indices = @transform_13, window_bounds = array<i64: 32, 16>}, {pipeline_mode = #tpu.pipeline_mode<synchronous>, transform_indices = @transform_14, window_bounds = array<i64: 1, 16>}, {pipeline_mode = #tpu.pipeline_mode<synchronous>, transform_indices = @transform_15, window_bounds = array<i64: 16, 128>}, {pipeline_mode = #tpu.pipeline_mode<synchronous>, transform_indices = @transform_16, window_bounds = array<i64: 1, 128>}, {transform_indices = @transform_17, window_bounds = array<i64: 2, 128>}]} {
    %c0 = arith.constant 0 : index
    %c0_0 = arith.constant 0 : index
    %c0_1 = arith.constant 0 : index
    %0 = vector.load %arg1[%c0, %c0_0, %c0_1] : memref<2x8x16xf32, #tpu.memory_space<vmem>>, vector<2x8x16xf32>
    %1 = vector.shape_cast %0 : vector<2x8x16xf32> to vector<16x16xf32>
    %c0_2 = arith.constant 0 : index
    %c0_3 = arith.constant 0 : index
    %2 = vector.load %arg2[%c0_2, %c0_3] : memref<16x128xf32, #tpu.memory_space<vmem>>, vector<16x128xf32>
    %cst = arith.constant dense<0.000000e+00> : vector<16x128xf32>
    %3 = tpu.matmul %1, %2, %cst {dimension_numbers = #tpu.dot_dimension_numbers<[1], [0], [0], [1], [0, 0, 1, 1], [], []>} : vector<16x16xf32>, vector<16x128xf32>, vector<16x128xf32> -> vector<16x128xf32>
    %c0_4 = arith.constant 0 : index
    %c0_5 = arith.constant 0 : index
    %4 = vector.load %arg4[%c0_4, %c0_5] : memref<1x128xf32, #tpu.memory_space<vmem>>, vector<1x128xf32>
    %5 = vector.broadcast %4 : vector<1x128xf32> to vector<16x128xf32>
    %6 = arith.addf %3, %5 : vector<16x128xf32>
    %7 = vector.shape_cast %6 : vector<16x128xf32> to vector<2x8x128xf32>
    %c0_6 = arith.constant 0 : index
    %c0_7 = arith.constant 0 : index
    %8 = vector.load %arg3[%c0_6, %c0_7] : memref<32x128xf32, #tpu.memory_space<vmem>>, vector<32x128xf32>
    %cst_8 = arith.constant 0.000000e+00 : f32
    %9 = vector.broadcast %cst_8 : f32 to vector<2x32xf32>
    %cst_9 = arith.constant 0.000000e+00 : f32
    %10 = vector.broadcast %cst_9 : f32 to vector<2x32xf32>
    %11 = vector.extract_strided_slice %7 {offsets = [0, 0, 0], sizes = [2, 1, 128], strides = [1, 1, 1]} : vector<2x8x128xf32> to vector<2x1x128xf32>
    %12 = vector.shape_cast %11 : vector<2x1x128xf32> to vector<2x128xf32>
    %cst_10 = arith.constant dense<0.000000e+00> : vector<2x128xf32>
    %13 = tpu.matmul %9, %8, %cst_10 {dimension_numbers = #tpu.dot_dimension_numbers<[1], [0], [0], [1], [0, 0, 1, 1], [], []>} : vector<2x32xf32>, vector<32x128xf32>, vector<2x128xf32> -> vector<2x128xf32>
    %14 = arith.addf %12, %13 : vector<2x128xf32>
    %15 = vector.extract_strided_slice %14 {offsets = [0, 0], sizes = [2, 32], strides = [1, 1]} : vector<2x128xf32> to vector<2x32xf32>
    %16 = arith.negf %15 : vector<2x32xf32>
    %17 = math.exp %16 : vector<2x32xf32>
    %cst_11 = arith.constant 1.000000e+00 : f32
    %18 = vector.broadcast %cst_11 : f32 to vector<2x32xf32>
    %19 = arith.addf %18, %17 : vector<2x32xf32>
    %20 = arith.divf %18, %19 : vector<2x32xf32>
    %21 = vector.extract_strided_slice %14 {offsets = [0, 32], sizes = [2, 32], strides = [1, 1]} : vector<2x128xf32> to vector<2x32xf32>
    %22 = arith.negf %21 : vector<2x32xf32>
    %23 = math.exp %22 : vector<2x32xf32>
    %cst_12 = arith.constant 1.000000e+00 : f32
    %24 = vector.broadcast %cst_12 : f32 to vector<2x32xf32>
    %25 = arith.addf %24, %23 : vector<2x32xf32>
    %26 = arith.divf %24, %25 : vector<2x32xf32>
    %27 = vector.extract_strided_slice %14 {offsets = [0, 64], sizes = [2, 32], strides = [1, 1]} : vector<2x128xf32> to vector<2x32xf32>
    %28 = math.tanh %27 : vector<2x32xf32>
    %29 = vector.extract_strided_slice %14 {offsets = [0, 96], sizes = [2, 32], strides = [1, 1]} : vector<2x128xf32> to vector<2x32xf32>
    %30 = arith.negf %29 : vector<2x32xf32>
    %31 = math.exp %30 : vector<2x32xf32>
    %cst_13 = arith.constant 1.000000e+00 : f32
    %32 = vector.broadcast %cst_13 : f32 to vector<2x32xf32>
    %33 = arith.addf %32, %31 : vector<2x32xf32>
    %34 = arith.divf %32, %33 : vector<2x32xf32>
    %35 = arith.mulf %26, %10 : vector<2x32xf32>
    %36 = arith.mulf %20, %28 : vector<2x32xf32>
    %37 = arith.addf %35, %36 : vector<2x32xf32>
    %38 = math.tanh %37 : vector<2x32xf32>
    %39 = arith.mulf %34, %38 : vector<2x32xf32>
    %c0_14 = arith.constant 0 : index
    %c0_15 = arith.constant 0 : index
    %c0_16 = arith.constant 0 : index
    %40 = vector.load %arg19[%c0_14, %c0_15, %c0_16] : memref<2x8x32xf32, #tpu.memory_space<vmem>>, vector<2x1x32xf32>
    %41 = vector.shape_cast %40 : vector<2x1x32xf32> to vector<2x32xf32>
    %42 = vector.shape_cast %39 : vector<2x32xf32> to vector<2x1x32xf32>
    tpu.vector_store %arg19[%c0_14, %c0_15, %c0_16], %42 {strides = array<i32>} : memref<2x8x32xf32, #tpu.memory_space<vmem>>, vector<2x1x32xf32>,
    %43 = vector.extract_strided_slice %7 {offsets = [0, 1, 0], sizes = [2, 1, 128], strides = [1, 1, 1]} : vector<2x8x128xf32> to vector<2x1x128xf32>
    %44 = vector.shape_cast %43 : vector<2x1x128xf32> to vector<2x128xf32>
    %cst_17 = arith.constant dense<0.000000e+00> : vector<2x128xf32>
    %45 = tpu.matmul %39, %8, %cst_17 {dimension_numbers = #tpu.dot_dimension_numbers<[1], [0], [0], [1], [0, 0, 1, 1], [], []>} : vector<2x32xf32>, vector<32x128xf32>, vector<2x128xf32> -> vector<2x128xf32>
    %46 = arith.addf %44, %45 : vector<2x128xf32>
    %47 = vector.extract_strided_slice %46 {offsets = [0, 0], sizes = [2, 32], strides = [1, 1]} : vector<2x128xf32> to vector<2x32xf32>
    %48 = arith.negf %47 : vector<2x32xf32>
    %49 = math.exp %48 : vector<2x32xf32>
    %cst_18 = arith.constant 1.000000e+00 : f32
    %50 = vector.broadcast %cst_18 : f32 to vector<2x32xf32>
    %51 = arith.addf %50, %49 : vector<2x32xf32>
    %52 = arith.divf %50, %51 : vector<2x32xf32>
    %53 = vector.extract_strided_slice %46 {offsets = [0, 32], sizes = [2, 32], strides = [1, 1]} : vector<2x128xf32> to vector<2x32xf32>
    %54 = arith.negf %53 : vector<2x32xf32>
    %55 = math.exp %54 : vector<2x32xf32>
    %cst_19 = arith.constant 1.000000e+00 : f32
    %56 = vector.broadcast %cst_19 : f32 to vector<2x32xf32>
    %57 = arith.addf %56, %55 : vector<2x32xf32>
    %58 = arith.divf %56, %57 : vector<2x32xf32>
    %59 = vector.extract_strided_slice %46 {offsets = [0, 64], sizes = [2, 32], strides = [1, 1]} : vector<2x128xf32> to vector<2x32xf32>
    %60 = math.tanh %59 : vector<2x32xf32>
    %61 = vector.extract_strided_slice %46 {offsets = [0, 96], sizes = [2, 32], strides = [1, 1]} : vector<2x128xf32> to vector<2x32xf32>
    %62 = arith.negf %61 : vector<2x32xf32>
    %63 = math.exp %62 : vector<2x32xf32>
    %cst_20 = arith.constant 1.000000e+00 : f32
    %64 = vector.broadcast %cst_20 : f32 to vector<2x32xf32>
    %65 = arith.addf %64, %63 : vector<2x32xf32>
    %66 = arith.divf %64, %65 : vector<2x32xf32>
    %67 = arith.mulf %58, %37 : vector<2x32xf32>
    %68 = arith.mulf %52, %60 : vector<2x32xf32>
    %69 = arith.addf %67, %68 : vector<2x32xf32>
    %70 = math.tanh %69 : vector<2x32xf32>
    %71 = arith.mulf %66, %70 : vector<2x32xf32>
    %c0_21 = arith.constant 0 : index
    %c1 = arith.constant 1 : index
    %c0_22 = arith.constant 0 : index
    %72 = vector.load %arg19[%c0_21, %c1, %c0_22] : memref<2x8x32xf32, #tpu.memory_space<vmem>>, vector<2x1x32xf32>
    %73 = vector.shape_cast %72 : vector<2x1x32xf32> to vector<2x32xf32>
    %74 = vector.shape_cast %71 : vector<2x32xf32> to vector<2x1x32xf32>
    tpu.vector_store %arg19[%c0_21, %c1, %c0_22], %74 {strides = array<i32>} : memref<2x8x32xf32, #tpu.memory_space<vmem>>, vector<2x1x32xf32>,
    %75 = vector.extract_strided_slice %7 {offsets = [0, 2, 0], sizes = [2, 1, 128], strides = [1, 1, 1]} : vector<2x8x128xf32> to vector<2x1x128xf32>
    %76 = vector.shape_cast %75 : vector<2x1x128xf32> to vector<2x128xf32>
    %cst_23 = arith.constant dense<0.000000e+00> : vector<2x128xf32>
    %77 = tpu.matmul %71, %8, %cst_23 {dimension_numbers = #tpu.dot_dimension_numbers<[1], [0], [0], [1], [0, 0, 1, 1], [], []>} : vector<2x32xf32>, vector<32x128xf32>, vector<2x128xf32> -> vector<2x128xf32>
    %78 = arith.addf %76, %77 : vector<2x128xf32>
    %79 = vector.extract_strided_slice %78 {offsets = [0, 0], sizes = [2, 32], strides = [1, 1]} : vector<2x128xf32> to vector<2x32xf32>
    %80 = arith.negf %79 : vector<2x32xf32>
    %81 = math.exp %80 : vector<2x32xf32>
    %cst_24 = arith.constant 1.000000e+00 : f32
    %82 = vector.broadcast %cst_24 : f32 to vector<2x32xf32>
    %83 = arith.addf %82, %81 : vector<2x32xf32>
    %84 = arith.divf %82, %83 : vector<2x32xf32>
    %85 = vector.extract_strided_slice %78 {offsets = [0, 32], sizes = [2, 32], strides = [1, 1]} : vector<2x128xf32> to vector<2x32xf32>
    %86 = arith.negf %85 : vector<2x32xf32>
    %87 = math.exp %86 : vector<2x32xf32>
    %cst_25 = arith.constant 1.000000e+00 : f32
    %88 = vector.broadcast %cst_25 : f32 to vector<2x32xf32>
    %89 = arith.addf %88, %87 : vector<2x32xf32>
    %90 = arith.divf %88, %89 : vector<2x32xf32>
    %91 = vector.extract_strided_slice %78 {offsets = [0, 64], sizes = [2, 32], strides = [1, 1]} : vector<2x128xf32> to vector<2x32xf32>
    %92 = math.tanh %91 : vector<2x32xf32>
    %93 = vector.extract_strided_slice %78 {offsets = [0, 96], sizes = [2, 32], strides = [1, 1]} : vector<2x128xf32> to vector<2x32xf32>
    %94 = arith.negf %93 : vector<2x32xf32>
    %95 = math.exp %94 : vector<2x32xf32>
    %cst_26 = arith.constant 1.000000e+00 : f32
    %96 = vector.broadcast %cst_26 : f32 to vector<2x32xf32>
    %97 = arith.addf %96, %95 : vector<2x32xf32>
    %98 = arith.divf %96, %97 : vector<2x32xf32>
    %99 = arith.mulf %90, %69 : vector<2x32xf32>
    %100 = arith.mulf %84, %92 : vector<2x32xf32>
    %101 = arith.addf %99, %100 : vector<2x32xf32>
    %102 = math.tanh %101 : vector<2x32xf32>
    %103 = arith.mulf %98, %102 : vector<2x32xf32>
    %c0_27 = arith.constant 0 : index
    %c2 = arith.constant 2 : index
    %c0_28 = arith.constant 0 : index
    %104 = vector.load %arg19[%c0_27, %c2, %c0_28] : memref<2x8x32xf32, #tpu.memory_space<vmem>>, vector<2x1x32xf32>
    %105 = vector.shape_cast %104 : vector<2x1x32xf32> to vector<2x32xf32>
    %106 = vector.shape_cast %103 : vector<2x32xf32> to vector<2x1x32xf32>
    tpu.vector_store %arg19[%c0_27, %c2, %c0_28], %106 {strides = array<i32>} : memref<2x8x32xf32, #tpu.memory_space<vmem>>, vector<2x1x32xf32>,
    %107 = vector.extract_strided_slice %7 {offsets = [0, 3, 0], sizes = [2, 1, 128], strides = [1, 1, 1]} : vector<2x8x128xf32> to vector<2x1x128xf32>
    %108 = vector.shape_cast %107 : vector<2x1x128xf32> to vector<2x128xf32>
    %cst_29 = arith.constant dense<0.000000e+00> : vector<2x128xf32>
    %109 = tpu.matmul %103, %8, %cst_29 {dimension_numbers = #tpu.dot_dimension_numbers<[1], [0], [0], [1], [0, 0, 1, 1], [], []>} : vector<2x32xf32>, vector<32x128xf32>, vector<2x128xf32> -> vector<2x128xf32>
    %110 = arith.addf %108, %109 : vector<2x128xf32>
    %111 = vector.extract_strided_slice %110 {offsets = [0, 0], sizes = [2, 32], strides = [1, 1]} : vector<2x128xf32> to vector<2x32xf32>
    %112 = arith.negf %111 : vector<2x32xf32>
    %113 = math.exp %112 : vector<2x32xf32>
    %cst_30 = arith.constant 1.000000e+00 : f32
    %114 = vector.broadcast %cst_30 : f32 to vector<2x32xf32>
    %115 = arith.addf %114, %113 : vector<2x32xf32>
    %116 = arith.divf %114, %115 : vector<2x32xf32>
    %117 = vector.extract_strided_slice %110 {offsets = [0, 32], sizes = [2, 32], strides = [1, 1]} : vector<2x128xf32> to vector<2x32xf32>
    %118 = arith.negf %117 : vector<2x32xf32>
    %119 = math.exp %118 : vector<2x32xf32>
    %cst_31 = arith.constant 1.000000e+00 : f32
    %120 = vector.broadcast %cst_31 : f32 to vector<2x32xf32>
    %121 = arith.addf %120, %119 : vector<2x32xf32>
    %122 = arith.divf %120, %121 : vector<2x32xf32>
    %123 = vector.extract_strided_slice %110 {offsets = [0, 64], sizes = [2, 32], strides = [1, 1]} : vector<2x128xf32> to vector<2x32xf32>
    %124 = math.tanh %123 : vector<2x32xf32>
    %125 = vector.extract_strided_slice %110 {offsets = [0, 96], sizes = [2, 32], strides = [1, 1]} : vector<2x128xf32> to vector<2x32xf32>
    %126 = arith.negf %125 : vector<2x32xf32>
    %127 = math.exp %126 : vector<2x32xf32>
    %cst_32 = arith.constant 1.000000e+00 : f32
    %128 = vector.broadcast %cst_32 : f32 to vector<2x32xf32>
    %129 = arith.addf %128, %127 : vector<2x32xf32>
    %130 = arith.divf %128, %129 : vector<2x32xf32>
    %131 = arith.mulf %122, %101 : vector<2x32xf32>
    %132 = arith.mulf %116, %124 : vector<2x32xf32>
    %133 = arith.addf %131, %132 : vector<2x32xf32>
    %134 = math.tanh %133 : vector<2x32xf32>
    %135 = arith.mulf %130, %134 : vector<2x32xf32>
    %c0_33 = arith.constant 0 : index
    %c3 = arith.constant 3 : index
    %c0_34 = arith.constant 0 : index
    %136 = vector.load %arg19[%c0_33, %c3, %c0_34] : memref<2x8x32xf32, #tpu.memory_space<vmem>>, vector<2x1x32xf32>
    %137 = vector.shape_cast %136 : vector<2x1x32xf32> to vector<2x32xf32>
    %138 = vector.shape_cast %135 : vector<2x32xf32> to vector<2x1x32xf32>
    tpu.vector_store %arg19[%c0_33, %c3, %c0_34], %138 {strides = array<i32>} : memref<2x8x32xf32, #tpu.memory_space<vmem>>, vector<2x1x32xf32>,
    %139 = vector.extract_strided_slice %7 {offsets = [0, 4, 0], sizes = [2, 1, 128], strides = [1, 1, 1]} : vector<2x8x128xf32> to vector<2x1x128xf32>
    %140 = vector.shape_cast %139 : vector<2x1x128xf32> to vector<2x128xf32>
    %cst_35 = arith.constant dense<0.000000e+00> : vector<2x128xf32>
    %141 = tpu.matmul %135, %8, %cst_35 {dimension_numbers = #tpu.dot_dimension_numbers<[1], [0], [0], [1], [0, 0, 1, 1], [], []>} : vector<2x32xf32>, vector<32x128xf32>, vector<2x128xf32> -> vector<2x128xf32>
    %142 = arith.addf %140, %141 : vector<2x128xf32>
    %143 = vector.extract_strided_slice %142 {offsets = [0, 0], sizes = [2, 32], strides = [1, 1]} : vector<2x128xf32> to vector<2x32xf32>
    %144 = arith.negf %143 : vector<2x32xf32>
    %145 = math.exp %144 : vector<2x32xf32>
    %cst_36 = arith.constant 1.000000e+00 : f32
    %146 = vector.broadcast %cst_36 : f32 to vector<2x32xf32>
    %147 = arith.addf %146, %145 : vector<2x32xf32>
    %148 = arith.divf %146, %147 : vector<2x32xf32>
    %149 = vector.extract_strided_slice %142 {offsets = [0, 32], sizes = [2, 32], strides = [1, 1]} : vector<2x128xf32> to vector<2x32xf32>
    %150 = arith.negf %149 : vector<2x32xf32>
    %151 = math.exp %150 : vector<2x32xf32>
    %cst_37 = arith.constant 1.000000e+00 : f32
    %152 = vector.broadcast %cst_37 : f32 to vector<2x32xf32>
    %153 = arith.addf %152, %151 : vector<2x32xf32>
    %154 = arith.divf %152, %153 : vector<2x32xf32>
    %155 = vector.extract_strided_slice %142 {offsets = [0, 64], sizes = [2, 32], strides = [1, 1]} : vector<2x128xf32> to vector<2x32xf32>
    %156 = math.tanh %155 : vector<2x32xf32>
    %157 = vector.extract_strided_slice %142 {offsets = [0, 96], sizes = [2, 32], strides = [1, 1]} : vector<2x128xf32> to vector<2x32xf32>
    %158 = arith.negf %157 : vector<2x32xf32>
    %159 = math.exp %158 : vector<2x32xf32>
    %cst_38 = arith.constant 1.000000e+00 : f32
    %160 = vector.broadcast %cst_38 : f32 to vector<2x32xf32>
    %161 = arith.addf %160, %159 : vector<2x32xf32>
    %162 = arith.divf %160, %161 : vector<2x32xf32>
    %163 = arith.mulf %154, %133 : vector<2x32xf32>
    %164 = arith.mulf %148, %156 : vector<2x32xf32>
    %165 = arith.addf %163, %164 : vector<2x32xf32>
    %166 = math.tanh %165 : vector<2x32xf32>
    %167 = arith.mulf %162, %166 : vector<2x32xf32>
    %c0_39 = arith.constant 0 : index
    %c4 = arith.constant 4 : index
    %c0_40 = arith.constant 0 : index
    %168 = vector.load %arg19[%c0_39, %c4, %c0_40] : memref<2x8x32xf32, #tpu.memory_space<vmem>>, vector<2x1x32xf32>
    %169 = vector.shape_cast %168 : vector<2x1x32xf32> to vector<2x32xf32>
    %170 = vector.shape_cast %167 : vector<2x32xf32> to vector<2x1x32xf32>
    tpu.vector_store %arg19[%c0_39, %c4, %c0_40], %170 {strides = array<i32>} : memref<2x8x32xf32, #tpu.memory_space<vmem>>, vector<2x1x32xf32>,
    %171 = vector.extract_strided_slice %7 {offsets = [0, 5, 0], sizes = [2, 1, 128], strides = [1, 1, 1]} : vector<2x8x128xf32> to vector<2x1x128xf32>
    %172 = vector.shape_cast %171 : vector<2x1x128xf32> to vector<2x128xf32>
    %cst_41 = arith.constant dense<0.000000e+00> : vector<2x128xf32>
    %173 = tpu.matmul %167, %8, %cst_41 {dimension_numbers = #tpu.dot_dimension_numbers<[1], [0], [0], [1], [0, 0, 1, 1], [], []>} : vector<2x32xf32>, vector<32x128xf32>, vector<2x128xf32> -> vector<2x128xf32>
    %174 = arith.addf %172, %173 : vector<2x128xf32>
    %175 = vector.extract_strided_slice %174 {offsets = [0, 0], sizes = [2, 32], strides = [1, 1]} : vector<2x128xf32> to vector<2x32xf32>
    %176 = arith.negf %175 : vector<2x32xf32>
    %177 = math.exp %176 : vector<2x32xf32>
    %cst_42 = arith.constant 1.000000e+00 : f32
    %178 = vector.broadcast %cst_42 : f32 to vector<2x32xf32>
    %179 = arith.addf %178, %177 : vector<2x32xf32>
    %180 = arith.divf %178, %179 : vector<2x32xf32>
    %181 = vector.extract_strided_slice %174 {offsets = [0, 32], sizes = [2, 32], strides = [1, 1]} : vector<2x128xf32> to vector<2x32xf32>
    %182 = arith.negf %181 : vector<2x32xf32>
    %183 = math.exp %182 : vector<2x32xf32>
    %cst_43 = arith.constant 1.000000e+00 : f32
    %184 = vector.broadcast %cst_43 : f32 to vector<2x32xf32>
    %185 = arith.addf %184, %183 : vector<2x32xf32>
    %186 = arith.divf %184, %185 : vector<2x32xf32>
    %187 = vector.extract_strided_slice %174 {offsets = [0, 64], sizes = [2, 32], strides = [1, 1]} : vector<2x128xf32> to vector<2x32xf32>
    %188 = math.tanh %187 : vector<2x32xf32>
    %189 = vector.extract_strided_slice %174 {offsets = [0, 96], sizes = [2, 32], strides = [1, 1]} : vector<2x128xf32> to vector<2x32xf32>
    %190 = arith.negf %189 : vector<2x32xf32>
    %191 = math.exp %190 : vector<2x32xf32>
    %cst_44 = arith.constant 1.000000e+00 : f32
    %192 = vector.broadcast %cst_44 : f32 to vector<2x32xf32>
    %193 = arith.addf %192, %191 : vector<2x32xf32>
    %194 = arith.divf %192, %193 : vector<2x32xf32>
    %195 = arith.mulf %186, %165 : vector<2x32xf32>
    %196 = arith.mulf %180, %188 : vector<2x32xf32>
    %197 = arith.addf %195, %196 : vector<2x32xf32>
    %198 = math.tanh %197 : vector<2x32xf32>
    %199 = arith.mulf %194, %198 : vector<2x32xf32>
    %c0_45 = arith.constant 0 : index
    %c5 = arith.constant 5 : index
    %c0_46 = arith.constant 0 : index
    %200 = vector.load %arg19[%c0_45, %c5, %c0_46] : memref<2x8x32xf32, #tpu.memory_space<vmem>>, vector<2x1x32xf32>
    %201 = vector.shape_cast %200 : vector<2x1x32xf32> to vector<2x32xf32>
    %202 = vector.shape_cast %199 : vector<2x32xf32> to vector<2x1x32xf32>
    tpu.vector_store %arg19[%c0_45, %c5, %c0_46], %202 {strides = array<i32>} : memref<2x8x32xf32, #tpu.memory_space<vmem>>, vector<2x1x32xf32>,
    %203 = vector.extract_strided_slice %7 {offsets = [0, 6, 0], sizes = [2, 1, 128], strides = [1, 1, 1]} : vector<2x8x128xf32> to vector<2x1x128xf32>
    %204 = vector.shape_cast %203 : vector<2x1x128xf32> to vector<2x128xf32>
    %cst_47 = arith.constant dense<0.000000e+00> : vector<2x128xf32>
    %205 = tpu.matmul %199, %8, %cst_47 {dimension_numbers = #tpu.dot_dimension_numbers<[1], [0], [0], [1], [0, 0, 1, 1], [], []>} : vector<2x32xf32>, vector<32x128xf32>, vector<2x128xf32> -> vector<2x128xf32>
    %206 = arith.addf %204, %205 : vector<2x128xf32>
    %207 = vector.extract_strided_slice %206 {offsets = [0, 0], sizes = [2, 32], strides = [1, 1]} : vector<2x128xf32> to vector<2x32xf32>
    %208 = arith.negf %207 : vector<2x32xf32>
    %209 = math.exp %208 : vector<2x32xf32>
    %cst_48 = arith.constant 1.000000e+00 : f32
    %210 = vector.broadcast %cst_48 : f32 to vector<2x32xf32>
    %211 = arith.addf %210, %209 : vector<2x32xf32>
    %212 = arith.divf %210, %211 : vector<2x32xf32>
    %213 = vector.extract_strided_slice %206 {offsets = [0, 32], sizes = [2, 32], strides = [1, 1]} : vector<2x128xf32> to vector<2x32xf32>
    %214 = arith.negf %213 : vector<2x32xf32>
    %215 = math.exp %214 : vector<2x32xf32>
    %cst_49 = arith.constant 1.000000e+00 : f32
    %216 = vector.broadcast %cst_49 : f32 to vector<2x32xf32>
    %217 = arith.addf %216, %215 : vector<2x32xf32>
    %218 = arith.divf %216, %217 : vector<2x32xf32>
    %219 = vector.extract_strided_slice %206 {offsets = [0, 64], sizes = [2, 32], strides = [1, 1]} : vector<2x128xf32> to vector<2x32xf32>
    %220 = math.tanh %219 : vector<2x32xf32>
    %221 = vector.extract_strided_slice %206 {offsets = [0, 96], sizes = [2, 32], strides = [1, 1]} : vector<2x128xf32> to vector<2x32xf32>
    %222 = arith.negf %221 : vector<2x32xf32>
    %223 = math.exp %222 : vector<2x32xf32>
    %cst_50 = arith.constant 1.000000e+00 : f32
    %224 = vector.broadcast %cst_50 : f32 to vector<2x32xf32>
    %225 = arith.addf %224, %223 : vector<2x32xf32>
    %226 = arith.divf %224, %225 : vector<2x32xf32>
    %227 = arith.mulf %218, %197 : vector<2x32xf32>
    %228 = arith.mulf %212, %220 : vector<2x32xf32>
    %229 = arith.addf %227, %228 : vector<2x32xf32>
    %230 = math.tanh %229 : vector<2x32xf32>
    %231 = arith.mulf %226, %230 : vector<2x32xf32>
    %c0_51 = arith.constant 0 : index
    %c6 = arith.constant 6 : index
    %c0_52 = arith.constant 0 : index
    %232 = vector.load %arg19[%c0_51, %c6, %c0_52] : memref<2x8x32xf32, #tpu.memory_space<vmem>>, vector<2x1x32xf32>
    %233 = vector.shape_cast %232 : vector<2x1x32xf32> to vector<2x32xf32>
    %234 = vector.shape_cast %231 : vector<2x32xf32> to vector<2x1x32xf32>
    tpu.vector_store %arg19[%c0_51, %c6, %c0_52], %234 {strides = array<i32>} : memref<2x8x32xf32, #tpu.memory_space<vmem>>, vector<2x1x32xf32>,
    %235 = vector.extract_strided_slice %7 {offsets = [0, 7, 0], sizes = [2, 1, 128], strides = [1, 1, 1]} : vector<2x8x128xf32> to vector<2x1x128xf32>
    %236 = vector.shape_cast %235 : vector<2x1x128xf32> to vector<2x128xf32>
    %cst_53 = arith.constant dense<0.000000e+00> : vector<2x128xf32>
    %237 = tpu.matmul %231, %8, %cst_53 {dimension_numbers = #tpu.dot_dimension_numbers<[1], [0], [0], [1], [0, 0, 1, 1], [], []>} : vector<2x32xf32>, vector<32x128xf32>, vector<2x128xf32> -> vector<2x128xf32>
    %238 = arith.addf %236, %237 : vector<2x128xf32>
    %239 = vector.extract_strided_slice %238 {offsets = [0, 0], sizes = [2, 32], strides = [1, 1]} : vector<2x128xf32> to vector<2x32xf32>
    %240 = arith.negf %239 : vector<2x32xf32>
    %241 = math.exp %240 : vector<2x32xf32>
    %cst_54 = arith.constant 1.000000e+00 : f32
    %242 = vector.broadcast %cst_54 : f32 to vector<2x32xf32>
    %243 = arith.addf %242, %241 : vector<2x32xf32>
    %244 = arith.divf %242, %243 : vector<2x32xf32>
    %245 = vector.extract_strided_slice %238 {offsets = [0, 32], sizes = [2, 32], strides = [1, 1]} : vector<2x128xf32> to vector<2x32xf32>
    %246 = arith.negf %245 : vector<2x32xf32>
    %247 = math.exp %246 : vector<2x32xf32>
    %cst_55 = arith.constant 1.000000e+00 : f32
    %248 = vector.broadcast %cst_55 : f32 to vector<2x32xf32>
    %249 = arith.addf %248, %247 : vector<2x32xf32>
    %250 = arith.divf %248, %249 : vector<2x32xf32>
    %251 = vector.extract_strided_slice %238 {offsets = [0, 64], sizes = [2, 32], strides = [1, 1]} : vector<2x128xf32> to vector<2x32xf32>
    %252 = math.tanh %251 : vector<2x32xf32>
    %253 = vector.extract_strided_slice %238 {offsets = [0, 96], sizes = [2, 32], strides = [1, 1]} : vector<2x128xf32> to vector<2x32xf32>
    %254 = arith.negf %253 : vector<2x32xf32>
    %255 = math.exp %254 : vector<2x32xf32>
    %cst_56 = arith.constant 1.000000e+00 : f32
    %256 = vector.broadcast %cst_56 : f32 to vector<2x32xf32>
    %257 = arith.addf %256, %255 : vector<2x32xf32>
    %258 = arith.divf %256, %257 : vector<2x32xf32>
    %259 = arith.mulf %250, %229 : vector<2x32xf32>
    %260 = arith.mulf %244, %252 : vector<2x32xf32>
    %261 = arith.addf %259, %260 : vector<2x32xf32>
    %262 = math.tanh %261 : vector<2x32xf32>
    %263 = arith.mulf %258, %262 : vector<2x32xf32>
    %c0_57 = arith.constant 0 : index
    %c7 = arith.constant 7 : index
    %c0_58 = arith.constant 0 : index
    %264 = vector.load %arg19[%c0_57, %c7, %c0_58] : memref<2x8x32xf32, #tpu.memory_space<vmem>>, vector<2x1x32xf32>
    %265 = vector.shape_cast %264 : vector<2x1x32xf32> to vector<2x32xf32>
    %266 = vector.shape_cast %263 : vector<2x32xf32> to vector<2x1x32xf32>
    tpu.vector_store %arg19[%c0_57, %c7, %c0_58], %266 {strides = array<i32>} : memref<2x8x32xf32, #tpu.memory_space<vmem>>, vector<2x1x32xf32>,
    %c0_59 = arith.constant 0 : index
    %c0_60 = arith.constant 0 : index
    %c0_61 = arith.constant 0 : index
    %267 = vector.load %arg19[%c0_59, %c0_60, %c0_61] : memref<2x8x32xf32, #tpu.memory_space<vmem>>, vector<2x8x32xf32>
    %268 = vector.shape_cast %267 : vector<2x8x32xf32> to vector<16x32xf32>
    %c0_62 = arith.constant 0 : index
    %c0_63 = arith.constant 0 : index
    %269 = vector.load %arg5[%c0_62, %c0_63] : memref<32x128xf32, #tpu.memory_space<vmem>>, vector<32x128xf32>
    %cst_64 = arith.constant dense<0.000000e+00> : vector<16x128xf32>
    %270 = tpu.matmul %268, %269, %cst_64 {dimension_numbers = #tpu.dot_dimension_numbers<[1], [0], [0], [1], [0, 0, 1, 1], [], []>} : vector<16x32xf32>, vector<32x128xf32>, vector<16x128xf32> -> vector<16x128xf32>
    %c0_65 = arith.constant 0 : index
    %c0_66 = arith.constant 0 : index
    %271 = vector.load %arg7[%c0_65, %c0_66] : memref<1x128xf32, #tpu.memory_space<vmem>>, vector<1x128xf32>
    %272 = vector.broadcast %271 : vector<1x128xf32> to vector<16x128xf32>
    %273 = arith.addf %270, %272 : vector<16x128xf32>
    %274 = vector.shape_cast %273 : vector<16x128xf32> to vector<2x8x128xf32>
    %c0_67 = arith.constant 0 : index
    %c0_68 = arith.constant 0 : index
    %275 = vector.load %arg6[%c0_67, %c0_68] : memref<32x128xf32, #tpu.memory_space<vmem>>, vector<32x128xf32>
    %cst_69 = arith.constant 0.000000e+00 : f32
    %276 = vector.broadcast %cst_69 : f32 to vector<2x32xf32>
    %cst_70 = arith.constant 0.000000e+00 : f32
    %277 = vector.broadcast %cst_70 : f32 to vector<2x32xf32>
    %278 = vector.extract_strided_slice %274 {offsets = [0, 0, 0], sizes = [2, 1, 128], strides = [1, 1, 1]} : vector<2x8x128xf32> to vector<2x1x128xf32>
    %279 = vector.shape_cast %278 : vector<2x1x128xf32> to vector<2x128xf32>
    %cst_71 = arith.constant dense<0.000000e+00> : vector<2x128xf32>
    %280 = tpu.matmul %276, %275, %cst_71 {dimension_numbers = #tpu.dot_dimension_numbers<[1], [0], [0], [1], [0, 0, 1, 1], [], []>} : vector<2x32xf32>, vector<32x128xf32>, vector<2x128xf32> -> vector<2x128xf32>
    %281 = arith.addf %279, %280 : vector<2x128xf32>
    %282 = vector.extract_strided_slice %281 {offsets = [0, 0], sizes = [2, 32], strides = [1, 1]} : vector<2x128xf32> to vector<2x32xf32>
    %283 = arith.negf %282 : vector<2x32xf32>
    %284 = math.exp %283 : vector<2x32xf32>
    %cst_72 = arith.constant 1.000000e+00 : f32
    %285 = vector.broadcast %cst_72 : f32 to vector<2x32xf32>
    %286 = arith.addf %285, %284 : vector<2x32xf32>
    %287 = arith.divf %285, %286 : vector<2x32xf32>
    %288 = vector.extract_strided_slice %281 {offsets = [0, 32], sizes = [2, 32], strides = [1, 1]} : vector<2x128xf32> to vector<2x32xf32>
    %289 = arith.negf %288 : vector<2x32xf32>
    %290 = math.exp %289 : vector<2x32xf32>
    %cst_73 = arith.constant 1.000000e+00 : f32
    %291 = vector.broadcast %cst_73 : f32 to vector<2x32xf32>
    %292 = arith.addf %291, %290 : vector<2x32xf32>
    %293 = arith.divf %291, %292 : vector<2x32xf32>
    %294 = vector.extract_strided_slice %281 {offsets = [0, 64], sizes = [2, 32], strides = [1, 1]} : vector<2x128xf32> to vector<2x32xf32>
    %295 = math.tanh %294 : vector<2x32xf32>
    %296 = vector.extract_strided_slice %281 {offsets = [0, 96], sizes = [2, 32], strides = [1, 1]} : vector<2x128xf32> to vector<2x32xf32>
    %297 = arith.negf %296 : vector<2x32xf32>
    %298 = math.exp %297 : vector<2x32xf32>
    %cst_74 = arith.constant 1.000000e+00 : f32
    %299 = vector.broadcast %cst_74 : f32 to vector<2x32xf32>
    %300 = arith.addf %299, %298 : vector<2x32xf32>
    %301 = arith.divf %299, %300 : vector<2x32xf32>
    %302 = arith.mulf %293, %277 : vector<2x32xf32>
    %303 = arith.mulf %287, %295 : vector<2x32xf32>
    %304 = arith.addf %302, %303 : vector<2x32xf32>
    %305 = math.tanh %304 : vector<2x32xf32>
    %306 = arith.mulf %301, %305 : vector<2x32xf32>
    %c0_75 = arith.constant 0 : index
    %c0_76 = arith.constant 0 : index
    %c0_77 = arith.constant 0 : index
    %307 = vector.load %arg20[%c0_75, %c0_76, %c0_77] : memref<2x8x32xf32, #tpu.memory_space<vmem>>, vector<2x1x32xf32>
    %308 = vector.shape_cast %307 : vector<2x1x32xf32> to vector<2x32xf32>
    %309 = vector.shape_cast %306 : vector<2x32xf32> to vector<2x1x32xf32>
    tpu.vector_store %arg20[%c0_75, %c0_76, %c0_77], %309 {strides = array<i32>} : memref<2x8x32xf32, #tpu.memory_space<vmem>>, vector<2x1x32xf32>,
    %310 = vector.extract_strided_slice %274 {offsets = [0, 1, 0], sizes = [2, 1, 128], strides = [1, 1, 1]} : vector<2x8x128xf32> to vector<2x1x128xf32>
    %311 = vector.shape_cast %310 : vector<2x1x128xf32> to vector<2x128xf32>
    %cst_78 = arith.constant dense<0.000000e+00> : vector<2x128xf32>
    %312 = tpu.matmul %306, %275, %cst_78 {dimension_numbers = #tpu.dot_dimension_numbers<[1], [0], [0], [1], [0, 0, 1, 1], [], []>} : vector<2x32xf32>, vector<32x128xf32>, vector<2x128xf32> -> vector<2x128xf32>
    %313 = arith.addf %311, %312 : vector<2x128xf32>
    %314 = vector.extract_strided_slice %313 {offsets = [0, 0], sizes = [2, 32], strides = [1, 1]} : vector<2x128xf32> to vector<2x32xf32>
    %315 = arith.negf %314 : vector<2x32xf32>
    %316 = math.exp %315 : vector<2x32xf32>
    %cst_79 = arith.constant 1.000000e+00 : f32
    %317 = vector.broadcast %cst_79 : f32 to vector<2x32xf32>
    %318 = arith.addf %317, %316 : vector<2x32xf32>
    %319 = arith.divf %317, %318 : vector<2x32xf32>
    %320 = vector.extract_strided_slice %313 {offsets = [0, 32], sizes = [2, 32], strides = [1, 1]} : vector<2x128xf32> to vector<2x32xf32>
    %321 = arith.negf %320 : vector<2x32xf32>
    %322 = math.exp %321 : vector<2x32xf32>
    %cst_80 = arith.constant 1.000000e+00 : f32
    %323 = vector.broadcast %cst_80 : f32 to vector<2x32xf32>
    %324 = arith.addf %323, %322 : vector<2x32xf32>
    %325 = arith.divf %323, %324 : vector<2x32xf32>
    %326 = vector.extract_strided_slice %313 {offsets = [0, 64], sizes = [2, 32], strides = [1, 1]} : vector<2x128xf32> to vector<2x32xf32>
    %327 = math.tanh %326 : vector<2x32xf32>
    %328 = vector.extract_strided_slice %313 {offsets = [0, 96], sizes = [2, 32], strides = [1, 1]} : vector<2x128xf32> to vector<2x32xf32>
    %329 = arith.negf %328 : vector<2x32xf32>
    %330 = math.exp %329 : vector<2x32xf32>
    %cst_81 = arith.constant 1.000000e+00 : f32
    %331 = vector.broadcast %cst_81 : f32 to vector<2x32xf32>
    %332 = arith.addf %331, %330 : vector<2x32xf32>
    %333 = arith.divf %331, %332 : vector<2x32xf32>
    %334 = arith.mulf %325, %304 : vector<2x32xf32>
    %335 = arith.mulf %319, %327 : vector<2x32xf32>
    %336 = arith.addf %334, %335 : vector<2x32xf32>
    %337 = math.tanh %336 : vector<2x32xf32>
    %338 = arith.mulf %333, %337 : vector<2x32xf32>
    %c0_82 = arith.constant 0 : index
    %c1_83 = arith.constant 1 : index
    %c0_84 = arith.constant 0 : index
    %339 = vector.load %arg20[%c0_82, %c1_83, %c0_84] : memref<2x8x32xf32, #tpu.memory_space<vmem>>, vector<2x1x32xf32>
    %340 = vector.shape_cast %339 : vector<2x1x32xf32> to vector<2x32xf32>
    %341 = vector.shape_cast %338 : vector<2x32xf32> to vector<2x1x32xf32>
    tpu.vector_store %arg20[%c0_82, %c1_83, %c0_84], %341 {strides = array<i32>} : memref<2x8x32xf32, #tpu.memory_space<vmem>>, vector<2x1x32xf32>,
    %342 = vector.extract_strided_slice %274 {offsets = [0, 2, 0], sizes = [2, 1, 128], strides = [1, 1, 1]} : vector<2x8x128xf32> to vector<2x1x128xf32>
    %343 = vector.shape_cast %342 : vector<2x1x128xf32> to vector<2x128xf32>
    %cst_85 = arith.constant dense<0.000000e+00> : vector<2x128xf32>
    %344 = tpu.matmul %338, %275, %cst_85 {dimension_numbers = #tpu.dot_dimension_numbers<[1], [0], [0], [1], [0, 0, 1, 1], [], []>} : vector<2x32xf32>, vector<32x128xf32>, vector<2x128xf32> -> vector<2x128xf32>
    %345 = arith.addf %343, %344 : vector<2x128xf32>
    %346 = vector.extract_strided_slice %345 {offsets = [0, 0], sizes = [2, 32], strides = [1, 1]} : vector<2x128xf32> to vector<2x32xf32>
    %347 = arith.negf %346 : vector<2x32xf32>
    %348 = math.exp %347 : vector<2x32xf32>
    %cst_86 = arith.constant 1.000000e+00 : f32
    %349 = vector.broadcast %cst_86 : f32 to vector<2x32xf32>
    %350 = arith.addf %349, %348 : vector<2x32xf32>
    %351 = arith.divf %349, %350 : vector<2x32xf32>
    %352 = vector.extract_strided_slice %345 {offsets = [0, 32], sizes = [2, 32], strides = [1, 1]} : vector<2x128xf32> to vector<2x32xf32>
    %353 = arith.negf %352 : vector<2x32xf32>
    %354 = math.exp %353 : vector<2x32xf32>
    %cst_87 = arith.constant 1.000000e+00 : f32
    %355 = vector.broadcast %cst_87 : f32 to vector<2x32xf32>
    %356 = arith.addf %355, %354 : vector<2x32xf32>
    %357 = arith.divf %355, %356 : vector<2x32xf32>
    %358 = vector.extract_strided_slice %345 {offsets = [0, 64], sizes = [2, 32], strides = [1, 1]} : vector<2x128xf32> to vector<2x32xf32>
    %359 = math.tanh %358 : vector<2x32xf32>
    %360 = vector.extract_strided_slice %345 {offsets = [0, 96], sizes = [2, 32], strides = [1, 1]} : vector<2x128xf32> to vector<2x32xf32>
    %361 = arith.negf %360 : vector<2x32xf32>
    %362 = math.exp %361 : vector<2x32xf32>
    %cst_88 = arith.constant 1.000000e+00 : f32
    %363 = vector.broadcast %cst_88 : f32 to vector<2x32xf32>
    %364 = arith.addf %363, %362 : vector<2x32xf32>
    %365 = arith.divf %363, %364 : vector<2x32xf32>
    %366 = arith.mulf %357, %336 : vector<2x32xf32>
    %367 = arith.mulf %351, %359 : vector<2x32xf32>
    %368 = arith.addf %366, %367 : vector<2x32xf32>
    %369 = math.tanh %368 : vector<2x32xf32>
    %370 = arith.mulf %365, %369 : vector<2x32xf32>
    %c0_89 = arith.constant 0 : index
    %c2_90 = arith.constant 2 : index
    %c0_91 = arith.constant 0 : index
    %371 = vector.load %arg20[%c0_89, %c2_90, %c0_91] : memref<2x8x32xf32, #tpu.memory_space<vmem>>, vector<2x1x32xf32>
    %372 = vector.shape_cast %371 : vector<2x1x32xf32> to vector<2x32xf32>
    %373 = vector.shape_cast %370 : vector<2x32xf32> to vector<2x1x32xf32>
    tpu.vector_store %arg20[%c0_89, %c2_90, %c0_91], %373 {strides = array<i32>} : memref<2x8x32xf32, #tpu.memory_space<vmem>>, vector<2x1x32xf32>,
    %374 = vector.extract_strided_slice %274 {offsets = [0, 3, 0], sizes = [2, 1, 128], strides = [1, 1, 1]} : vector<2x8x128xf32> to vector<2x1x128xf32>
    %375 = vector.shape_cast %374 : vector<2x1x128xf32> to vector<2x128xf32>
    %cst_92 = arith.constant dense<0.000000e+00> : vector<2x128xf32>
    %376 = tpu.matmul %370, %275, %cst_92 {dimension_numbers = #tpu.dot_dimension_numbers<[1], [0], [0], [1], [0, 0, 1, 1], [], []>} : vector<2x32xf32>, vector<32x128xf32>, vector<2x128xf32> -> vector<2x128xf32>
    %377 = arith.addf %375, %376 : vector<2x128xf32>
    %378 = vector.extract_strided_slice %377 {offsets = [0, 0], sizes = [2, 32], strides = [1, 1]} : vector<2x128xf32> to vector<2x32xf32>
    %379 = arith.negf %378 : vector<2x32xf32>
    %380 = math.exp %379 : vector<2x32xf32>
    %cst_93 = arith.constant 1.000000e+00 : f32
    %381 = vector.broadcast %cst_93 : f32 to vector<2x32xf32>
    %382 = arith.addf %381, %380 : vector<2x32xf32>
    %383 = arith.divf %381, %382 : vector<2x32xf32>
    %384 = vector.extract_strided_slice %377 {offsets = [0, 32], sizes = [2, 32], strides = [1, 1]} : vector<2x128xf32> to vector<2x32xf32>
    %385 = arith.negf %384 : vector<2x32xf32>
    %386 = math.exp %385 : vector<2x32xf32>
    %cst_94 = arith.constant 1.000000e+00 : f32
    %387 = vector.broadcast %cst_94 : f32 to vector<2x32xf32>
    %388 = arith.addf %387, %386 : vector<2x32xf32>
    %389 = arith.divf %387, %388 : vector<2x32xf32>
    %390 = vector.extract_strided_slice %377 {offsets = [0, 64], sizes = [2, 32], strides = [1, 1]} : vector<2x128xf32> to vector<2x32xf32>
    %391 = math.tanh %390 : vector<2x32xf32>
    %392 = vector.extract_strided_slice %377 {offsets = [0, 96], sizes = [2, 32], strides = [1, 1]} : vector<2x128xf32> to vector<2x32xf32>
    %393 = arith.negf %392 : vector<2x32xf32>
    %394 = math.exp %393 : vector<2x32xf32>
    %cst_95 = arith.constant 1.000000e+00 : f32
    %395 = vector.broadcast %cst_95 : f32 to vector<2x32xf32>
    %396 = arith.addf %395, %394 : vector<2x32xf32>
    %397 = arith.divf %395, %396 : vector<2x32xf32>
    %398 = arith.mulf %389, %368 : vector<2x32xf32>
    %399 = arith.mulf %383, %391 : vector<2x32xf32>
    %400 = arith.addf %398, %399 : vector<2x32xf32>
    %401 = math.tanh %400 : vector<2x32xf32>
    %402 = arith.mulf %397, %401 : vector<2x32xf32>
    %c0_96 = arith.constant 0 : index
    %c3_97 = arith.constant 3 : index
    %c0_98 = arith.constant 0 : index
    %403 = vector.load %arg20[%c0_96, %c3_97, %c0_98] : memref<2x8x32xf32, #tpu.memory_space<vmem>>, vector<2x1x32xf32>
    %404 = vector.shape_cast %403 : vector<2x1x32xf32> to vector<2x32xf32>
    %405 = vector.shape_cast %402 : vector<2x32xf32> to vector<2x1x32xf32>
    tpu.vector_store %arg20[%c0_96, %c3_97, %c0_98], %405 {strides = array<i32>} : memref<2x8x32xf32, #tpu.memory_space<vmem>>, vector<2x1x32xf32>,
    %406 = vector.extract_strided_slice %274 {offsets = [0, 4, 0], sizes = [2, 1, 128], strides = [1, 1, 1]} : vector<2x8x128xf32> to vector<2x1x128xf32>
    %407 = vector.shape_cast %406 : vector<2x1x128xf32> to vector<2x128xf32>
    %cst_99 = arith.constant dense<0.000000e+00> : vector<2x128xf32>
    %408 = tpu.matmul %402, %275, %cst_99 {dimension_numbers = #tpu.dot_dimension_numbers<[1], [0], [0], [1], [0, 0, 1, 1], [], []>} : vector<2x32xf32>, vector<32x128xf32>, vector<2x128xf32> -> vector<2x128xf32>
    %409 = arith.addf %407, %408 : vector<2x128xf32>
    %410 = vector.extract_strided_slice %409 {offsets = [0, 0], sizes = [2, 32], strides = [1, 1]} : vector<2x128xf32> to vector<2x32xf32>
    %411 = arith.negf %410 : vector<2x32xf32>
    %412 = math.exp %411 : vector<2x32xf32>
    %cst_100 = arith.constant 1.000000e+00 : f32
    %413 = vector.broadcast %cst_100 : f32 to vector<2x32xf32>
    %414 = arith.addf %413, %412 : vector<2x32xf32>
    %415 = arith.divf %413, %414 : vector<2x32xf32>
    %416 = vector.extract_strided_slice %409 {offsets = [0, 32], sizes = [2, 32], strides = [1, 1]} : vector<2x128xf32> to vector<2x32xf32>
    %417 = arith.negf %416 : vector<2x32xf32>
    %418 = math.exp %417 : vector<2x32xf32>
    %cst_101 = arith.constant 1.000000e+00 : f32
    %419 = vector.broadcast %cst_101 : f32 to vector<2x32xf32>
    %420 = arith.addf %419, %418 : vector<2x32xf32>
    %421 = arith.divf %419, %420 : vector<2x32xf32>
    %422 = vector.extract_strided_slice %409 {offsets = [0, 64], sizes = [2, 32], strides = [1, 1]} : vector<2x128xf32> to vector<2x32xf32>
    %423 = math.tanh %422 : vector<2x32xf32>
    %424 = vector.extract_strided_slice %409 {offsets = [0, 96], sizes = [2, 32], strides = [1, 1]} : vector<2x128xf32> to vector<2x32xf32>
    %425 = arith.negf %424 : vector<2x32xf32>
    %426 = math.exp %425 : vector<2x32xf32>
    %cst_102 = arith.constant 1.000000e+00 : f32
    %427 = vector.broadcast %cst_102 : f32 to vector<2x32xf32>
    %428 = arith.addf %427, %426 : vector<2x32xf32>
    %429 = arith.divf %427, %428 : vector<2x32xf32>
    %430 = arith.mulf %421, %400 : vector<2x32xf32>
    %431 = arith.mulf %415, %423 : vector<2x32xf32>
    %432 = arith.addf %430, %431 : vector<2x32xf32>
    %433 = math.tanh %432 : vector<2x32xf32>
    %434 = arith.mulf %429, %433 : vector<2x32xf32>
    %c0_103 = arith.constant 0 : index
    %c4_104 = arith.constant 4 : index
    %c0_105 = arith.constant 0 : index
    %435 = vector.load %arg20[%c0_103, %c4_104, %c0_105] : memref<2x8x32xf32, #tpu.memory_space<vmem>>, vector<2x1x32xf32>
    %436 = vector.shape_cast %435 : vector<2x1x32xf32> to vector<2x32xf32>
    %437 = vector.shape_cast %434 : vector<2x32xf32> to vector<2x1x32xf32>
    tpu.vector_store %arg20[%c0_103, %c4_104, %c0_105], %437 {strides = array<i32>} : memref<2x8x32xf32, #tpu.memory_space<vmem>>, vector<2x1x32xf32>,
    %438 = vector.extract_strided_slice %274 {offsets = [0, 5, 0], sizes = [2, 1, 128], strides = [1, 1, 1]} : vector<2x8x128xf32> to vector<2x1x128xf32>
    %439 = vector.shape_cast %438 : vector<2x1x128xf32> to vector<2x128xf32>
    %cst_106 = arith.constant dense<0.000000e+00> : vector<2x128xf32>
    %440 = tpu.matmul %434, %275, %cst_106 {dimension_numbers = #tpu.dot_dimension_numbers<[1], [0], [0], [1], [0, 0, 1, 1], [], []>} : vector<2x32xf32>, vector<32x128xf32>, vector<2x128xf32> -> vector<2x128xf32>
    %441 = arith.addf %439, %440 : vector<2x128xf32>
    %442 = vector.extract_strided_slice %441 {offsets = [0, 0], sizes = [2, 32], strides = [1, 1]} : vector<2x128xf32> to vector<2x32xf32>
    %443 = arith.negf %442 : vector<2x32xf32>
    %444 = math.exp %443 : vector<2x32xf32>
    %cst_107 = arith.constant 1.000000e+00 : f32
    %445 = vector.broadcast %cst_107 : f32 to vector<2x32xf32>
    %446 = arith.addf %445, %444 : vector<2x32xf32>
    %447 = arith.divf %445, %446 : vector<2x32xf32>
    %448 = vector.extract_strided_slice %441 {offsets = [0, 32], sizes = [2, 32], strides = [1, 1]} : vector<2x128xf32> to vector<2x32xf32>
    %449 = arith.negf %448 : vector<2x32xf32>
    %450 = math.exp %449 : vector<2x32xf32>
    %cst_108 = arith.constant 1.000000e+00 : f32
    %451 = vector.broadcast %cst_108 : f32 to vector<2x32xf32>
    %452 = arith.addf %451, %450 : vector<2x32xf32>
    %453 = arith.divf %451, %452 : vector<2x32xf32>
    %454 = vector.extract_strided_slice %441 {offsets = [0, 64], sizes = [2, 32], strides = [1, 1]} : vector<2x128xf32> to vector<2x32xf32>
    %455 = math.tanh %454 : vector<2x32xf32>
    %456 = vector.extract_strided_slice %441 {offsets = [0, 96], sizes = [2, 32], strides = [1, 1]} : vector<2x128xf32> to vector<2x32xf32>
    %457 = arith.negf %456 : vector<2x32xf32>
    %458 = math.exp %457 : vector<2x32xf32>
    %cst_109 = arith.constant 1.000000e+00 : f32
    %459 = vector.broadcast %cst_109 : f32 to vector<2x32xf32>
    %460 = arith.addf %459, %458 : vector<2x32xf32>
    %461 = arith.divf %459, %460 : vector<2x32xf32>
    %462 = arith.mulf %453, %432 : vector<2x32xf32>
    %463 = arith.mulf %447, %455 : vector<2x32xf32>
    %464 = arith.addf %462, %463 : vector<2x32xf32>
    %465 = math.tanh %464 : vector<2x32xf32>
    %466 = arith.mulf %461, %465 : vector<2x32xf32>
    %c0_110 = arith.constant 0 : index
    %c5_111 = arith.constant 5 : index
    %c0_112 = arith.constant 0 : index
    %467 = vector.load %arg20[%c0_110, %c5_111, %c0_112] : memref<2x8x32xf32, #tpu.memory_space<vmem>>, vector<2x1x32xf32>
    %468 = vector.shape_cast %467 : vector<2x1x32xf32> to vector<2x32xf32>
    %469 = vector.shape_cast %466 : vector<2x32xf32> to vector<2x1x32xf32>
    tpu.vector_store %arg20[%c0_110, %c5_111, %c0_112], %469 {strides = array<i32>} : memref<2x8x32xf32, #tpu.memory_space<vmem>>, vector<2x1x32xf32>,
    %470 = vector.extract_strided_slice %274 {offsets = [0, 6, 0], sizes = [2, 1, 128], strides = [1, 1, 1]} : vector<2x8x128xf32> to vector<2x1x128xf32>
    %471 = vector.shape_cast %470 : vector<2x1x128xf32> to vector<2x128xf32>
    %cst_113 = arith.constant dense<0.000000e+00> : vector<2x128xf32>
    %472 = tpu.matmul %466, %275, %cst_113 {dimension_numbers = #tpu.dot_dimension_numbers<[1], [0], [0], [1], [0, 0, 1, 1], [], []>} : vector<2x32xf32>, vector<32x128xf32>, vector<2x128xf32> -> vector<2x128xf32>
    %473 = arith.addf %471, %472 : vector<2x128xf32>
    %474 = vector.extract_strided_slice %473 {offsets = [0, 0], sizes = [2, 32], strides = [1, 1]} : vector<2x128xf32> to vector<2x32xf32>
    %475 = arith.negf %474 : vector<2x32xf32>
    %476 = math.exp %475 : vector<2x32xf32>
    %cst_114 = arith.constant 1.000000e+00 : f32
    %477 = vector.broadcast %cst_114 : f32 to vector<2x32xf32>
    %478 = arith.addf %477, %476 : vector<2x32xf32>
    %479 = arith.divf %477, %478 : vector<2x32xf32>
    %480 = vector.extract_strided_slice %473 {offsets = [0, 32], sizes = [2, 32], strides = [1, 1]} : vector<2x128xf32> to vector<2x32xf32>
    %481 = arith.negf %480 : vector<2x32xf32>
    %482 = math.exp %481 : vector<2x32xf32>
    %cst_115 = arith.constant 1.000000e+00 : f32
    %483 = vector.broadcast %cst_115 : f32 to vector<2x32xf32>
    %484 = arith.addf %483, %482 : vector<2x32xf32>
    %485 = arith.divf %483, %484 : vector<2x32xf32>
    %486 = vector.extract_strided_slice %473 {offsets = [0, 64], sizes = [2, 32], strides = [1, 1]} : vector<2x128xf32> to vector<2x32xf32>
    %487 = math.tanh %486 : vector<2x32xf32>
    %488 = vector.extract_strided_slice %473 {offsets = [0, 96], sizes = [2, 32], strides = [1, 1]} : vector<2x128xf32> to vector<2x32xf32>
    %489 = arith.negf %488 : vector<2x32xf32>
    %490 = math.exp %489 : vector<2x32xf32>
    %cst_116 = arith.constant 1.000000e+00 : f32
    %491 = vector.broadcast %cst_116 : f32 to vector<2x32xf32>
    %492 = arith.addf %491, %490 : vector<2x32xf32>
    %493 = arith.divf %491, %492 : vector<2x32xf32>
    %494 = arith.mulf %485, %464 : vector<2x32xf32>
    %495 = arith.mulf %479, %487 : vector<2x32xf32>
    %496 = arith.addf %494, %495 : vector<2x32xf32>
    %497 = math.tanh %496 : vector<2x32xf32>
    %498 = arith.mulf %493, %497 : vector<2x32xf32>
    %c0_117 = arith.constant 0 : index
    %c6_118 = arith.constant 6 : index
    %c0_119 = arith.constant 0 : index
    %499 = vector.load %arg20[%c0_117, %c6_118, %c0_119] : memref<2x8x32xf32, #tpu.memory_space<vmem>>, vector<2x1x32xf32>
    %500 = vector.shape_cast %499 : vector<2x1x32xf32> to vector<2x32xf32>
    %501 = vector.shape_cast %498 : vector<2x32xf32> to vector<2x1x32xf32>
    tpu.vector_store %arg20[%c0_117, %c6_118, %c0_119], %501 {strides = array<i32>} : memref<2x8x32xf32, #tpu.memory_space<vmem>>, vector<2x1x32xf32>,
    %502 = vector.extract_strided_slice %274 {offsets = [0, 7, 0], sizes = [2, 1, 128], strides = [1, 1, 1]} : vector<2x8x128xf32> to vector<2x1x128xf32>
    %503 = vector.shape_cast %502 : vector<2x1x128xf32> to vector<2x128xf32>
    %cst_120 = arith.constant dense<0.000000e+00> : vector<2x128xf32>
    %504 = tpu.matmul %498, %275, %cst_120 {dimension_numbers = #tpu.dot_dimension_numbers<[1], [0], [0], [1], [0, 0, 1, 1], [], []>} : vector<2x32xf32>, vector<32x128xf32>, vector<2x128xf32> -> vector<2x128xf32>
    %505 = arith.addf %503, %504 : vector<2x128xf32>
    %506 = vector.extract_strided_slice %505 {offsets = [0, 0], sizes = [2, 32], strides = [1, 1]} : vector<2x128xf32> to vector<2x32xf32>
    %507 = arith.negf %506 : vector<2x32xf32>
    %508 = math.exp %507 : vector<2x32xf32>
    %cst_121 = arith.constant 1.000000e+00 : f32
    %509 = vector.broadcast %cst_121 : f32 to vector<2x32xf32>
    %510 = arith.addf %509, %508 : vector<2x32xf32>
    %511 = arith.divf %509, %510 : vector<2x32xf32>
    %512 = vector.extract_strided_slice %505 {offsets = [0, 32], sizes = [2, 32], strides = [1, 1]} : vector<2x128xf32> to vector<2x32xf32>
    %513 = arith.negf %512 : vector<2x32xf32>
    %514 = math.exp %513 : vector<2x32xf32>
    %cst_122 = arith.constant 1.000000e+00 : f32
    %515 = vector.broadcast %cst_122 : f32 to vector<2x32xf32>
    %516 = arith.addf %515, %514 : vector<2x32xf32>
    %517 = arith.divf %515, %516 : vector<2x32xf32>
    %518 = vector.extract_strided_slice %505 {offsets = [0, 64], sizes = [2, 32], strides = [1, 1]} : vector<2x128xf32> to vector<2x32xf32>
    %519 = math.tanh %518 : vector<2x32xf32>
    %520 = vector.extract_strided_slice %505 {offsets = [0, 96], sizes = [2, 32], strides = [1, 1]} : vector<2x128xf32> to vector<2x32xf32>
    %521 = arith.negf %520 : vector<2x32xf32>
    %522 = math.exp %521 : vector<2x32xf32>
    %cst_123 = arith.constant 1.000000e+00 : f32
    %523 = vector.broadcast %cst_123 : f32 to vector<2x32xf32>
    %524 = arith.addf %523, %522 : vector<2x32xf32>
    %525 = arith.divf %523, %524 : vector<2x32xf32>
    %526 = arith.mulf %517, %496 : vector<2x32xf32>
    %527 = arith.mulf %511, %519 : vector<2x32xf32>
    %528 = arith.addf %526, %527 : vector<2x32xf32>
    %529 = math.tanh %528 : vector<2x32xf32>
    %530 = arith.mulf %525, %529 : vector<2x32xf32>
    %c0_124 = arith.constant 0 : index
    %c7_125 = arith.constant 7 : index
    %c0_126 = arith.constant 0 : index
    %531 = vector.load %arg20[%c0_124, %c7_125, %c0_126] : memref<2x8x32xf32, #tpu.memory_space<vmem>>, vector<2x1x32xf32>
    %532 = vector.shape_cast %531 : vector<2x1x32xf32> to vector<2x32xf32>
    %533 = vector.shape_cast %530 : vector<2x32xf32> to vector<2x1x32xf32>
    tpu.vector_store %arg20[%c0_124, %c7_125, %c0_126], %533 {strides = array<i32>} : memref<2x8x32xf32, #tpu.memory_space<vmem>>, vector<2x1x32xf32>,
    %c0_127 = arith.constant 0 : index
    %c0_128 = arith.constant 0 : index
    %c0_129 = arith.constant 0 : index
    %534 = vector.load %arg20[%c0_127, %c0_128, %c0_129] : memref<2x8x32xf32, #tpu.memory_space<vmem>>, vector<2x8x32xf32>
    %535 = vector.shape_cast %534 : vector<2x8x32xf32> to vector<16x32xf32>
    %c0_130 = arith.constant 0 : index
    %c0_131 = arith.constant 0 : index
    %536 = vector.load %arg10[%c0_130, %c0_131] : memref<32x64xf32, #tpu.memory_space<vmem>>, vector<32x64xf32>
    %cst_132 = arith.constant dense<0.000000e+00> : vector<16x64xf32>
    %537 = tpu.matmul %535, %536, %cst_132 {dimension_numbers = #tpu.dot_dimension_numbers<[1], [0], [0], [1], [0, 0, 1, 1], [], []>} : vector<16x32xf32>, vector<32x64xf32>, vector<16x64xf32> -> vector<16x64xf32>
    %c0_133 = arith.constant 0 : index
    %c0_134 = arith.constant 0 : index
    %538 = vector.load %arg11[%c0_133, %c0_134] : memref<1x64xf32, #tpu.memory_space<vmem>>, vector<1x64xf32>
    %539 = vector.broadcast %538 : vector<1x64xf32> to vector<16x64xf32>
    %540 = arith.addf %537, %539 : vector<16x64xf32>
    %541 = vector.extract_strided_slice %540 {offsets = [0, 0], sizes = [16, 32], strides = [1, 1]} : vector<16x64xf32> to vector<16x32xf32>
    %542 = vector.shape_cast %541 : vector<16x32xf32> to vector<2x8x32xf32>
    %543 = vector.extract_strided_slice %540 {offsets = [0, 32], sizes = [16, 32], strides = [1, 1]} : vector<16x64xf32> to vector<16x32xf32>
    %544 = vector.shape_cast %543 : vector<16x32xf32> to vector<2x8x32xf32>
    %c0_135 = arith.constant 0 : index
    %c0_136 = arith.constant 0 : index
    %545 = vector.load %arg8[%c0_135, %c0_136] : memref<32x32xf32, #tpu.memory_space<vmem>>, vector<32x32xf32>
    %cst_137 = arith.constant dense<0.000000e+00> : vector<2x32xf32>
    %546 = tpu.matmul %530, %545, %cst_137 {dimension_numbers = #tpu.dot_dimension_numbers<[1], [0], [0], [1], [0, 0, 1, 1], [], []>} : vector<2x32xf32>, vector<32x32xf32>, vector<2x32xf32> -> vector<2x32xf32>
    %c0_138 = arith.constant 0 : index
    %c0_139 = arith.constant 0 : index
    %547 = vector.load %arg9[%c0_138, %c0_139] : memref<1x32xf32, #tpu.memory_space<vmem>>, vector<1x32xf32>
    %548 = vector.broadcast %547 : vector<1x32xf32> to vector<2x32xf32>
    %549 = arith.addf %546, %548 : vector<2x32xf32>
    %550 = vector.shape_cast %549 : vector<2x32xf32> to vector<2x1x32xf32>
    %551 = vector.broadcast %550 : vector<2x1x32xf32> to vector<2x8x32xf32>
    %552 = arith.mulf %551, %542 : vector<2x8x32xf32>
    %553 = vector.shape_cast %552 : vector<2x8x32xf32> to vector<16x32xf32>
    %c0_140 = arith.constant 0 : index
    %c0_141 = arith.constant 0 : index
    %554 = vector.load %arg12[%c0_140, %c0_141] : memref<32x4xf32, #tpu.memory_space<vmem>>, vector<32x4xf32>
    %cst_142 = arith.constant dense<0.000000e+00> : vector<16x4xf32>
    %555 = tpu.matmul %553, %554, %cst_142 {dimension_numbers = #tpu.dot_dimension_numbers<[1], [0], [0], [1], [0, 0, 1, 1], [], []>} : vector<16x32xf32>, vector<32x4xf32>, vector<16x4xf32> -> vector<16x4xf32>
    %556 = vector.shape_cast %555 : vector<16x4xf32> to vector<2x8x4xf32>
    %cst_143 = arith.constant dense<0xFF800000> : vector<2x4xf32>
    %557 = vector.multi_reduction <maximumf>, %556, %cst_143 [1] : vector<2x8x4xf32> to vector<2x4xf32>
    %558 = vector.shape_cast %557 : vector<2x4xf32> to vector<2x1x4xf32>
    %559 = vector.broadcast %558 : vector<2x1x4xf32> to vector<2x8x4xf32>
    %560 = arith.subf %556, %559 : vector<2x8x4xf32>
    %561 = math.exp %560 : vector<2x8x4xf32>
    %cst_144 = arith.constant dense<0.000000e+00> : vector<2x4xf32>
    %562 = vector.multi_reduction <add>, %561, %cst_144 [1] : vector<2x8x4xf32> to vector<2x4xf32>
    %563 = vector.shape_cast %562 : vector<2x4xf32> to vector<2x1x4xf32>
    %564 = tpu.reciprocal %563 {approx = true} : vector<2x1x4xf32> -> vector<2x1x4xf32>
    %565 = vector.broadcast %564 : vector<2x1x4xf32> to vector<2x8x4xf32>
    %566 = arith.mulf %561, %565 : vector<2x8x4xf32>
    %567 = vector.shape_cast %566 : vector<2x8x4xf32> to vector<16x4xf32>
    %c0_145 = arith.constant 0 : index
    %c0_146 = arith.constant 0 : index
    %568 = vector.load %arg13[%c0_145, %c0_146] : memref<4x32xf32, #tpu.memory_space<vmem>>, vector<4x32xf32>
    %cst_147 = arith.constant dense<0.000000e+00> : vector<16x32xf32>
    %569 = tpu.matmul %567, %568, %cst_147 {dimension_numbers = #tpu.dot_dimension_numbers<[1], [0], [0], [1], [0, 0, 1, 1], [], []>} : vector<16x4xf32>, vector<4x32xf32>, vector<16x32xf32> -> vector<16x32xf32>
    %570 = vector.shape_cast %569 : vector<16x32xf32> to vector<2x8x32xf32>
    %571 = arith.mulf %570, %544 : vector<2x8x32xf32>
    %cst_148 = arith.constant dense<0.000000e+00> : vector<2x32xf32>
    %572 = vector.multi_reduction <add>, %571, %cst_148 [1] : vector<2x8x32xf32> to vector<2x32xf32>
    %c0_149 = arith.constant 0 : index
    %c0_150 = arith.constant 0 : index
    %573 = vector.load %arg14[%c0_149, %c0_150] : memref<32x16xf32, #tpu.memory_space<vmem>>, vector<32x16xf32>
    %cst_151 = arith.constant dense<0.000000e+00> : vector<2x16xf32>
    %574 = tpu.matmul %572, %573, %cst_151 {dimension_numbers = #tpu.dot_dimension_numbers<[1], [0], [0], [1], [0, 0, 1, 1], [], []>} : vector<2x32xf32>, vector<32x16xf32>, vector<2x16xf32> -> vector<2x16xf32>
    %c0_152 = arith.constant 0 : index
    %c0_153 = arith.constant 0 : index
    %575 = vector.load %arg15[%c0_152, %c0_153] : memref<1x16xf32, #tpu.memory_space<vmem>>, vector<1x16xf32>
    %576 = vector.broadcast %575 : vector<1x16xf32> to vector<2x16xf32>
    %577 = arith.addf %574, %576 : vector<2x16xf32>
    %cst_154 = arith.constant 0.000000e+00 : f32
    %578 = vector.broadcast %cst_154 : f32 to vector<2x16xf32>
    %579 = arith.maximumf %577, %578 : vector<2x16xf32>
    %c0_155 = arith.constant 0 : index
    %c0_156 = arith.constant 0 : index
    %580 = vector.load %arg16[%c0_155, %c0_156] : memref<16x128xf32, #tpu.memory_space<vmem>>, vector<16x128xf32>
    %cst_157 = arith.constant dense<0.000000e+00> : vector<2x128xf32>
    %581 = tpu.matmul %579, %580, %cst_157 {dimension_numbers = #tpu.dot_dimension_numbers<[1], [0], [0], [1], [0, 0, 1, 1], [], []>} : vector<2x16xf32>, vector<16x128xf32>, vector<2x128xf32> -> vector<2x128xf32>
    %c0_158 = arith.constant 0 : index
    %c0_159 = arith.constant 0 : index
    %582 = vector.load %arg17[%c0_158, %c0_159] : memref<1x128xf32, #tpu.memory_space<vmem>>, vector<1x128xf32>
    %583 = vector.broadcast %582 : vector<1x128xf32> to vector<2x128xf32>
    %584 = arith.addf %581, %583 : vector<2x128xf32>
    %c0_160 = arith.constant 0 : index
    %c0_161 = arith.constant 0 : index
    %585 = vector.load %arg18[%c0_160, %c0_161] : memref<2x128xf32, #tpu.memory_space<vmem>>, vector<2x128xf32>
    tpu.vector_store %arg18[%c0_160, %c0_161], %584 {strides = array<i32>} : memref<2x128xf32, #tpu.memory_space<vmem>>, vector<2x128xf32>,
    return
  }
  func.func @transform_0(%arg0: i32) -> (i32, i32, i32) {
    %c0_i32 = arith.constant 0 : i32
    %c0_i32_0 = arith.constant 0 : i32
    %c0_i32_1 = arith.constant 0 : i32
    return %arg0, %c0_i32, %c0_i32_0 : i32, i32, i32
  }
  func.func @transform_1(%arg0: i32) -> (i32, i32) {
    %c0_i32 = arith.constant 0 : i32
    %c0_i32_0 = arith.constant 0 : i32
    %c0_i32_1 = arith.constant 0 : i32
    return %c0_i32, %c0_i32_0 : i32, i32
  }
  func.func @transform_2(%arg0: i32) -> (i32, i32) {
    %c0_i32 = arith.constant 0 : i32
    %c0_i32_0 = arith.constant 0 : i32
    %c0_i32_1 = arith.constant 0 : i32
    return %c0_i32, %c0_i32_0 : i32, i32
  }
  func.func @transform_3(%arg0: i32) -> (i32, i32) {
    %c0_i32 = arith.constant 0 : i32
    %c0_i32_0 = arith.constant 0 : i32
    %c0_i32_1 = arith.constant 0 : i32
    return %c0_i32, %c0_i32_0 : i32, i32
  }
  func.func @transform_4(%arg0: i32) -> (i32, i32) {
    %c0_i32 = arith.constant 0 : i32
    %c0_i32_0 = arith.constant 0 : i32
    %c0_i32_1 = arith.constant 0 : i32
    return %c0_i32, %c0_i32_0 : i32, i32
  }
  func.func @transform_5(%arg0: i32) -> (i32, i32) {
    %c0_i32 = arith.constant 0 : i32
    %c0_i32_0 = arith.constant 0 : i32
    %c0_i32_1 = arith.constant 0 : i32
    return %c0_i32, %c0_i32_0 : i32, i32
  }
  func.func @transform_6(%arg0: i32) -> (i32, i32) {
    %c0_i32 = arith.constant 0 : i32
    %c0_i32_0 = arith.constant 0 : i32
    %c0_i32_1 = arith.constant 0 : i32
    return %c0_i32, %c0_i32_0 : i32, i32
  }
  func.func @transform_7(%arg0: i32) -> (i32, i32) {
    %c0_i32 = arith.constant 0 : i32
    %c0_i32_0 = arith.constant 0 : i32
    %c0_i32_1 = arith.constant 0 : i32
    return %c0_i32, %c0_i32_0 : i32, i32
  }
  func.func @transform_8(%arg0: i32) -> (i32, i32) {
    %c0_i32 = arith.constant 0 : i32
    %c0_i32_0 = arith.constant 0 : i32
    %c0_i32_1 = arith.constant 0 : i32
    return %c0_i32, %c0_i32_0 : i32, i32
  }
  func.func @transform_9(%arg0: i32) -> (i32, i32) {
    %c0_i32 = arith.constant 0 : i32
    %c0_i32_0 = arith.constant 0 : i32
    %c0_i32_1 = arith.constant 0 : i32
    return %c0_i32, %c0_i32_0 : i32, i32
  }
  func.func @transform_10(%arg0: i32) -> (i32, i32) {
    %c0_i32 = arith.constant 0 : i32
    %c0_i32_0 = arith.constant 0 : i32
    %c0_i32_1 = arith.constant 0 : i32
    return %c0_i32, %c0_i32_0 : i32, i32
  }
  func.func @transform_11(%arg0: i32) -> (i32, i32) {
    %c0_i32 = arith.constant 0 : i32
    %c0_i32_0 = arith.constant 0 : i32
    %c0_i32_1 = arith.constant 0 : i32
    return %c0_i32, %c0_i32_0 : i32, i32
  }
  func.func @transform_12(%arg0: i32) -> (i32, i32) {
    %c0_i32 = arith.constant 0 : i32
    %c0_i32_0 = arith.constant 0 : i32
    %c0_i32_1 = arith.constant 0 : i32
    return %c0_i32, %c0_i32_0 : i32, i32
  }
  func.func @transform_13(%arg0: i32) -> (i32, i32) {
    %c0_i32 = arith.constant 0 : i32
    %c0_i32_0 = arith.constant 0 : i32
    %c0_i32_1 = arith.constant 0 : i32
    return %c0_i32, %c0_i32_0 : i32, i32
  }
  func.func @transform_14(%arg0: i32) -> (i32, i32) {
    %c0_i32 = arith.constant 0 : i32
    %c0_i32_0 = arith.constant 0 : i32
    %c0_i32_1 = arith.constant 0 : i32
    return %c0_i32, %c0_i32_0 : i32, i32
  }
  func.func @transform_15(%arg0: i32) -> (i32, i32) {
    %c0_i32 = arith.constant 0 : i32
    %c0_i32_0 = arith.constant 0 : i32
    %c0_i32_1 = arith.constant 0 : i32
    return %c0_i32, %c0_i32_0 : i32, i32
  }
  func.func @transform_16(%arg0: i32) -> (i32, i32) {
    %c0_i32 = arith.constant 0 : i32
    %c0_i32_0 = arith.constant 0 : i32
    %c0_i32_1 = arith.constant 0 : i32
    return %c0_i32, %c0_i32_0 : i32, i32
  }
  func.func @transform_17(%arg0: i32) -> (i32, i32) {
    %c0_i32 = arith.constant 0 : i32
    %c0_i32_0 = arith.constant 0 : i32
    return %arg0, %c0_i32 : i32, i32
  }
}

</mosaic_0001>

<llo_original>
// kernel: lstm_regime_predictor.1
$region0: #{lstm_regime_predictor.1}
  #allocation0 [shape = 'u32[]', space=smem, size = 0x4, offset = 0x4, fixed_abs, tag = 'smem constant byte address 0x4 - core index']
  #allocation1 [shape = 'u32[144,128]{1,0:T(1,128)}', space=vmem, size = 0x12000, scoped, tag = 'internal scratch']
  #allocation2 [shape = 'f32[2,8,32]{2,1,0:T(8,128)}', space=vmem, size = 0x2000, scoped, tag = 'scratch operand']
  #allocation3 [shape = 'f32[2,8,32]{2,1,0:T(8,128)}', space=vmem, size = 0x2000, scoped, tag = 'scratch operand']
  %s0 = inlined_call_operand.vmem [shape: f32[2,8,16], index: 0, kind: input, shape index: {}]
  %s1 = inlined_call_operand.vmem [shape: f32[16,128], index: 1, kind: input, shape index: {}]
  %s2 = inlined_call_operand.vmem [shape: f32[32,128], index: 2, kind: input, shape index: {}]
  %s3 = inlined_call_operand.vmem [shape: f32[1,128], index: 3, kind: input, shape index: {}]
  %s4 = inlined_call_operand.vmem [shape: f32[32,128], index: 4, kind: input, shape index: {}]
  %s5 = inlined_call_operand.vmem [shape: f32[32,128], index: 5, kind: input, shape index: {}]
  %s6 = inlined_call_operand.vmem [shape: f32[1,128], index: 6, kind: input, shape index: {}]
  %s7 = inlined_call_operand.vmem [shape: f32[32,32], index: 7, kind: input, shape index: {}]
  %s8 = inlined_call_operand.vmem [shape: f32[1,32], index: 8, kind: input, shape index: {}]
  %s9 = inlined_call_operand.vmem [shape: f32[32,64], index: 9, kind: input, shape index: {}]
  %s10 = inlined_call_operand.vmem [shape: f32[1,64], index: 10, kind: input, shape index: {}]
  %s11 = inlined_call_operand.vmem [shape: f32[32,4], index: 11, kind: input, shape index: {}]
  %s12 = inlined_call_operand.vmem [shape: f32[4,32], index: 12, kind: input, shape index: {}]
  %s13 = inlined_call_operand.vmem [shape: f32[32,16], index: 13, kind: input, shape index: {}]
  %s14 = inlined_call_operand.vmem [shape: f32[1,16], index: 14, kind: input, shape index: {}]
  %s15 = inlined_call_operand.vmem [shape: f32[16,128], index: 15, kind: input, shape index: {}]
  %s16 = inlined_call_operand.vmem [shape: f32[1,128], index: 16, kind: input, shape index: {}]
  %s17 = inlined_call_operand.hbm [shape: f32[2,128], index: 17, kind: output, shape index: {}]
  %s18 = sld [smem:[#allocation0]]
  $region78: #{lstm_regime_predictor.1} parent=0
    _
  %s20 = ssub.s32 1, %s18
  %s21 = scalar_select 0, %s20, %s18
  $region1: #{lstm_regime_predictor.1} parent=0
    #allocation4 [shape = 'u8[1024]{0}', space=vmem, size = 0x400, scoped, tag = 'output window, operand 0, single buffered']
    #allocation5 [shape = 's32[1]{0}', space=sflag, size = 0x4, scoped, tag = 'scoped memory for lstm_regime_predictor.1']
    %22 = vsyncpa [#allocation5], 0
    // Predicated region
    $region2: #{lstm_regime_predictor.1} parent=1 // pred_check
      _
    $region3: #{lstm_regime_predictor.1} parent=1 // pred_check_branch
      %24 = sbr.rel (0) target = $region5
    $region4: #{lstm_regime_predictor.1} parent=1 // pred_region
      _
    $region5: #{lstm_regime_predictor.1} parent=1 // pred_fallthru
      _
    // Predicated region
    $region6: #{lstm_regime_predictor.1} parent=1 // pred_check
      _
    $region7: #{lstm_regime_predictor.1} parent=1 // pred_check_branch
      %26 = sbr.rel (0) target = $region9
    $region8: #{lstm_regime_predictor.1} parent=1 // pred_region
      _
    $region9: #{lstm_regime_predictor.1} parent=1 // pred_fallthru
      _
    // Predicated region
    $region10: #{lstm_regime_predictor.1} parent=1 // pred_check
      _
    $region11: #{lstm_regime_predictor.1} parent=1 // pred_check_branch
      %28 = sbr.rel (0) target = $region13
    $region12: #{lstm_regime_predictor.1} parent=1 // pred_region
      _
    $region13: #{lstm_regime_predictor.1} parent=1 // pred_fallthru
      _
    // Predicated region
    $region14: #{lstm_regime_predictor.1} parent=1 // pred_check
      _
    $region15: #{lstm_regime_predictor.1} parent=1 // pred_check_branch
      %30 = sbr.rel (0) target = $region17
    $region16: #{lstm_regime_predictor.1} parent=1 // pred_region
      _
    $region17: #{lstm_regime_predictor.1} parent=1 // pred_fallthru
      _
    // Predicated region
    $region18: #{lstm_regime_predictor.1} parent=1 // pred_check
      _
    $region19: #{lstm_regime_predictor.1} parent=1 // pred_check_branch
      %32 = sbr.rel (0) target = $region21
    $region20: #{lstm_regime_predictor.1} parent=1 // pred_region
      _
    $region21: #{lstm_regime_predictor.1} parent=1 // pred_fallthru
      _
    // Predicated region
    $region22: #{lstm_regime_predictor.1} parent=1 // pred_check
      _
    $region23: #{lstm_regime_predictor.1} parent=1 // pred_check_branch
      %34 = sbr.rel (0) target = $region25
    $region24: #{lstm_regime_predictor.1} parent=1 // pred_region
      _
    $region25: #{lstm_regime_predictor.1} parent=1 // pred_fallthru
      _
    // Predicated region
    $region26: #{lstm_regime_predictor.1} parent=1 // pred_check
      _
    $region27: #{lstm_regime_predictor.1} parent=1 // pred_check_branch
      %36 = sbr.rel (0) target = $region29
    $region28: #{lstm_regime_predictor.1} parent=1 // pred_region
      _
    $region29: #{lstm_regime_predictor.1} parent=1 // pred_fallthru
      _
    // Predicated region
    $region30: #{lstm_regime_predictor.1} parent=1 // pred_check
      _
    $region31: #{lstm_regime_predictor.1} parent=1 // pred_check_branch
      %38 = sbr.rel (0) target = $region33
    $region32: #{lstm_regime_predictor.1} parent=1 // pred_region
      _
    $region33: #{lstm_regime_predictor.1} parent=1 // pred_fallthru
      _
    // Predicated region
    $region34: #{lstm_regime_predictor.1} parent=1 // pred_check
      _
    $region35: #{lstm_regime_predictor.1} parent=1 // pred_check_branch
      %40 = sbr.rel (0) target = $region37
    $region36: #{lstm_regime_predictor.1} parent=1 // pred_region
      _
    $region37: #{lstm_regime_predictor.1} parent=1 // pred_fallthru
      _
    // Predicated region
    $region38: #{lstm_regime_predictor.1} parent=1 // pred_check
      _
    $region39: #{lstm_regime_predictor.1} parent=1 // pred_check_branch
      %42 = sbr.rel (0) target = $region41
    $region40: #{lstm_regime_predictor.1} parent=1 // pred_region
      _
    $region41: #{lstm_regime_predictor.1} parent=1 // pred_fallthru
      _
    // Predicated region
    $region42: #{lstm_regime_predictor.1} parent=1 // pred_check
      _
    $region43: #{lstm_regime_predictor.1} parent=1 // pred_check_branch
      %44 = sbr.rel (0) target = $region45
    $region44: #{lstm_regime_predictor.1} parent=1 // pred_region
      _
    $region45: #{lstm_regime_predictor.1} parent=1 // pred_fallthru
      _
    // Predicated region
    $region46: #{lstm_regime_predictor.1} parent=1 // pred_check
      _
    $region47: #{lstm_regime_predictor.1} parent=1 // pred_check_branch
      %46 = sbr.rel (0) target = $region49
    $region48: #{lstm_regime_predictor.1} parent=1 // pred_region
      _
    $region49: #{lstm_regime_predictor.1} parent=1 // pred_fallthru
      _
    // Predicated region
    $region50: #{lstm_regime_predictor.1} parent=1 // pred_check
      _
    $region51: #{lstm_regime_predictor.1} parent=1 // pred_check_branch
      %48 = sbr.rel (0) target = $region53
    $region52: #{lstm_regime_predictor.1} parent=1 // pred_region
      _
    $region53: #{lstm_regime_predictor.1} parent=1 // pred_fallthru
      _
    // Predicated region
    $region54: #{lstm_regime_predictor.1} parent=1 // pred_check
      _
    $region55: #{lstm_regime_predictor.1} parent=1 // pred_check_branch
      %50 = sbr.rel (0) target = $region57
    $region56: #{lstm_regime_predictor.1} parent=1 // pred_region
      _
    $region57: #{lstm_regime_predictor.1} parent=1 // pred_fallthru
      _
    // Predicated region
    $region58: #{lstm_regime_predictor.1} parent=1 // pred_check
      _
    $region59: #{lstm_regime_predictor.1} parent=1 // pred_check_branch
      %52 = sbr.rel (0) target = $region61
    $region60: #{lstm_regime_predictor.1} parent=1 // pred_region
      _
    $region61: #{lstm_regime_predictor.1} parent=1 // pred_fallthru
      _
    // Predicated region
    $region62: #{lstm_regime_predictor.1} parent=1 // pred_check
      _
    $region63: #{lstm_regime_predictor.1} parent=1 // pred_check_branch
      %54 = sbr.rel (0) target = $region65
    $region64: #{lstm_regime_predictor.1} parent=1 // pred_region
      _
    $region65: #{lstm_regime_predictor.1} parent=1 // pred_fallthru
      _
    // Predicated region
    $region66: #{lstm_regime_predictor.1} parent=1 // pred_check
      _
    $region67: #{lstm_regime_predictor.1} parent=1 // pred_check_branch
      %56 = sbr.rel (0) target = $region69
    $region68: #{lstm_regime_predictor.1} parent=1 // pred_region
      _
    $region69: #{lstm_regime_predictor.1} parent=1 // pred_fallthru
      _
    %v57 = vld [vmem:[%s0] sm:$0xff]
    %v58 = vld [vmem:[%s0 + $0x8] sm:$0xff]
    %v59 = vld [vmem:[%s1] sm:$0xff]
    %v60 = vld [vmem:[%s1 + $0x8] sm:$0xff]
    %v61 = vld [vmem:[%s3] sm:$0x1]
    %v63 = vlaneseq
    %v64 = vshrl.u32 %v63, 7
    %v65 = vsub.s32 0, %v64
    %v66 = vrot.slane %v61, %v65
    %vm68 = vcmask 130048
    %v70 = vsel %vm68, %v57, 0
    %v73 = vsel %vm68, %v58, 0
    %75 = vmatprep.subr.mxu0 0.0
    %76 = vmatpush1.msra.mxu0 0.0
    %77 = vmatprep.subr.mxu0 0.0
    %78 = vmatpush1.msra.mxu0 0.0
    %79 = vmatprep.subr.mxu0 0.0
    %80 = vmatpush1.msra.mxu0 0.0
    %81 = vmatprep.subr.mxu0 0.0
    %82 = vmatpush1.msra.mxu0 0.0
    %83 = vmatprep.subr.mxu0 0.0
    %84 = vmatpush1.msra.mxu0 0.0
    %85 = vmatprep.subr.mxu0 0.0
    %86 = vmatpush1.msra.mxu0 0.0
    %87 = vmatprep.subr.mxu0 0.0
    %88 = vmatpush1.msra.mxu0 0.0
    %89 = vmatprep.subr.mxu0 0.0
    %90 = vmatpush1.msra.mxu0 0.0
    %91 = vmatprep.subr.mxu0 0.0
    %92 = vmatpush1.msra.mxu0 0.0
    %93 = vmatprep.subr.mxu0 0.0
    %94 = vmatpush1.msra.mxu0 0.0
    %95 = vmatprep.subr.mxu0 0.0
    %96 = vmatpush1.msra.mxu0 0.0
    %97 = vmatprep.subr.mxu0 0.0
    %98 = vmatpush1.msra.mxu0 0.0
    %99 = vmatprep.subr.mxu0 0.0
    %100 = vmatpush1.msra.mxu0 0.0
    %101 = vmatprep.subr.mxu0 0.0
    %102 = vmatpush1.msra.mxu0 0.0
    %103 = vmatprep.subr.mxu0 0.0
    %104 = vmatpush1.msra.mxu0 %v60
    %105 = vmatprep.subr.mxu0 0.0
    %106 = vmatpush1.msra.mxu0 %v59
    %107 = vmatprep.subr.mxu0 0.0
    %108 = vmatpush2.msra.mxu0 0.0
    %109 = vmatprep.subr.mxu0 0.0
    %110 = vmatpush2.msra.mxu0 0.0
    %111 = vmatprep.subr.mxu0 0.0
    %112 = vmatpush2.msra.mxu0 0.0
    %113 = vmatprep.subr.mxu0 0.0
    %114 = vmatpush2.msra.mxu0 0.0
    %115 = vmatprep.subr.mxu0 0.0
    %116 = vmatpush2.msra.mxu0 0.0
    %117 = vmatprep.subr.mxu0 0.0
    %118 = vmatpush2.msra.mxu0 0.0
    %119 = vmatprep.subr.mxu0 0.0
    %120 = vmatpush2.msra.mxu0 0.0
    %121 = vmatprep.subr.mxu0 0.0
    %122 = vmatpush2.msra.mxu0 0.0
    %123 = vmatprep.subr.mxu0 0.0
    %124 = vmatpush2.msra.mxu0 0.0
    %125 = vmatprep.subr.mxu0 0.0
    %126 = vmatpush2.msra.mxu0 0.0
    %127 = vmatprep.subr.mxu0 0.0
    %128 = vmatpush2.msra.mxu0 0.0
    %129 = vmatprep.subr.mxu0 0.0
    %130 = vmatpush2.msra.mxu0 0.0
    %131 = vmatprep.subr.mxu0 0.0
    %132 = vmatpush2.msra.mxu0 0.0
    %133 = vmatprep.subr.mxu0 0.0
    %134 = vmatpush2.msra.mxu0 0.0
    %135 = vmatprep.subr.mxu0 0.0
    %136 = vmatpush2.msra.mxu0 0.0
    %137 = vmatprep.subr.mxu0 0.0
    %138 = vmatpush2.msra.mxu0 0.0
    %139 = vmatprep.mubr.f32.mxu0 0.0
    %140 = vmatmul.mubr.f32.gmra.mxu0 %v70
    %v141 = vpop.f32.mrf.mxu0
    %v142 = vadd.f32 %v66, %v141
    %v143 = vpop.f32.mrf.mxu0
    %144 = vmatprep.mubr.f32.mxu0 0.0
    %145 = vmatmul.mubr.f32.gmra.mxu0 %v73
    %v146 = vpop.f32.mrf.mxu0
    %v147 = vadd.f32 %v66, %v146
    %v148 = vpop.f32.mrf.mxu0
    %149 = vdwg.mxu0
    %v150 = vld [vmem:[%s2] sm:$0xff]
    %v151 = vld [vmem:[%s2 + $0x8] sm:$0xff]
    %v152 = vld [vmem:[%s2 + $0x10] sm:$0xff]
    %v153 = vld [vmem:[%s2 + $0x18] sm:$0xff]
    %vm154 = vcmask 261120
    %v156 = vsel %vm154, 0.0, 0
    %158 = vmatprep.subr.mxu0 0.0
    %159 = vmatpush1.msra.mxu0 0.0
    %160 = vmatprep.subr.mxu0 0.0
    %161 = vmatpush1.msra.mxu0 0.0
    %162 = vmatprep.subr.mxu0 0.0
    %163 = vmatpush1.msra.mxu0 0.0
    %164 = vmatprep.subr.mxu0 0.0
    %165 = vmatpush1.msra.mxu0 0.0
    %166 = vmatprep.subr.mxu0 0.0
    %167 = vmatpush1.msra.mxu0 0.0
    %168 = vmatprep.subr.mxu0 0.0
    %169 = vmatpush1.msra.mxu0 0.0
    %170 = vmatprep.subr.mxu0 0.0
    %171 = vmatpush1.msra.mxu0 0.0
    %172 = vmatprep.subr.mxu0 0.0
    %173 = vmatpush1.msra.mxu0 0.0
    %174 = vmatprep.subr.mxu0 0.0
    %175 = vmatpush1.msra.mxu0 0.0
    %176 = vmatprep.subr.mxu0 0.0
    %177 = vmatpush1.msra.mxu0 0.0
    %178 = vmatprep.subr.mxu0 0.0
    %179 = vmatpush1.msra.mxu0 0.0
    %180 = vmatprep.subr.mxu0 0.0
    %181 = vmatpush1.msra.mxu0 0.0
    %182 = vmatprep.subr.mxu0 0.0
    %183 = vmatpush1.msra.mxu0 %v153
    %184 = vmatprep.subr.mxu0 0.0
    %185 = vmatpush1.msra.mxu0 %v152
    %186 = vmatprep.subr.mxu0 0.0
    %187 = vmatpush1.msra.mxu0 %v151
    %188 = vmatprep.subr.mxu0 0.0
    %189 = vmatpush1.msra.mxu0 %v150
    %190 = vmatprep.subr.mxu0 0.0
    %191 = vmatpush2.msra.mxu0 0.0
    %192 = vmatprep.subr.mxu0 0.0
    %193 = vmatpush2.msra.mxu0 0.0
    %194 = vmatprep.subr.mxu0 0.0
    %195 = vmatpush2.msra.mxu0 0.0
    %196 = vmatprep.subr.mxu0 0.0
    %197 = vmatpush2.msra.mxu0 0.0
    %198 = vmatprep.subr.mxu0 0.0
    %199 = vmatpush2.msra.mxu0 0.0
    %200 = vmatprep.subr.mxu0 0.0
    %201 = vmatpush2.msra.mxu0 0.0
    %202 = vmatprep.subr.mxu0 0.0
    %203 = vmatpush2.msra.mxu0 0.0
    %204 = vmatprep.subr.mxu0 0.0
    %205 = vmatpush2.msra.mxu0 0.0
    %206 = vmatprep.subr.mxu0 0.0
    %207 = vmatpush2.msra.mxu0 0.0
    %208 = vmatprep.subr.mxu0 0.0
    %209 = vmatpush2.msra.mxu0 0.0
    %210 = vmatprep.subr.mxu0 0.0
    %211 = vmatpush2.msra.mxu0 0.0
    %212 = vmatprep.subr.mxu0 0.0
    %213 = vmatpush2.msra.mxu0 0.0
    %214 = vmatprep.subr.mxu0 0.0
    %215 = vmatpush2.msra.mxu0 0.0
    %216 = vmatprep.subr.mxu0 0.0
    %217 = vmatpush2.msra.mxu0 0.0
    %218 = vmatprep.subr.mxu0 0.0
    %219 = vmatpush2.msra.mxu0 0.0
    %220 = vmatprep.subr.mxu0 0.0
    %221 = vmatpush2.msra.mxu0 0.0
    %222 = vmatprep.mubr.f32.mxu0 0.0
    %223 = vmatmul.mubr.f32.gmra.mxu0 %v156
    %v224 = vpop.f32.mrf.mxu0
    %v225 = vadd.f32 0.0, %v224
    %v226 = vpop.f32.mrf.mxu0
    %227 = vdwg.mxu0
    %v229 = vrot.slane %v225, 1
    %v232 = vadd.f32 %v142, %v225
    %v233 = vadd.f32 %v147, %v229
    %v234 = vxor.u32 %v232, 2147483648
    %v235 = vxor.u32 %v233, 2147483648
    %v236 = vmul.f32 %v234, 1.442695
    %v237 = vpow.pop %v236
    %v238 = vmul.f32 %v235, 1.442695
    %v239 = vpow.pop %v238
    %v240 = vadd.f32 %v237, 1.0
    %v241 = vadd.f32 %v239, 1.0
    %v242 = vrcp.pop %v240
    %v243 = vmul.f32 1.0, %v242
    %v244 = vrcp.pop %v241
    %v245 = vmul.f32 1.0, %v244
    %v246 = vtanh.pop %v232
    %v247 = vtanh.pop %v233
    %v248 = vmul.f32 %v243, 0.0
    %v249 = vmul.f32 %v245, 0.0
    %252 = vrot.lane.b32.xlu0 %v246, 64
    %v253 = vpop.permute.xlu0 %252
    %254 = vrot.lane.b32.xlu0 %v247, 64
    %v255 = vpop.permute.xlu0 %254
    %v258 = vmul.f32 %v243, %v253
    %v259 = vmul.f32 %v245, %v255
    %262 = vrot.lane.b32.xlu0 %v258, 32
    %v263 = vpop.permute.xlu0 %262
    %264 = vrot.lane.b32.xlu0 %v259, 32
    %v265 = vpop.permute.xlu0 %264
    %v268 = vadd.f32 %v248, %v263
    %v269 = vadd.f32 %v249, %v265
    %v270 = vtanh.pop %v268
    %v271 = vtanh.pop %v269
    %274 = vrot.lane.b32.xlu0 %v270, 64
    %v275 = vpop.permute.xlu0 %274
    %276 = vrot.lane.b32.xlu0 %v271, 64
    %v277 = vpop.permute.xlu0 %276
    %v280 = vmul.f32 %v243, %v275
    %v281 = vmul.f32 %v245, %v277
    %284 = vrot.lane.b32.xlu0 %v280, 32
    %v285 = vpop.permute.xlu0 %284
    %286 = vrot.lane.b32.xlu0 %v281, 32
    %v287 = vpop.permute.xlu0 %286
    %vm290 = vcmask 253952
    %291 = vst.msk [vmem:[#allocation2] sm:$0x1] %vm290, %v285
    %292 = vst.msk [vmem:[#allocation2 + $0x8] sm:$0x1] %vm290, %v287
    %v293 = vrot.slane %v281, 7
    %vm294 = vcmask 1041409
    %v295 = vsel %vm294, %v293, %v280
    %296 = vrot.lane.b32.xlu0 %v295, 32
    %v297 = vpop.permute.xlu0 %296
    %v298 = vsel %vm154, %v297, 0
    %300 = vmatprep.subr.mxu0 0.0
    %301 = vmatpush1.msra.mxu0 0.0
    %302 = vmatprep.subr.mxu0 0.0
    %303 = vmatpush1.msra.mxu0 0.0
    %304 = vmatprep.subr.mxu0 0.0
    %305 = vmatpush1.msra.mxu0 0.0
    %306 = vmatprep.subr.mxu0 0.0
    %307 = vmatpush1.msra.mxu0 0.0
    %308 = vmatprep.subr.mxu0 0.0
    %309 = vmatpush1.msra.mxu0 0.0
    %310 = vmatprep.subr.mxu0 0.0
    %311 = vmatpush1.msra.mxu0 0.0
    %312 = vmatprep.subr.mxu0 0.0
    %313 = vmatpush1.msra.mxu0 0.0
    %314 = vmatprep.subr.mxu0 0.0
    %315 = vmatpush1.msra.mxu0 0.0
    %316 = vmatprep.subr.mxu0 0.0
    %317 = vmatpush1.msra.mxu0 0.0
    %318 = vmatprep.subr.mxu0 0.0
    %319 = vmatpush1.msra.mxu0 0.0
    %320 = vmatprep.subr.mxu0 0.0
    %321 = vmatpush1.msra.mxu0 0.0
    %322 = vmatprep.subr.mxu0 0.0
    %323 = vmatpush1.msra.mxu0 0.0
    %324 = vmatprep.subr.mxu0 0.0
    %325 = vmatpush1.msra.mxu0 %v153
    %326 = vmatprep.subr.mxu0 0.0
    %327 = vmatpush1.msra.mxu0 %v152
    %328 = vmatprep.subr.mxu0 0.0
    %329 = vmatpush1.msra.mxu0 %v151
    %330 = vmatprep.subr.mxu0 0.0
    %331 = vmatpush1.msra.mxu0 %v150
    %332 = vmatprep.subr.mxu0 0.0
    %333 = vmatpush2.msra.mxu0 0.0
    %334 = vmatprep.subr.mxu0 0.0
    %335 = vmatpush2.msra.mxu0 0.0
    %336 = vmatprep.subr.mxu0 0.0
    %337 = vmatpush2.msra.mxu0 0.0
    %338 = vmatprep.subr.mxu0 0.0
    %339 = vmatpush2.msra.mxu0 0.0
    %340 = vmatprep.subr.mxu0 0.0
    %341 = vmatpush2.msra.mxu0 0.0
    %342 = vmatprep.subr.mxu0 0.0
    %343 = vmatpush2.msra.mxu0 0.0
    %344 = vmatprep.subr.mxu0 0.0
    %345 = vmatpush2.msra.mxu0 0.0
    %346 = vmatprep.subr.mxu0 0.0
    %347 = vmatpush2.msra.mxu0 0.0
    %348 = vmatprep.subr.mxu0 0.0
    %349 = vmatpush2.msra.mxu0 0.0
    %350 = vmatprep.subr.mxu0 0.0
    %351 = vmatpush2.msra.mxu0 0.0
    %352 = vmatprep.subr.mxu0 0.0
    %353 = vmatpush2.msra.mxu0 0.0
    %354 = vmatprep.subr.mxu0 0.0
    %355 = vmatpush2.msra.mxu0 0.0
    %356 = vmatprep.subr.mxu0 0.0
    %357 = vmatpush2.msra.mxu0 0.0
    %358 = vmatprep.subr.mxu0 0.0
    %359 = vmatpush2.msra.mxu0 0.0
    %360 = vmatprep.subr.mxu0 0.0
    %361 = vmatpush2.msra.mxu0 0.0
    %362 = vmatprep.subr.mxu0 0.0
    %363 = vmatpush2.msra.mxu0 0.0
    %364 = vmatprep.mubr.f32.mxu0 0.0
    %365 = vmatmul.mubr.f32.gmra.mxu0 %v298
    %v366 = vpop.f32.mrf.mxu0
    %v367 = vadd.f32 0.0, %v366
    %v368 = vpop.f32.mrf.mxu0
    %369 = vdwg.mxu0
    %v371 = vrot.slane %v367, 7
    %v374 = vadd.f32 %v142, %v371
    %v375 = vadd.f32 %v147, %v367
    %v376 = vxor.u32 %v374, 2147483648
    %v377 = vxor.u32 %v375, 2147483648
    %v378 = vmul.f32 %v376, 1.442695
    %v379 = vpow.pop %v378
    %v380 = vmul.f32 %v377, 1.442695
    %v381 = vpow.pop %v380
    %v382 = vadd.f32 %v379, 1.0
    %v383 = vadd.f32 %v381, 1.0
    %v384 = vrcp.pop %v382
    %v385 = vmul.f32 1.0, %v384
    %v386 = vrcp.pop %v383
    %v387 = vmul.f32 1.0, %v386
    %v388 = vtanh.pop %v374
    %v389 = vtanh.pop %v375
    %v392 = vrot.slane %v268, 7
    %v393 = vrot.slane %v269, 7
    %v396 = vmul.f32 %v385, %v392
    %v397 = vmul.f32 %v387, %v393
    %400 = vrot.lane.b32.xlu0 %v388, 64
    %v401 = vpop.permute.xlu0 %400
    %402 = vrot.lane.b32.xlu0 %v389, 64
    %v403 = vpop.permute.xlu0 %402
    %v406 = vmul.f32 %v385, %v401
    %v407 = vmul.f32 %v387, %v403
    %410 = vrot.lane.b32.xlu0 %v406, 32
    %v411 = vpop.permute.xlu0 %410
    %412 = vrot.lane.b32.xlu0 %v407, 32
    %v413 = vpop.permute.xlu0 %412
    %v416 = vadd.f32 %v396, %v411
    %v417 = vadd.f32 %v397, %v413
    %v418 = vtanh.pop %v416
    %v419 = vtanh.pop %v417
    %422 = vrot.lane.b32.xlu0 %v418, 64
    %v423 = vpop.permute.xlu0 %422
    %424 = vrot.lane.b32.xlu0 %v419, 64
    %v425 = vpop.permute.xlu0 %424
    %v428 = vmul.f32 %v385, %v423
    %v429 = vmul.f32 %v387, %v425
    %432 = vrot.lane.b32.xlu0 %v428, 32
    %v433 = vpop.permute.xlu0 %432
    %434 = vrot.lane.b32.xlu0 %v429, 32
    %v435 = vpop.permute.xlu0 %434
    %vm438 = vcmask 254977
    %439 = vst.msk [vmem:[#allocation2] sm:$0x2] %vm438, %v433
    %440 = vst.msk [vmem:[#allocation2 + $0x8] sm:$0x2] %vm438, %v435
    %v441 = vrot.slane %v428, 1
    %v442 = vsel %vm294, %v429, %v441
    %443 = vrot.lane.b32.xlu0 %v442, 32
    %v444 = vpop.permute.xlu0 %443
    %v445 = vsel %vm154, %v444, 0
    %447 = vmatprep.subr.mxu0 0.0
    %448 = vmatpush1.msra.mxu0 0.0
    %449 = vmatprep.subr.mxu0 0.0
    %450 = vmatpush1.msra.mxu0 0.0
    %451 = vmatprep.subr.mxu0 0.0
    %452 = vmatpush1.msra.mxu0 0.0
    %453 = vmatprep.subr.mxu0 0.0
    %454 = vmatpush1.msra.mxu0 0.0
    %455 = vmatprep.subr.mxu0 0.0
    %456 = vmatpush1.msra.mxu0 0.0
    %457 = vmatprep.subr.mxu0 0.0
    %458 = vmatpush1.msra.mxu0 0.0
    %459 = vmatprep.subr.mxu0 0.0
    %460 = vmatpush1.msra.mxu0 0.0
    %461 = vmatprep.subr.mxu0 0.0
    %462 = vmatpush1.msra.mxu0 0.0
    %463 = vmatprep.subr.mxu0 0.0
    %464 = vmatpush1.msra.mxu0 0.0
    %465 = vmatprep.subr.mxu0 0.0
    %466 = vmatpush1.msra.mxu0 0.0
    %467 = vmatprep.subr.mxu0 0.0
    %468 = vmatpush1.msra.mxu0 0.0
    %469 = vmatprep.subr.mxu0 0.0
    %470 = vmatpush1.msra.mxu0 0.0
    %471 = vmatprep.subr.mxu0 0.0
    %472 = vmatpush1.msra.mxu0 %v153
    %473 = vmatprep.subr.mxu0 0.0
    %474 = vmatpush1.msra.mxu0 %v152
    %475 = vmatprep.subr.mxu0 0.0
    %476 = vmatpush1.msra.mxu0 %v151
    %477 = vmatprep.subr.mxu0 0.0
    %478 = vmatpush1.msra.mxu0 %v150
    %479 = vmatprep.subr.mxu0 0.0
    %480 = vmatpush2.msra.mxu0 0.0
    %481 = vmatprep.subr.mxu0 0.0
    %482 = vmatpush2.msra.mxu0 0.0
    %483 = vmatprep.subr.mxu0 0.0
    %484 = vmatpush2.msra.mxu0 0.0
    %485 = vmatprep.subr.mxu0 0.0
    %486 = vmatpush2.msra.mxu0 0.0
    %487 = vmatprep.subr.mxu0 0.0
    %488 = vmatpush2.msra.mxu0 0.0
    %489 = vmatprep.subr.mxu0 0.0
    %490 = vmatpush2.msra.mxu0 0.0
    %491 = vmatprep.subr.mxu0 0.0
    %492 = vmatpush2.msra.mxu0 0.0
    %493 = vmatprep.subr.mxu0 0.0
    %494 = vmatpush2.msra.mxu0 0.0
    %495 = vmatprep.subr.mxu0 0.0
    %496 = vmatpush2.msra.mxu0 0.0
    %497 = vmatprep.subr.mxu0 0.0
    %498 = vmatpush2.msra.mxu0 0.0
    %499 = vmatprep.subr.mxu0 0.0
    %500 = vmatpush2.msra.mxu0 0.0
    %501 = vmatprep.subr.mxu0 0.0
    %502 = vmatpush2.msra.mxu0 0.0
    %503 = vmatprep.subr.mxu0 0.0
    %504 = vmatpush2.msra.mxu0 0.0
    %505 = vmatprep.subr.mxu0 0.0
    %506 = vmatpush2.msra.mxu0 0.0
    %507 = vmatprep.subr.mxu0 0.0
    %508 = vmatpush2.msra.mxu0 0.0
    %509 = vmatprep.subr.mxu0 0.0
    %510 = vmatpush2.msra.mxu0 0.0
    %511 = vmatprep.mubr.f32.mxu0 0.0
    %512 = vmatmul.mubr.f32.gmra.mxu0 %v445
    %v513 = vpop.f32.mrf.mxu0
    %v514 = vadd.f32 0.0, %v513
    %v515 = vpop.f32.mrf.mxu0
    %516 = vdwg.mxu0
    %v518 = vrot.slane %v514, 6
    %v519 = vrot.slane %v514, 7
    %v522 = vadd.f32 %v142, %v518
    %v523 = vadd.f32 %v147, %v519
    %v524 = vxor.u32 %v522, 2147483648
    %v525 = vxor.u32 %v523, 2147483648
    %v526 = vmul.f32 %v524, 1.442695
    %v527 = vpow.pop %v526
    %v528 = vmul.f32 %v525, 1.442695
    %v529 = vpow.pop %v528
    %v530 = vadd.f32 %v527, 1.0
    %v531 = vadd.f32 %v529, 1.0
    %v532 = vrcp.pop %v530
    %v533 = vmul.f32 1.0, %v532
    %v534 = vrcp.pop %v531
    %v535 = vmul.f32 1.0, %v534
    %v536 = vtanh.pop %v522
    %v537 = vtanh.pop %v523
    %v540 = vrot.slane %v416, 7
    %v541 = vrot.slane %v417, 7
    %v544 = vmul.f32 %v533, %v540
    %v545 = vmul.f32 %v535, %v541
    %548 = vrot.lane.b32.xlu0 %v536, 64
    %v549 = vpop.permute.xlu0 %548
    %550 = vrot.lane.b32.xlu0 %v537, 64
    %v551 = vpop.permute.xlu0 %550
    %v554 = vmul.f32 %v533, %v549
    %v555 = vmul.f32 %v535, %v551
    %558 = vrot.lane.b32.xlu0 %v554, 32
    %v559 = vpop.permute.xlu0 %558
    %560 = vrot.lane.b32.xlu0 %v555, 32
    %v561 = vpop.permute.xlu0 %560
    %v564 = vadd.f32 %v544, %v559
    %v565 = vadd.f32 %v545, %v561
    %v566 = vtanh.pop %v564
    %v567 = vtanh.pop %v565
    %570 = vrot.lane.b32.xlu0 %v566, 64
    %v571 = vpop.permute.xlu0 %570
    %572 = vrot.lane.b32.xlu0 %v567, 64
    %v573 = vpop.permute.xlu0 %572
    %v576 = vmul.f32 %v533, %v571
    %v577 = vmul.f32 %v535, %v573
    %580 = vrot.lane.b32.xlu0 %v576, 32
    %v581 = vpop.permute.xlu0 %580
    %582 = vrot.lane.b32.xlu0 %v577, 32
    %v583 = vpop.permute.xlu0 %582
    %vm586 = vcmask 256002
    %587 = vst.msk [vmem:[#allocation2] sm:$0x4] %vm586, %v581
    %588 = vst.msk [vmem:[#allocation2 + $0x8] sm:$0x4] %vm586, %v583
    %v589 = vrot.slane %v576, 2
    %v590 = vrot.slane %v577, 1
    %v591 = vsel %vm294, %v590, %v589
    %592 = vrot.lane.b32.xlu0 %v591, 32
    %v593 = vpop.permute.xlu0 %592
    %v594 = vsel %vm154, %v593, 0
    %596 = vmatprep.subr.mxu0 0.0
    %597 = vmatpush1.msra.mxu0 0.0
    %598 = vmatprep.subr.mxu0 0.0
    %599 = vmatpush1.msra.mxu0 0.0
    %600 = vmatprep.subr.mxu0 0.0
    %601 = vmatpush1.msra.mxu0 0.0
    %602 = vmatprep.subr.mxu0 0.0
    %603 = vmatpush1.msra.mxu0 0.0
    %604 = vmatprep.subr.mxu0 0.0
    %605 = vmatpush1.msra.mxu0 0.0
    %606 = vmatprep.subr.mxu0 0.0
    %607 = vmatpush1.msra.mxu0 0.0
    %608 = vmatprep.subr.mxu0 0.0
    %609 = vmatpush1.msra.mxu0 0.0
    %610 = vmatprep.subr.mxu0 0.0
    %611 = vmatpush1.msra.mxu0 0.0
    %612 = vmatprep.subr.mxu0 0.0
    %613 = vmatpush1.msra.mxu0 0.0
    %614 = vmatprep.subr.mxu0 0.0
    %615 = vmatpush1.msra.mxu0 0.0
    %616 = vmatprep.subr.mxu0 0.0
    %617 = vmatpush1.msra.mxu0 0.0
    %618 = vmatprep.subr.mxu0 0.0
    %619 = vmatpush1.msra.mxu0 0.0
    %620 = vmatprep.subr.mxu0 0.0
    %621 = vmatpush1.msra.mxu0 %v153
    %622 = vmatprep.subr.mxu0 0.0
    %623 = vmatpush1.msra.mxu0 %v152
    %624 = vmatprep.subr.mxu0 0.0
    %625 = vmatpush1.msra.mxu0 %v151
    %626 = vmatprep.subr.mxu0 0.0
    %627 = vmatpush1.msra.mxu0 %v150
    %628 = vmatprep.subr.mxu0 0.0
    %629 = vmatpush2.msra.mxu0 0.0
    %630 = vmatprep.subr.mxu0 0.0
    %631 = vmatpush2.msra.mxu0 0.0
    %632 = vmatprep.subr.mxu0 0.0
    %633 = vmatpush2.msra.mxu0 0.0
    %634 = vmatprep.subr.mxu0 0.0
    %635 = vmatpush2.msra.mxu0 0.0
    %636 = vmatprep.subr.mxu0 0.0
    %637 = vmatpush2.msra.mxu0 0.0
    %638 = vmatprep.subr.mxu0 0.0
    %639 = vmatpush2.msra.mxu0 0.0
    %640 = vmatprep.subr.mxu0 0.0
    %641 = vmatpush2.msra.mxu0 0.0
    %642 = vmatprep.subr.mxu0 0.0
    %643 = vmatpush2.msra.mxu0 0.0
    %644 = vmatprep.subr.mxu0 0.0
    %645 = vmatpush2.msra.mxu0 0.0
    %646 = vmatprep.subr.mxu0 0.0
    %647 = vmatpush2.msra.mxu0 0.0
    %648 = vmatprep.subr.mxu0 0.0
    %649 = vmatpush2.msra.mxu0 0.0
    %650 = vmatprep.subr.mxu0 0.0
    %651 = vmatpush2.msra.mxu0 0.0
    %652 = vmatprep.subr.mxu0 0.0
    %653 = vmatpush2.msra.mxu0 0.0
    %654 = vmatprep.subr.mxu0 0.0
    %655 = vmatpush2.msra.mxu0 0.0
    %656 = vmatprep.subr.mxu0 0.0
    %657 = vmatpush2.msra.mxu0 0.0
    %658 = vmatprep.subr.mxu0 0.0
    %659 = vmatpush2.msra.mxu0 0.0
    %660 = vmatprep.mubr.f32.mxu0 0.0
    %661 = vmatmul.mubr.f32.gmra.mxu0 %v594
    %v662 = vpop.f32.mrf.mxu0
    %v663 = vadd.f32 0.0, %v662
    %v664 = vpop.f32.mrf.mxu0
    %665 = vdwg.mxu0
    %v667 = vrot.slane %v663, 5
    %v668 = vrot.slane %v663, 6
    %v671 = vadd.f32 %v142, %v667
    %v672 = vadd.f32 %v147, %v668
    %v673 = vxor.u32 %v671, 2147483648
    %v674 = vxor.u32 %v672, 2147483648
    %v675 = vmul.f32 %v673, 1.442695
    %v676 = vpow.pop %v675
    %v677 = vmul.f32 %v674, 1.442695
    %v678 = vpow.pop %v677
    %v679 = vadd.f32 %v676, 1.0
    %v680 = vadd.f32 %v678, 1.0
    %v681 = vrcp.pop %v679
    %v682 = vmul.f32 1.0, %v681
    %v683 = vrcp.pop %v680
    %v684 = vmul.f32 1.0, %v683
    %v685 = vtanh.pop %v671
    %v686 = vtanh.pop %v672
    %v689 = vrot.slane %v564, 7
    %v690 = vrot.slane %v565, 7
    %v693 = vmul.f32 %v682, %v689
    %v694 = vmul.f32 %v684, %v690
    %697 = vrot.lane.b32.xlu0 %v685, 64
    %v698 = vpop.permute.xlu0 %697
    %699 = vrot.lane.b32.xlu0 %v686, 64
    %v700 = vpop.permute.xlu0 %699
    %v703 = vmul.f32 %v682, %v698
    %v704 = vmul.f32 %v684, %v700
    %707 = vrot.lane.b32.xlu0 %v703, 32
    %v708 = vpop.permute.xlu0 %707
    %709 = vrot.lane.b32.xlu0 %v704, 32
    %v710 = vpop.permute.xlu0 %709
    %v713 = vadd.f32 %v693, %v708
    %v714 = vadd.f32 %v694, %v710
    %v715 = vtanh.pop %v713
    %v716 = vtanh.pop %v714
    %719 = vrot.lane.b32.xlu0 %v715, 64
    %v720 = vpop.permute.xlu0 %719
    %721 = vrot.lane.b32.xlu0 %v716, 64
    %v722 = vpop.permute.xlu0 %721
    %v725 = vmul.f32 %v682, %v720
    %v726 = vmul.f32 %v684, %v722
    %729 = vrot.lane.b32.xlu0 %v725, 32
    %v730 = vpop.permute.xlu0 %729
    %731 = vrot.lane.b32.xlu0 %v726, 32
    %v732 = vpop.permute.xlu0 %731
    %vm735 = vcmask 257027
    %736 = vst.msk [vmem:[#allocation2] sm:$0x8] %vm735, %v730
    %737 = vst.msk [vmem:[#allocation2 + $0x8] sm:$0x8] %vm735, %v732
    %v738 = vrot.slane %v725, 3
    %v739 = vrot.slane %v726, 2
    %v740 = vsel %vm294, %v739, %v738
    %741 = vrot.lane.b32.xlu0 %v740, 32
    %v742 = vpop.permute.xlu0 %741
    %v743 = vsel %vm154, %v742, 0
    %745 = vmatprep.subr.mxu0 0.0
    %746 = vmatpush1.msra.mxu0 0.0
    %747 = vmatprep.subr.mxu0 0.0
    %748 = vmatpush1.msra.mxu0 0.0
    %749 = vmatprep.subr.mxu0 0.0
    %750 = vmatpush1.msra.mxu0 0.0
    %751 = vmatprep.subr.mxu0 0.0
    %752 = vmatpush1.msra.mxu0 0.0
    %753 = vmatprep.subr.mxu0 0.0
    %754 = vmatpush1.msra.mxu0 0.0
    %755 = vmatprep.subr.mxu0 0.0
    %756 = vmatpush1.msra.mxu0 0.0
    %757 = vmatprep.subr.mxu0 0.0
    %758 = vmatpush1.msra.mxu0 0.0
    %759 = vmatprep.subr.mxu0 0.0
    %760 = vmatpush1.msra.mxu0 0.0
    %761 = vmatprep.subr.mxu0 0.0
    %762 = vmatpush1.msra.mxu0 0.0
    %763 = vmatprep.subr.mxu0 0.0
    %764 = vmatpush1.msra.mxu0 0.0
    %765 = vmatprep.subr.mxu0 0.0
    %766 = vmatpush1.msra.mxu0 0.0
    %767 = vmatprep.subr.mxu0 0.0
    %768 = vmatpush1.msra.mxu0 0.0
    %769 = vmatprep.subr.mxu0 0.0
    %770 = vmatpush1.msra.mxu0 %v153
    %771 = vmatprep.subr.mxu0 0.0
    %772 = vmatpush1.msra.mxu0 %v152
    %773 = vmatprep.subr.mxu0 0.0
    %774 = vmatpush1.msra.mxu0 %v151
    %775 = vmatprep.subr.mxu0 0.0
    %776 = vmatpush1.msra.mxu0 %v150
    %777 = vmatprep.subr.mxu0 0.0
    %778 = vmatpush2.msra.mxu0 0.0
    %779 = vmatprep.subr.mxu0 0.0
    %780 = vmatpush2.msra.mxu0 0.0
    %781 = vmatprep.subr.mxu0 0.0
    %782 = vmatpush2.msra.mxu0 0.0
    %783 = vmatprep.subr.mxu0 0.0
    %784 = vmatpush2.msra.mxu0 0.0
    %785 = vmatprep.subr.mxu0 0.0
    %786 = vmatpush2.msra.mxu0 0.0
    %787 = vmatprep.subr.mxu0 0.0
    %788 = vmatpush2.msra.mxu0 0.0
    %789 = vmatprep.subr.mxu0 0.0
    %790 = vmatpush2.msra.mxu0 0.0
    %791 = vmatprep.subr.mxu0 0.0
    %792 = vmatpush2.msra.mxu0 0.0
    %793 = vmatprep.subr.mxu0 0.0
    %794 = vmatpush2.msra.mxu0 0.0
    %795 = vmatprep.subr.mxu0 0.0
    %796 = vmatpush2.msra.mxu0 0.0
    %797 = vmatprep.subr.mxu0 0.0
    %798 = vmatpush2.msra.mxu0 0.0
    %799 = vmatprep.subr.mxu0 0.0
    %800 = vmatpush2.msra.mxu0 0.0
    %801 = vmatprep.subr.mxu0 0.0
    %802 = vmatpush2.msra.mxu0 0.0
    %803 = vmatprep.subr.mxu0 0.0
    %804 = vmatpush2.msra.mxu0 0.0
    %805 = vmatprep.subr.mxu0 0.0
    %806 = vmatpush2.msra.mxu0 0.0
    %807 = vmatprep.subr.mxu0 0.0
    %808 = vmatpush2.msra.mxu0 0.0
    %809 = vmatprep.mubr.f32.mxu0 0.0
    %810 = vmatmul.mubr.f32.gmra.mxu0 %v743
    %v811 = vpop.f32.mrf.mxu0
    %v812 = vadd.f32 0.0, %v811
    %v813 = vpop.f32.mrf.mxu0
    %814 = vdwg.mxu0
    %v816 = vrot.slane %v812, 4
    %v817 = vrot.slane %v812, 5
    %v820 = vadd.f32 %v142, %v816
    %v821 = vadd.f32 %v147, %v817
    %v822 = vxor.u32 %v820, 2147483648
    %v823 = vxor.u32 %v821, 2147483648
    %v824 = vmul.f32 %v822, 1.442695
    %v825 = vpow.pop %v824
    %v826 = vmul.f32 %v823, 1.442695
    %v827 = vpow.pop %v826
    %v828 = vadd.f32 %v825, 1.0
    %v829 = vadd.f32 %v827, 1.0
    %v830 = vrcp.pop %v828
    %v831 = vmul.f32 1.0, %v830
    %v832 = vrcp.pop %v829
    %v833 = vmul.f32 1.0, %v832
    %v834 = vtanh.pop %v820
    %v835 = vtanh.pop %v821
    %v838 = vrot.slane %v713, 7
    %v839 = vrot.slane %v714, 7
    %v842 = vmul.f32 %v831, %v838
    %v843 = vmul.f32 %v833, %v839
    %846 = vrot.lane.b32.xlu0 %v834, 64
    %v847 = vpop.permute.xlu0 %846
    %848 = vrot.lane.b32.xlu0 %v835, 64
    %v849 = vpop.permute.xlu0 %848
    %v852 = vmul.f32 %v831, %v847
    %v853 = vmul.f32 %v833, %v849
    %856 = vrot.lane.b32.xlu0 %v852, 32
    %v857 = vpop.permute.xlu0 %856
    %858 = vrot.lane.b32.xlu0 %v853, 32
    %v859 = vpop.permute.xlu0 %858
    %v862 = vadd.f32 %v842, %v857
    %v863 = vadd.f32 %v843, %v859
    %v864 = vtanh.pop %v862
    %v865 = vtanh.pop %v863
    %868 = vrot.lane.b32.xlu0 %v864, 64
    %v869 = vpop.permute.xlu0 %868
    %870 = vrot.lane.b32.xlu0 %v865, 64
    %v871 = vpop.permute.xlu0 %870
    %v874 = vmul.f32 %v831, %v869
    %v875 = vmul.f32 %v833, %v871
    %878 = vrot.lane.b32.xlu0 %v874, 32
    %v879 = vpop.permute.xlu0 %878
    %880 = vrot.lane.b32.xlu0 %v875, 32
    %v881 = vpop.permute.xlu0 %880
    %vm884 = vcmask 258052
    %885 = vst.msk [vmem:[#allocation2] sm:$0x10] %vm884, %v879
    %886 = vst.msk [vmem:[#allocation2 + $0x8] sm:$0x10] %vm884, %v881
    %v887 = vrot.slane %v874, 4
    %v888 = vrot.slane %v875, 3
    %v889 = vsel %vm294, %v888, %v887
    %890 = vrot.lane.b32.xlu0 %v889, 32
    %v891 = vpop.permute.xlu0 %890
    %v892 = vsel %vm154, %v891, 0
    %894 = vmatprep.subr.mxu0 0.0
    %895 = vmatpush1.msra.mxu0 0.0
    %896 = vmatprep.subr.mxu0 0.0
    %897 = vmatpush1.msra.mxu0 0.0
    %898 = vmatprep.subr.mxu0 0.0
    %899 = vmatpush1.msra.mxu0 0.0
    %900 = vmatprep.subr.mxu0 0.0
    %901 = vmatpush1.msra.mxu0 0.0
    %902 = vmatprep.subr.mxu0 0.0
    %903 = vmatpush1.msra.mxu0 0.0
    %904 = vmatprep.subr.mxu0 0.0
    %905 = vmatpush1.msra.mxu0 0.0
    %906 = vmatprep.subr.mxu0 0.0
    %907 = vmatpush1.msra.mxu0 0.0
    %908 = vmatprep.subr.mxu0 0.0
    %909 = vmatpush1.msra.mxu0 0.0
    %910 = vmatprep.subr.mxu0 0.0
    %911 = vmatpush1.msra.mxu0 0.0
    %912 = vmatprep.subr.mxu0 0.0
    %913 = vmatpush1.msra.mxu0 0.0
    %914 = vmatprep.subr.mxu0 0.0
    %915 = vmatpush1.msra.mxu0 0.0
    %916 = vmatprep.subr.mxu0 0.0
    %917 = vmatpush1.msra.mxu0 0.0
    %918 = vmatprep.subr.mxu0 0.0
    %919 = vmatpush1.msra.mxu0 %v153
    %920 = vmatprep.subr.mxu0 0.0
    %921 = vmatpush1.msra.mxu0 %v152
    %922 = vmatprep.subr.mxu0 0.0
    %923 = vmatpush1.msra.mxu0 %v151
    %924 = vmatprep.subr.mxu0 0.0
    %925 = vmatpush1.msra.mxu0 %v150
    %926 = vmatprep.subr.mxu0 0.0
    %927 = vmatpush2.msra.mxu0 0.0
    %928 = vmatprep.subr.mxu0 0.0
    %929 = vmatpush2.msra.mxu0 0.0
    %930 = vmatprep.subr.mxu0 0.0
    %931 = vmatpush2.msra.mxu0 0.0
    %932 = vmatprep.subr.mxu0 0.0
    %933 = vmatpush2.msra.mxu0 0.0
    %934 = vmatprep.subr.mxu0 0.0
    %935 = vmatpush2.msra.mxu0 0.0
    %936 = vmatprep.subr.mxu0 0.0
    %937 = vmatpush2.msra.mxu0 0.0
    %938 = vmatprep.subr.mxu0 0.0
    %939 = vmatpush2.msra.mxu0 0.0
    %940 = vmatprep.subr.mxu0 0.0
    %941 = vmatpush2.msra.mxu0 0.0
    %942 = vmatprep.subr.mxu0 0.0
    %943 = vmatpush2.msra.mxu0 0.0
    %944 = vmatprep.subr.mxu0 0.0
    %945 = vmatpush2.msra.mxu0 0.0
    %946 = vmatprep.subr.mxu0 0.0
    %947 = vmatpush2.msra.mxu0 0.0
    %948 = vmatprep.subr.mxu0 0.0
    %949 = vmatpush2.msra.mxu0 0.0
    %950 = vmatprep.subr.mxu0 0.0
    %951 = vmatpush2.msra.mxu0 0.0
    %952 = vmatprep.subr.mxu0 0.0
    %953 = vmatpush2.msra.mxu0 0.0
    %954 = vmatprep.subr.mxu0 0.0
    %955 = vmatpush2.msra.mxu0 0.0
    %956 = vmatprep.subr.mxu0 0.0
    %957 = vmatpush2.msra.mxu0 0.0
    %958 = vmatprep.mubr.f32.mxu0 0.0
    %959 = vmatmul.mubr.f32.gmra.mxu0 %v892
    %v960 = vpop.f32.mrf.mxu0
    %v961 = vadd.f32 0.0, %v960
    %v962 = vpop.f32.mrf.mxu0
    %963 = vdwg.mxu0
    %v965 = vrot.slane %v961, 3
    %v966 = vrot.slane %v961, 4
    %v969 = vadd.f32 %v142, %v965
    %v970 = vadd.f32 %v147, %v966
    %v971 = vxor.u32 %v969, 2147483648
    %v972 = vxor.u32 %v970, 2147483648
    %v973 = vmul.f32 %v971, 1.442695
    %v974 = vpow.pop %v973
    %v975 = vmul.f32 %v972, 1.442695
    %v976 = vpow.pop %v975
    %v977 = vadd.f32 %v974, 1.0
    %v978 = vadd.f32 %v976, 1.0
    %v979 = vrcp.pop %v977
    %v980 = vmul.f32 1.0, %v979
    %v981 = vrcp.pop %v978
    %v982 = vmul.f32 1.0, %v981
    %v983 = vtanh.pop %v969
    %v984 = vtanh.pop %v970
    %v987 = vrot.slane %v862, 7
    %v988 = vrot.slane %v863, 7
    %v991 = vmul.f32 %v980, %v987
    %v992 = vmul.f32 %v982, %v988
    %995 = vrot.lane.b32.xlu0 %v983, 64
    %v996 = vpop.permute.xlu0 %995
    %997 = vrot.lane.b32.xlu0 %v984, 64
    %v998 = vpop.permute.xlu0 %997
    %v1001 = vmul.f32 %v980, %v996
    %v1002 = vmul.f32 %v982, %v998
    %1005 = vrot.lane.b32.xlu0 %v1001, 32
    %v1006 = vpop.permute.xlu0 %1005
    %1007 = vrot.lane.b32.xlu0 %v1002, 32
    %v1008 = vpop.permute.xlu0 %1007
    %v1011 = vadd.f32 %v991, %v1006
    %v1012 = vadd.f32 %v992, %v1008
    %v1013 = vtanh.pop %v1011
    %v1014 = vtanh.pop %v1012
    %1017 = vrot.lane.b32.xlu0 %v1013, 64
    %v1018 = vpop.permute.xlu0 %1017
    %1019 = vrot.lane.b32.xlu0 %v1014, 64
    %v1020 = vpop.permute.xlu0 %1019
    %v1023 = vmul.f32 %v980, %v1018
    %v1024 = vmul.f32 %v982, %v1020
    %1027 = vrot.lane.b32.xlu0 %v1023, 32
    %v1028 = vpop.permute.xlu0 %1027
    %1029 = vrot.lane.b32.xlu0 %v1024, 32
    %v1030 = vpop.permute.xlu0 %1029
    %vm1033 = vcmask 259077
    %1034 = vst.msk [vmem:[#allocation2] sm:$0x20] %vm1033, %v1028
    %1035 = vst.msk [vmem:[#allocation2 + $0x8] sm:$0x20] %vm1033, %v1030
    %v1036 = vrot.slane %v1023, 5
    %v1037 = vrot.slane %v1024, 4
    %v1038 = vsel %vm294, %v1037, %v1036
    %1039 = vrot.lane.b32.xlu0 %v1038, 32
    %v1040 = vpop.permute.xlu0 %1039
    %v1041 = vsel %vm154, %v1040, 0
    %1043 = vmatprep.subr.mxu0 0.0
    %1044 = vmatpush1.msra.mxu0 0.0
    %1045 = vmatprep.subr.mxu0 0.0
    %1046 = vmatpush1.msra.mxu0 0.0
    %1047 = vmatprep.subr.mxu0 0.0
    %1048 = vmatpush1.msra.mxu0 0.0
    %1049 = vmatprep.subr.mxu0 0.0
    %1050 = vmatpush1.msra.mxu0 0.0
    %1051 = vmatprep.subr.mxu0 0.0
    %1052 = vmatpush1.msra.mxu0 0.0
    %1053 = vmatprep.subr.mxu0 0.0
    %1054 = vmatpush1.msra.mxu0 0.0
    %1055 = vmatprep.subr.mxu0 0.0
    %1056 = vmatpush1.msra.mxu0 0.0
    %1057 = vmatprep.subr.mxu0 0.0
    %1058 = vmatpush1.msra.mxu0 0.0
    %1059 = vmatprep.subr.mxu0 0.0
    %1060 = vmatpush1.msra.mxu0 0.0
    %1061 = vmatprep.subr.mxu0 0.0
    %1062 = vmatpush1.msra.mxu0 0.0
    %1063 = vmatprep.subr.mxu0 0.0
    %1064 = vmatpush1.msra.mxu0 0.0
    %1065 = vmatprep.subr.mxu0 0.0
    %1066 = vmatpush1.msra.mxu0 0.0
    %1067 = vmatprep.subr.mxu0 0.0
    %1068 = vmatpush1.msra.mxu0 %v153
    %1069 = vmatprep.subr.mxu0 0.0
    %1070 = vmatpush1.msra.mxu0 %v152
    %1071 = vmatprep.subr.mxu0 0.0
    %1072 = vmatpush1.msra.mxu0 %v151
    %1073 = vmatprep.subr.mxu0 0.0
    %1074 = vmatpush1.msra.mxu0 %v150
    %1075 = vmatprep.subr.mxu0 0.0
    %1076 = vmatpush2.msra.mxu0 0.0
    %1077 = vmatprep.subr.mxu0 0.0
    %1078 = vmatpush2.msra.mxu0 0.0
    %1079 = vmatprep.subr.mxu0 0.0
    %1080 = vmatpush2.msra.mxu0 0.0
    %1081 = vmatprep.subr.mxu0 0.0
    %1082 = vmatpush2.msra.mxu0 0.0
    %1083 = vmatprep.subr.mxu0 0.0
    %1084 = vmatpush2.msra.mxu0 0.0
    %1085 = vmatprep.subr.mxu0 0.0
    %1086 = vmatpush2.msra.mxu0 0.0
    %1087 = vmatprep.subr.mxu0 0.0
    %1088 = vmatpush2.msra.mxu0 0.0
    %1089 = vmatprep.subr.mxu0 0.0
    %1090 = vmatpush2.msra.mxu0 0.0
    %1091 = vmatprep.subr.mxu0 0.0
    %1092 = vmatpush2.msra.mxu0 0.0
    %1093 = vmatprep.subr.mxu0 0.0
    %1094 = vmatpush2.msra.mxu0 0.0
    %1095 = vmatprep.subr.mxu0 0.0
    %1096 = vmatpush2.msra.mxu0 0.0
    %1097 = vmatprep.subr.mxu0 0.0
    %1098 = vmatpush2.msra.mxu0 0.0
    %1099 = vmatprep.subr.mxu0 0.0
    %1100 = vmatpush2.msra.mxu0 0.0
    %1101 = vmatprep.subr.mxu0 0.0
    %1102 = vmatpush2.msra.mxu0 0.0
    %1103 = vmatprep.subr.mxu0 0.0
    %1104 = vmatpush2.msra.mxu0 0.0
    %1105 = vmatprep.subr.mxu0 0.0
    %1106 = vmatpush2.msra.mxu0 0.0
    %1107 = vmatprep.mubr.f32.mxu0 0.0
    %1108 = vmatmul.mubr.f32.gmra.mxu0 %v1041
    %v1109 = vpop.f32.mrf.mxu0
    %v1110 = vadd.f32 0.0, %v1109
    %v1111 = vpop.f32.mrf.mxu0
    %1112 = vdwg.mxu0
    %v1114 = vrot.slane %v1110, 2
    %v1115 = vrot.slane %v1110, 3
    %v1118 = vadd.f32 %v142, %v1114
    %v1119 = vadd.f32 %v147, %v1115
    %v1120 = vxor.u32 %v1118, 2147483648
    %v1121 = vxor.u32 %v1119, 2147483648
    %v1122 = vmul.f32 %v1120, 1.442695
    %v1123 = vpow.pop %v1122
    %v1124 = vmul.f32 %v1121, 1.442695
    %v1125 = vpow.pop %v1124
    %v1126 = vadd.f32 %v1123, 1.0
    %v1127 = vadd.f32 %v1125, 1.0
    %v1128 = vrcp.pop %v1126
    %v1129 = vmul.f32 1.0, %v1128
    %v1130 = vrcp.pop %v1127
    %v1131 = vmul.f32 1.0, %v1130
    %v1132 = vtanh.pop %v1118
    %v1133 = vtanh.pop %v1119
    %v1136 = vrot.slane %v1011, 7
    %v1137 = vrot.slane %v1012, 7
    %v1140 = vmul.f32 %v1129, %v1136
    %v1141 = vmul.f32 %v1131, %v1137
    %1144 = vrot.lane.b32.xlu0 %v1132, 64
    %v1145 = vpop.permute.xlu0 %1144
    %1146 = vrot.lane.b32.xlu0 %v1133, 64
    %v1147 = vpop.permute.xlu0 %1146
    %v1150 = vmul.f32 %v1129, %v1145
    %v1151 = vmul.f32 %v1131, %v1147
    %1154 = vrot.lane.b32.xlu0 %v1150, 32
    %v1155 = vpop.permute.xlu0 %1154
    %1156 = vrot.lane.b32.xlu0 %v1151, 32
    %v1157 = vpop.permute.xlu0 %1156
    %v1160 = vadd.f32 %v1140, %v1155
    %v1161 = vadd.f32 %v1141, %v1157
    %v1162 = vtanh.pop %v1160
    %v1163 = vtanh.pop %v1161
    %1166 = vrot.lane.b32.xlu0 %v1162, 64
    %v1167 = vpop.permute.xlu0 %1166
    %1168 = vrot.lane.b32.xlu0 %v1163, 64
    %v1169 = vpop.permute.xlu0 %1168
    %v1172 = vmul.f32 %v1129, %v1167
    %v1173 = vmul.f32 %v1131, %v1169
    %1176 = vrot.lane.b32.xlu0 %v1172, 32
    %v1177 = vpop.permute.xlu0 %1176
    %1178 = vrot.lane.b32.xlu0 %v1173, 32
    %v1179 = vpop.permute.xlu0 %1178
    %vm1182 = vcmask 260102
    %1183 = vst.msk [vmem:[#allocation2] sm:$0x40] %vm1182, %v1177
    %1184 = vst.msk [vmem:[#allocation2 + $0x8] sm:$0x40] %vm1182, %v1179
    %v1185 = vrot.slane %v1172, 6
    %v1186 = vrot.slane %v1173, 5
    %v1187 = vsel %vm294, %v1186, %v1185
    %1188 = vrot.lane.b32.xlu0 %v1187, 32
    %v1189 = vpop.permute.xlu0 %1188
    %v1190 = vsel %vm154, %v1189, 0
    %1192 = vmatprep.subr.mxu0 0.0
    %1193 = vmatpush1.msra.mxu0 0.0
    %1194 = vmatprep.subr.mxu0 0.0
    %1195 = vmatpush1.msra.mxu0 0.0
    %1196 = vmatprep.subr.mxu0 0.0
    %1197 = vmatpush1.msra.mxu0 0.0
    %1198 = vmatprep.subr.mxu0 0.0
    %1199 = vmatpush1.msra.mxu0 0.0
    %1200 = vmatprep.subr.mxu0 0.0
    %1201 = vmatpush1.msra.mxu0 0.0
    %1202 = vmatprep.subr.mxu0 0.0
    %1203 = vmatpush1.msra.mxu0 0.0
    %1204 = vmatprep.subr.mxu0 0.0
    %1205 = vmatpush1.msra.mxu0 0.0
    %1206 = vmatprep.subr.mxu0 0.0
    %1207 = vmatpush1.msra.mxu0 0.0
    %1208 = vmatprep.subr.mxu0 0.0
    %1209 = vmatpush1.msra.mxu0 0.0
    %1210 = vmatprep.subr.mxu0 0.0
    %1211 = vmatpush1.msra.mxu0 0.0
    %1212 = vmatprep.subr.mxu0 0.0
    %1213 = vmatpush1.msra.mxu0 0.0
    %1214 = vmatprep.subr.mxu0 0.0
    %1215 = vmatpush1.msra.mxu0 0.0
    %1216 = vmatprep.subr.mxu0 0.0
    %1217 = vmatpush1.msra.mxu0 %v153
    %1218 = vmatprep.subr.mxu0 0.0
    %1219 = vmatpush1.msra.mxu0 %v152
    %1220 = vmatprep.subr.mxu0 0.0
    %1221 = vmatpush1.msra.mxu0 %v151
    %1222 = vmatprep.subr.mxu0 0.0
    %1223 = vmatpush1.msra.mxu0 %v150
    %1224 = vmatprep.subr.mxu0 0.0
    %1225 = vmatpush2.msra.mxu0 0.0
    %1226 = vmatprep.subr.mxu0 0.0
    %1227 = vmatpush2.msra.mxu0 0.0
    %1228 = vmatprep.subr.mxu0 0.0
    %1229 = vmatpush2.msra.mxu0 0.0
    %1230 = vmatprep.subr.mxu0 0.0
    %1231 = vmatpush2.msra.mxu0 0.0
    %1232 = vmatprep.subr.mxu0 0.0
    %1233 = vmatpush2.msra.mxu0 0.0
    %1234 = vmatprep.subr.mxu0 0.0
    %1235 = vmatpush2.msra.mxu0 0.0
    %1236 = vmatprep.subr.mxu0 0.0
    %1237 = vmatpush2.msra.mxu0 0.0
    %1238 = vmatprep.subr.mxu0 0.0
    %1239 = vmatpush2.msra.mxu0 0.0
    %1240 = vmatprep.subr.mxu0 0.0
    %1241 = vmatpush2.msra.mxu0 0.0
    %1242 = vmatprep.subr.mxu0 0.0
    %1243 = vmatpush2.msra.mxu0 0.0
    %1244 = vmatprep.subr.mxu0 0.0
    %1245 = vmatpush2.msra.mxu0 0.0
    %1246 = vmatprep.subr.mxu0 0.0
    %1247 = vmatpush2.msra.mxu0 0.0
    %1248 = vmatprep.subr.mxu0 0.0
    %1249 = vmatpush2.msra.mxu0 0.0
    %1250 = vmatprep.subr.mxu0 0.0
    %1251 = vmatpush2.msra.mxu0 0.0
    %1252 = vmatprep.subr.mxu0 0.0
    %1253 = vmatpush2.msra.mxu0 0.0
    %1254 = vmatprep.subr.mxu0 0.0
    %1255 = vmatpush2.msra.mxu0 0.0
    %1256 = vmatprep.mubr.f32.mxu0 0.0
    %1257 = vmatmul.mubr.f32.gmra.mxu0 %v1190
    %v1258 = vpop.f32.mrf.mxu0
    %v1259 = vadd.f32 0.0, %v1258
    %v1260 = vpop.f32.mrf.mxu0
    %1261 = vdwg.mxu0
    %v1263 = vrot.slane %v1259, 1
    %v1264 = vrot.slane %v1259, 2
    %v1267 = vadd.f32 %v142, %v1263
    %v1268 = vadd.f32 %v147, %v1264
    %v1269 = vxor.u32 %v1267, 2147483648
    %v1270 = vxor.u32 %v1268, 2147483648
    %v1271 = vmul.f32 %v1269, 1.442695
    %v1272 = vpow.pop %v1271
    %v1273 = vmul.f32 %v1270, 1.442695
    %v1274 = vpow.pop %v1273
    %v1275 = vadd.f32 %v1272, 1.0
    %v1276 = vadd.f32 %v1274, 1.0
    %v1277 = vrcp.pop %v1275
    %v1278 = vmul.f32 1.0, %v1277
    %v1279 = vrcp.pop %v1276
    %v1280 = vmul.f32 1.0, %v1279
    %v1281 = vtanh.pop %v1267
    %v1282 = vtanh.pop %v1268
    %v1285 = vrot.slane %v1160, 7
    %v1286 = vrot.slane %v1161, 7
    %v1289 = vmul.f32 %v1278, %v1285
    %v1290 = vmul.f32 %v1280, %v1286
    %1293 = vrot.lane.b32.xlu0 %v1281, 64
    %v1294 = vpop.permute.xlu0 %1293
    %1295 = vrot.lane.b32.xlu0 %v1282, 64
    %v1296 = vpop.permute.xlu0 %1295
    %v1299 = vmul.f32 %v1278, %v1294
    %v1300 = vmul.f32 %v1280, %v1296
    %1303 = vrot.lane.b32.xlu0 %v1299, 32
    %v1304 = vpop.permute.xlu0 %1303
    %1305 = vrot.lane.b32.xlu0 %v1300, 32
    %v1306 = vpop.permute.xlu0 %1305
    %v1309 = vadd.f32 %v1289, %v1304
    %v1310 = vadd.f32 %v1290, %v1306
    %v1311 = vtanh.pop %v1309
    %v1312 = vtanh.pop %v1310
    %1315 = vrot.lane.b32.xlu0 %v1311, 64
    %v1316 = vpop.permute.xlu0 %1315
    %1317 = vrot.lane.b32.xlu0 %v1312, 64
    %v1318 = vpop.permute.xlu0 %1317
    %v1321 = vmul.f32 %v1278, %v1316
    %v1322 = vmul.f32 %v1280, %v1318
    %1325 = vrot.lane.b32.xlu0 %v1321, 32
    %v1326 = vpop.permute.xlu0 %1325
    %1327 = vrot.lane.b32.xlu0 %v1322, 32
    %v1328 = vpop.permute.xlu0 %1327
    %vm1331 = vcmask 261127
    %1332 = vst.msk [vmem:[#allocation2] sm:$0x80] %vm1331, %v1326
    %1333 = vst.msk [vmem:[#allocation2 + $0x8] sm:$0x80] %vm1331, %v1328
    %v1334 = vld [vmem:[#allocation2] sm:$0xff]
    %v1335 = vld [vmem:[#allocation2 + $0x8] sm:$0xff]
    %v1336 = vld [vmem:[%s4] sm:$0xff]
    %v1337 = vld [vmem:[%s4 + $0x8] sm:$0xff]
    %v1338 = vld [vmem:[%s4 + $0x10] sm:$0xff]
    %v1339 = vld [vmem:[%s4 + $0x18] sm:$0xff]
    %v1340 = vld [vmem:[%s6] sm:$0x1]
    %v1342 = vlaneseq
    %v1343 = vshrl.u32 %v1342, 7
    %v1344 = vsub.s32 0, %v1343
    %v1345 = vrot.slane %v1340, %v1344
    %v1348 = vsel %vm154, %v1334, 0
    %v1351 = vsel %vm154, %v1335, 0
    %1353 = vmatprep.subr.mxu0 0.0
    %1354 = vmatpush1.msra.mxu0 0.0
    %1355 = vmatprep.subr.mxu0 0.0
    %1356 = vmatpush1.msra.mxu0 0.0
    %1357 = vmatprep.subr.mxu0 0.0
    %1358 = vmatpush1.msra.mxu0 0.0
    %1359 = vmatprep.subr.mxu0 0.0
    %1360 = vmatpush1.msra.mxu0 0.0
    %1361 = vmatprep.subr.mxu0 0.0
    %1362 = vmatpush1.msra.mxu0 0.0
    %1363 = vmatprep.subr.mxu0 0.0
    %1364 = vmatpush1.msra.mxu0 0.0
    %1365 = vmatprep.subr.mxu0 0.0
    %1366 = vmatpush1.msra.mxu0 0.0
    %1367 = vmatprep.subr.mxu0 0.0
    %1368 = vmatpush1.msra.mxu0 0.0
    %1369 = vmatprep.subr.mxu0 0.0
    %1370 = vmatpush1.msra.mxu0 0.0
    %1371 = vmatprep.subr.mxu0 0.0
    %1372 = vmatpush1.msra.mxu0 0.0
    %1373 = vmatprep.subr.mxu0 0.0
    %1374 = vmatpush1.msra.mxu0 0.0
    %1375 = vmatprep.subr.mxu0 0.0
    %1376 = vmatpush1.msra.mxu0 0.0
    %1377 = vmatprep.subr.mxu0 0.0
    %1378 = vmatpush1.msra.mxu0 %v1339
    %1379 = vmatprep.subr.mxu0 0.0
    %1380 = vmatpush1.msra.mxu0 %v1338
    %1381 = vmatprep.subr.mxu0 0.0
    %1382 = vmatpush1.msra.mxu0 %v1337
    %1383 = vmatprep.subr.mxu0 0.0
    %1384 = vmatpush1.msra.mxu0 %v1336
    %1385 = vmatprep.subr.mxu0 0.0
    %1386 = vmatpush2.msra.mxu0 0.0
    %1387 = vmatprep.subr.mxu0 0.0
    %1388 = vmatpush2.msra.mxu0 0.0
    %1389 = vmatprep.subr.mxu0 0.0
    %1390 = vmatpush2.msra.mxu0 0.0
    %1391 = vmatprep.subr.mxu0 0.0
    %1392 = vmatpush2.msra.mxu0 0.0
    %1393 = vmatprep.subr.mxu0 0.0
    %1394 = vmatpush2.msra.mxu0 0.0
    %1395 = vmatprep.subr.mxu0 0.0
    %1396 = vmatpush2.msra.mxu0 0.0
    %1397 = vmatprep.subr.mxu0 0.0
    %1398 = vmatpush2.msra.mxu0 0.0
    %1399 = vmatprep.subr.mxu0 0.0
    %1400 = vmatpush2.msra.mxu0 0.0
    %1401 = vmatprep.subr.mxu0 0.0
    %1402 = vmatpush2.msra.mxu0 0.0
    %1403 = vmatprep.subr.mxu0 0.0
    %1404 = vmatpush2.msra.mxu0 0.0
    %1405 = vmatprep.subr.mxu0 0.0
    %1406 = vmatpush2.msra.mxu0 0.0
    %1407 = vmatprep.subr.mxu0 0.0
    %1408 = vmatpush2.msra.mxu0 0.0
    %1409 = vmatprep.subr.mxu0 0.0
    %1410 = vmatpush2.msra.mxu0 0.0
    %1411 = vmatprep.subr.mxu0 0.0
    %1412 = vmatpush2.msra.mxu0 0.0
    %1413 = vmatprep.subr.mxu0 0.0
    %1414 = vmatpush2.msra.mxu0 0.0
    %1415 = vmatprep.subr.mxu0 0.0
    %1416 = vmatpush2.msra.mxu0 0.0
    %1417 = vmatprep.mubr.f32.mxu0 0.0
    %1418 = vmatmul.mubr.f32.gmra.mxu0 %v1348
    %v1419 = vpop.f32.mrf.mxu0
    %v1420 = vadd.f32 %v1345, %v1419
    %v1421 = vpop.f32.mrf.mxu0
    %1422 = vmatprep.mubr.f32.mxu0 0.0
    %1423 = vmatmul.mubr.f32.gmra.mxu0 %v1351
    %v1424 = vpop.f32.mrf.mxu0
    %v1425 = vadd.f32 %v1345, %v1424
    %v1426 = vpop.f32.mrf.mxu0
    %1427 = vdwg.mxu0
    %v1428 = vld [vmem:[%s5] sm:$0xff]
    %v1429 = vld [vmem:[%s5 + $0x8] sm:$0xff]
    %v1430 = vld [vmem:[%s5 + $0x10] sm:$0xff]
    %v1431 = vld [vmem:[%s5 + $0x18] sm:$0xff]
    %1432 = vmatprep.subr.mxu0 0.0
    %1433 = vmatpush1.msra.mxu0 0.0
    %1434 = vmatprep.subr.mxu0 0.0
    %1435 = vmatpush1.msra.mxu0 0.0
    %1436 = vmatprep.subr.mxu0 0.0
    %1437 = vmatpush1.msra.mxu0 0.0
    %1438 = vmatprep.subr.mxu0 0.0
    %1439 = vmatpush1.msra.mxu0 0.0
    %1440 = vmatprep.subr.mxu0 0.0
    %1441 = vmatpush1.msra.mxu0 0.0
    %1442 = vmatprep.subr.mxu0 0.0
    %1443 = vmatpush1.msra.mxu0 0.0
    %1444 = vmatprep.subr.mxu0 0.0
    %1445 = vmatpush1.msra.mxu0 0.0
    %1446 = vmatprep.subr.mxu0 0.0
    %1447 = vmatpush1.msra.mxu0 0.0
    %1448 = vmatprep.subr.mxu0 0.0
    %1449 = vmatpush1.msra.mxu0 0.0
    %1450 = vmatprep.subr.mxu0 0.0
    %1451 = vmatpush1.msra.mxu0 0.0
    %1452 = vmatprep.subr.mxu0 0.0
    %1453 = vmatpush1.msra.mxu0 0.0
    %1454 = vmatprep.subr.mxu0 0.0
    %1455 = vmatpush1.msra.mxu0 0.0
    %1456 = vmatprep.subr.mxu0 0.0
    %1457 = vmatpush1.msra.mxu0 %v1431
    %1458 = vmatprep.subr.mxu0 0.0
    %1459 = vmatpush1.msra.mxu0 %v1430
    %1460 = vmatprep.subr.mxu0 0.0
    %1461 = vmatpush1.msra.mxu0 %v1429
    %1462 = vmatprep.subr.mxu0 0.0
    %1463 = vmatpush1.msra.mxu0 %v1428
    %1464 = vmatprep.subr.mxu0 0.0
    %1465 = vmatpush2.msra.mxu0 0.0
    %1466 = vmatprep.subr.mxu0 0.0
    %1467 = vmatpush2.msra.mxu0 0.0
    %1468 = vmatprep.subr.mxu0 0.0
    %1469 = vmatpush2.msra.mxu0 0.0
    %1470 = vmatprep.subr.mxu0 0.0
    %1471 = vmatpush2.msra.mxu0 0.0
    %1472 = vmatprep.subr.mxu0 0.0
    %1473 = vmatpush2.msra.mxu0 0.0
    %1474 = vmatprep.subr.mxu0 0.0
    %1475 = vmatpush2.msra.mxu0 0.0
    %1476 = vmatprep.subr.mxu0 0.0
    %1477 = vmatpush2.msra.mxu0 0.0
    %1478 = vmatprep.subr.mxu0 0.0
    %1479 = vmatpush2.msra.mxu0 0.0
    %1480 = vmatprep.subr.mxu0 0.0
    %1481 = vmatpush2.msra.mxu0 0.0
    %1482 = vmatprep.subr.mxu0 0.0
    %1483 = vmatpush2.msra.mxu0 0.0
    %1484 = vmatprep.subr.mxu0 0.0
    %1485 = vmatpush2.msra.mxu0 0.0
    %1486 = vmatprep.subr.mxu0 0.0
    %1487 = vmatpush2.msra.mxu0 0.0
    %1488 = vmatprep.subr.mxu0 0.0
    %1489 = vmatpush2.msra.mxu0 0.0
    %1490 = vmatprep.subr.mxu0 0.0
    %1491 = vmatpush2.msra.mxu0 0.0
    %1492 = vmatprep.subr.mxu0 0.0
    %1493 = vmatpush2.msra.mxu0 0.0
    %1494 = vmatprep.subr.mxu0 0.0
    %1495 = vmatpush2.msra.mxu0 0.0
    %1496 = vmatprep.mubr.f32.mxu0 0.0
    %1497 = vmatmul.mubr.f32.gmra.mxu0 %v156
    %v1498 = vpop.f32.mrf.mxu0
    %v1499 = vadd.f32 0.0, %v1498
    %v1500 = vpop.f32.mrf.mxu0
    %1501 = vdwg.mxu0
    %v1503 = vrot.slane %v1499, 1
    %v1506 = vadd.f32 %v1420, %v1499
    %v1507 = vadd.f32 %v1425, %v1503
    %v1508 = vxor.u32 %v1506, 2147483648
    %v1509 = vxor.u32 %v1507, 2147483648
    %v1510 = vmul.f32 %v1508, 1.442695
    %v1511 = vpow.pop %v1510
    %v1512 = vmul.f32 %v1509, 1.442695
    %v1513 = vpow.pop %v1512
    %v1514 = vadd.f32 %v1511, 1.0
    %v1515 = vadd.f32 %v1513, 1.0
    %v1516 = vrcp.pop %v1514
    %v1517 = vmul.f32 1.0, %v1516
    %v1518 = vrcp.pop %v1515
    %v1519 = vmul.f32 1.0, %v1518
    %v1520 = vtanh.pop %v1506
    %v1521 = vtanh.pop %v1507
    %v1522 = vmul.f32 %v1517, 0.0
    %v1523 = vmul.f32 %v1519, 0.0
    %1526 = vrot.lane.b32.xlu0 %v1520, 64
    %v1527 = vpop.permute.xlu0 %1526
    %1528 = vrot.lane.b32.xlu0 %v1521, 64
    %v1529 = vpop.permute.xlu0 %1528
    %v1532 = vmul.f32 %v1517, %v1527
    %v1533 = vmul.f32 %v1519, %v1529
    %1536 = vrot.lane.b32.xlu0 %v1532, 32
    %v1537 = vpop.permute.xlu0 %1536
    %1538 = vrot.lane.b32.xlu0 %v1533, 32
    %v1539 = vpop.permute.xlu0 %1538
    %v1542 = vadd.f32 %v1522, %v1537
    %v1543 = vadd.f32 %v1523, %v1539
    %v1544 = vtanh.pop %v1542
    %v1545 = vtanh.pop %v1543
    %1548 = vrot.lane.b32.xlu0 %v1544, 64
    %v1549 = vpop.permute.xlu0 %1548
    %1550 = vrot.lane.b32.xlu0 %v1545, 64
    %v1551 = vpop.permute.xlu0 %1550
    %v1554 = vmul.f32 %v1517, %v1549
    %v1555 = vmul.f32 %v1519, %v1551
    %1558 = vrot.lane.b32.xlu0 %v1554, 32
    %v1559 = vpop.permute.xlu0 %1558
    %1560 = vrot.lane.b32.xlu0 %v1555, 32
    %v1561 = vpop.permute.xlu0 %1560
    %1564 = vst.msk [vmem:[#allocation3] sm:$0x1] %vm290, %v1559
    %1565 = vst.msk [vmem:[#allocation3 + $0x8] sm:$0x1] %vm290, %v1561
    %v1566 = vrot.slane %v1555, 7
    %v1567 = vsel %vm294, %v1566, %v1554
    %1568 = vrot.lane.b32.xlu0 %v1567, 32
    %v1569 = vpop.permute.xlu0 %1568
    %v1570 = vsel %vm154, %v1569, 0
    %1572 = vmatprep.subr.mxu0 0.0
    %1573 = vmatpush1.msra.mxu0 0.0
    %1574 = vmatprep.subr.mxu0 0.0
    %1575 = vmatpush1.msra.mxu0 0.0
    %1576 = vmatprep.subr.mxu0 0.0
    %1577 = vmatpush1.msra.mxu0 0.0
    %1578 = vmatprep.subr.mxu0 0.0
    %1579 = vmatpush1.msra.mxu0 0.0
    %1580 = vmatprep.subr.mxu0 0.0
    %1581 = vmatpush1.msra.mxu0 0.0
    %1582 = vmatprep.subr.mxu0 0.0
    %1583 = vmatpush1.msra.mxu0 0.0
    %1584 = vmatprep.subr.mxu0 0.0
    %1585 = vmatpush1.msra.mxu0 0.0
    %1586 = vmatprep.subr.mxu0 0.0
    %1587 = vmatpush1.msra.mxu0 0.0
    %1588 = vmatprep.subr.mxu0 0.0
    %1589 = vmatpush1.msra.mxu0 0.0
    %1590 = vmatprep.subr.mxu0 0.0
    %1591 = vmatpush1.msra.mxu0 0.0
    %1592 = vmatprep.subr.mxu0 0.0
    %1593 = vmatpush1.msra.mxu0 0.0
    %1594 = vmatprep.subr.mxu0 0.0
    %1595 = vmatpush1.msra.mxu0 0.0
    %1596 = vmatprep.subr.mxu0 0.0
    %1597 = vmatpush1.msra.mxu0 %v1431
    %1598 = vmatprep.subr.mxu0 0.0
    %1599 = vmatpush1.msra.mxu0 %v1430
    %1600 = vmatprep.subr.mxu0 0.0
    %1601 = vmatpush1.msra.mxu0 %v1429
    %1602 = vmatprep.subr.mxu0 0.0
    %1603 = vmatpush1.msra.mxu0 %v1428
    %1604 = vmatprep.subr.mxu0 0.0
    %1605 = vmatpush2.msra.mxu0 0.0
    %1606 = vmatprep.subr.mxu0 0.0
    %1607 = vmatpush2.msra.mxu0 0.0
    %1608 = vmatprep.subr.mxu0 0.0
    %1609 = vmatpush2.msra.mxu0 0.0
    %1610 = vmatprep.subr.mxu0 0.0
    %1611 = vmatpush2.msra.mxu0 0.0
    %1612 = vmatprep.subr.mxu0 0.0
    %1613 = vmatpush2.msra.mxu0 0.0
    %1614 = vmatprep.subr.mxu0 0.0
    %1615 = vmatpush2.msra.mxu0 0.0
    %1616 = vmatprep.subr.mxu0 0.0
    %1617 = vmatpush2.msra.mxu0 0.0
    %1618 = vmatprep.subr.mxu0 0.0
    %1619 = vmatpush2.msra.mxu0 0.0
    %1620 = vmatprep.subr.mxu0 0.0
    %1621 = vmatpush2.msra.mxu0 0.0
    %1622 = vmatprep.subr.mxu0 0.0
    %1623 = vmatpush2.msra.mxu0 0.0
    %1624 = vmatprep.subr.mxu0 0.0
    %1625 = vmatpush2.msra.mxu0 0.0
    %1626 = vmatprep.subr.mxu0 0.0
    %1627 = vmatpush2.msra.mxu0 0.0
    %1628 = vmatprep.subr.mxu0 0.0
    %1629 = vmatpush2.msra.mxu0 0.0
    %1630 = vmatprep.subr.mxu0 0.0
    %1631 = vmatpush2.msra.mxu0 0.0
    %1632 = vmatprep.subr.mxu0 0.0
    %1633 = vmatpush2.msra.mxu0 0.0
    %1634 = vmatprep.subr.mxu0 0.0
    %1635 = vmatpush2.msra.mxu0 0.0
    %1636 = vmatprep.mubr.f32.mxu0 0.0
    %1637 = vmatmul.mubr.f32.gmra.mxu0 %v1570
    %v1638 = vpop.f32.mrf.mxu0
    %v1639 = vadd.f32 0.0, %v1638
    %v1640 = vpop.f32.mrf.mxu0
    %1641 = vdwg.mxu0
    %v1643 = vrot.slane %v1639, 7
    %v1646 = vadd.f32 %v1420, %v1643
    %v1647 = vadd.f32 %v1425, %v1639
    %v1648 = vxor.u32 %v1646, 2147483648
    %v1649 = vxor.u32 %v1647, 2147483648
    %v1650 = vmul.f32 %v1648, 1.442695
    %v1651 = vpow.pop %v1650
    %v1652 = vmul.f32 %v1649, 1.442695
    %v1653 = vpow.pop %v1652
    %v1654 = vadd.f32 %v1651, 1.0
    %v1655 = vadd.f32 %v1653, 1.0
    %v1656 = vrcp.pop %v1654
    %v1657 = vmul.f32 1.0, %v1656
    %v1658 = vrcp.pop %v1655
    %v1659 = vmul.f32 1.0, %v1658
    %v1660 = vtanh.pop %v1646
    %v1661 = vtanh.pop %v1647
    %v1664 = vrot.slane %v1542, 7
    %v1665 = vrot.slane %v1543, 7
    %v1668 = vmul.f32 %v1657, %v1664
    %v1669 = vmul.f32 %v1659, %v1665
    %1672 = vrot.lane.b32.xlu0 %v1660, 64
    %v1673 = vpop.permute.xlu0 %1672
    %1674 = vrot.lane.b32.xlu0 %v1661, 64
    %v1675 = vpop.permute.xlu0 %1674
    %v1678 = vmul.f32 %v1657, %v1673
    %v1679 = vmul.f32 %v1659, %v1675
    %1682 = vrot.lane.b32.xlu0 %v1678, 32
    %v1683 = vpop.permute.xlu0 %1682
    %1684 = vrot.lane.b32.xlu0 %v1679, 32
    %v1685 = vpop.permute.xlu0 %1684
    %v1688 = vadd.f32 %v1668, %v1683
    %v1689 = vadd.f32 %v1669, %v1685
    %v1690 = vtanh.pop %v1688
    %v1691 = vtanh.pop %v1689
    %1694 = vrot.lane.b32.xlu0 %v1690, 64
    %v1695 = vpop.permute.xlu0 %1694
    %1696 = vrot.lane.b32.xlu0 %v1691, 64
    %v1697 = vpop.permute.xlu0 %1696
    %v1700 = vmul.f32 %v1657, %v1695
    %v1701 = vmul.f32 %v1659, %v1697
    %1704 = vrot.lane.b32.xlu0 %v1700, 32
    %v1705 = vpop.permute.xlu0 %1704
    %1706 = vrot.lane.b32.xlu0 %v1701, 32
    %v1707 = vpop.permute.xlu0 %1706
    %1710 = vst.msk [vmem:[#allocation3] sm:$0x2] %vm438, %v1705
    %1711 = vst.msk [vmem:[#allocation3 + $0x8] sm:$0x2] %vm438, %v1707
    %v1712 = vrot.slane %v1700, 1
    %v1713 = vsel %vm294, %v1701, %v1712
    %1714 = vrot.lane.b32.xlu0 %v1713, 32
    %v1715 = vpop.permute.xlu0 %1714
    %v1716 = vsel %vm154, %v1715, 0
    %1718 = vmatprep.subr.mxu0 0.0
    %1719 = vmatpush1.msra.mxu0 0.0
    %1720 = vmatprep.subr.mxu0 0.0
    %1721 = vmatpush1.msra.mxu0 0.0
    %1722 = vmatprep.subr.mxu0 0.0
    %1723 = vmatpush1.msra.mxu0 0.0
    %1724 = vmatprep.subr.mxu0 0.0
    %1725 = vmatpush1.msra.mxu0 0.0
    %1726 = vmatprep.subr.mxu0 0.0
    %1727 = vmatpush1.msra.mxu0 0.0
    %1728 = vmatprep.subr.mxu0 0.0
    %1729 = vmatpush1.msra.mxu0 0.0
    %1730 = vmatprep.subr.mxu0 0.0
    %1731 = vmatpush1.msra.mxu0 0.0
    %1732 = vmatprep.subr.mxu0 0.0
    %1733 = vmatpush1.msra.mxu0 0.0
    %1734 = vmatprep.subr.mxu0 0.0
    %1735 = vmatpush1.msra.mxu0 0.0
    %1736 = vmatprep.subr.mxu0 0.0
    %1737 = vmatpush1.msra.mxu0 0.0
    %1738 = vmatprep.subr.mxu0 0.0
    %1739 = vmatpush1.msra.mxu0 0.0
    %1740 = vmatprep.subr.mxu0 0.0
    %1741 = vmatpush1.msra.mxu0 0.0
    %1742 = vmatprep.subr.mxu0 0.0
    %1743 = vmatpush1.msra.mxu0 %v1431
    %1744 = vmatprep.subr.mxu0 0.0
    %1745 = vmatpush1.msra.mxu0 %v1430
    %1746 = vmatprep.subr.mxu0 0.0
    %1747 = vmatpush1.msra.mxu0 %v1429
    %1748 = vmatprep.subr.mxu0 0.0
    %1749 = vmatpush1.msra.mxu0 %v1428
    %1750 = vmatprep.subr.mxu0 0.0
    %1751 = vmatpush2.msra.mxu0 0.0
    %1752 = vmatprep.subr.mxu0 0.0
    %1753 = vmatpush2.msra.mxu0 0.0
    %1754 = vmatprep.subr.mxu0 0.0
    %1755 = vmatpush2.msra.mxu0 0.0
    %1756 = vmatprep.subr.mxu0 0.0
    %1757 = vmatpush2.msra.mxu0 0.0
    %1758 = vmatprep.subr.mxu0 0.0
    %1759 = vmatpush2.msra.mxu0 0.0
    %1760 = vmatprep.subr.mxu0 0.0
    %1761 = vmatpush2.msra.mxu0 0.0
    %1762 = vmatprep.subr.mxu0 0.0
    %1763 = vmatpush2.msra.mxu0 0.0
    %1764 = vmatprep.subr.mxu0 0.0
    %1765 = vmatpush2.msra.mxu0 0.0
    %1766 = vmatprep.subr.mxu0 0.0
    %1767 = vmatpush2.msra.mxu0 0.0
    %1768 = vmatprep.subr.mxu0 0.0
    %1769 = vmatpush2.msra.mxu0 0.0
    %1770 = vmatprep.subr.mxu0 0.0
    %1771 = vmatpush2.msra.mxu0 0.0
    %1772 = vmatprep.subr.mxu0 0.0
    %1773 = vmatpush2.msra.mxu0 0.0
    %1774 = vmatprep.subr.mxu0 0.0
    %1775 = vmatpush2.msra.mxu0 0.0
    %1776 = vmatprep.subr.mxu0 0.0
    %1777 = vmatpush2.msra.mxu0 0.0
    %1778 = vmatprep.subr.mxu0 0.0
    %1779 = vmatpush2.msra.mxu0 0.0
    %1780 = vmatprep.subr.mxu0 0.0
    %1781 = vmatpush2.msra.mxu0 0.0
    %1782 = vmatprep.mubr.f32.mxu0 0.0
    %1783 = vmatmul.mubr.f32.gmra.mxu0 %v1716
    %v1784 = vpop.f32.mrf.mxu0
    %v1785 = vadd.f32 0.0, %v1784
    %v1786 = vpop.f32.mrf.mxu0
    %1787 = vdwg.mxu0
    %v1789 = vrot.slane %v1785, 6
    %v1790 = vrot.slane %v1785, 7
    %v1793 = vadd.f32 %v1420, %v1789
    %v1794 = vadd.f32 %v1425, %v1790
    %v1795 = vxor.u32 %v1793, 2147483648
    %v1796 = vxor.u32 %v1794, 2147483648
    %v1797 = vmul.f32 %v1795, 1.442695
    %v1798 = vpow.pop %v1797
    %v1799 = vmul.f32 %v1796, 1.442695
    %v1800 = vpow.pop %v1799
    %v1801 = vadd.f32 %v1798, 1.0
    %v1802 = vadd.f32 %v1800, 1.0
    %v1803 = vrcp.pop %v1801
    %v1804 = vmul.f32 1.0, %v1803
    %v1805 = vrcp.pop %v1802
    %v1806 = vmul.f32 1.0, %v1805
    %v1807 = vtanh.pop %v1793
    %v1808 = vtanh.pop %v1794
    %v1811 = vrot.slane %v1688, 7
    %v1812 = vrot.slane %v1689, 7
    %v1815 = vmul.f32 %v1804, %v1811
    %v1816 = vmul.f32 %v1806, %v1812
    %1819 = vrot.lane.b32.xlu0 %v1807, 64
    %v1820 = vpop.permute.xlu0 %1819
    %1821 = vrot.lane.b32.xlu0 %v1808, 64
    %v1822 = vpop.permute.xlu0 %1821
    %v1825 = vmul.f32 %v1804, %v1820
    %v1826 = vmul.f32 %v1806, %v1822
    %1829 = vrot.lane.b32.xlu0 %v1825, 32
    %v1830 = vpop.permute.xlu0 %1829
    %1831 = vrot.lane.b32.xlu0 %v1826, 32
    %v1832 = vpop.permute.xlu0 %1831
    %v1835 = vadd.f32 %v1815, %v1830
    %v1836 = vadd.f32 %v1816, %v1832
    %v1837 = vtanh.pop %v1835
    %v1838 = vtanh.pop %v1836
    %1841 = vrot.lane.b32.xlu0 %v1837, 64
    %v1842 = vpop.permute.xlu0 %1841
    %1843 = vrot.lane.b32.xlu0 %v1838, 64
    %v1844 = vpop.permute.xlu0 %1843
    %v1847 = vmul.f32 %v1804, %v1842
    %v1848 = vmul.f32 %v1806, %v1844
    %1851 = vrot.lane.b32.xlu0 %v1847, 32
    %v1852 = vpop.permute.xlu0 %1851
    %1853 = vrot.lane.b32.xlu0 %v1848, 32
    %v1854 = vpop.permute.xlu0 %1853
    %1857 = vst.msk [vmem:[#allocation3] sm:$0x4] %vm586, %v1852
    %1858 = vst.msk [vmem:[#allocation3 + $0x8] sm:$0x4] %vm586, %v1854
    %v1859 = vrot.slane %v1847, 2
    %v1860 = vrot.slane %v1848, 1
    %v1861 = vsel %vm294, %v1860, %v1859
    %1862 = vrot.lane.b32.xlu0 %v1861, 32
    %v1863 = vpop.permute.xlu0 %1862
    %v1864 = vsel %vm154, %v1863, 0
    %1866 = vmatprep.subr.mxu0 0.0
    %1867 = vmatpush1.msra.mxu0 0.0
    %1868 = vmatprep.subr.mxu0 0.0
    %1869 = vmatpush1.msra.mxu0 0.0
    %1870 = vmatprep.subr.mxu0 0.0
    %1871 = vmatpush1.msra.mxu0 0.0
    %1872 = vmatprep.subr.mxu0 0.0
    %1873 = vmatpush1.msra.mxu0 0.0
    %1874 = vmatprep.subr.mxu0 0.0
    %1875 = vmatpush1.msra.mxu0 0.0
    %1876 = vmatprep.subr.mxu0 0.0
    %1877 = vmatpush1.msra.mxu0 0.0
    %1878 = vmatprep.subr.mxu0 0.0
    %1879 = vmatpush1.msra.mxu0 0.0
    %1880 = vmatprep.subr.mxu0 0.0
    %1881 = vmatpush1.msra.mxu0 0.0
    %1882 = vmatprep.subr.mxu0 0.0
    %1883 = vmatpush1.msra.mxu0 0.0
    %1884 = vmatprep.subr.mxu0 0.0
    %1885 = vmatpush1.msra.mxu0 0.0
    %1886 = vmatprep.subr.mxu0 0.0
    %1887 = vmatpush1.msra.mxu0 0.0
    %1888 = vmatprep.subr.mxu0 0.0
    %1889 = vmatpush1.msra.mxu0 0.0
    %1890 = vmatprep.subr.mxu0 0.0
    %1891 = vmatpush1.msra.mxu0 %v1431
    %1892 = vmatprep.subr.mxu0 0.0
    %1893 = vmatpush1.msra.mxu0 %v1430
    %1894 = vmatprep.subr.mxu0 0.0
    %1895 = vmatpush1.msra.mxu0 %v1429
    %1896 = vmatprep.subr.mxu0 0.0
    %1897 = vmatpush1.msra.mxu0 %v1428
    %1898 = vmatprep.subr.mxu0 0.0
    %1899 = vmatpush2.msra.mxu0 0.0
    %1900 = vmatprep.subr.mxu0 0.0
    %1901 = vmatpush2.msra.mxu0 0.0
    %1902 = vmatprep.subr.mxu0 0.0
    %1903 = vmatpush2.msra.mxu0 0.0
    %1904 = vmatprep.subr.mxu0 0.0
    %1905 = vmatpush2.msra.mxu0 0.0
    %1906 = vmatprep.subr.mxu0 0.0
    %1907 = vmatpush2.msra.mxu0 0.0
    %1908 = vmatprep.subr.mxu0 0.0
    %1909 = vmatpush2.msra.mxu0 0.0
    %1910 = vmatprep.subr.mxu0 0.0
    %1911 = vmatpush2.msra.mxu0 0.0
    %1912 = vmatprep.subr.mxu0 0.0
    %1913 = vmatpush2.msra.mxu0 0.0
    %1914 = vmatprep.subr.mxu0 0.0
    %1915 = vmatpush2.msra.mxu0 0.0
    %1916 = vmatprep.subr.mxu0 0.0
    %1917 = vmatpush2.msra.mxu0 0.0
    %1918 = vmatprep.subr.mxu0 0.0
    %1919 = vmatpush2.msra.mxu0 0.0
    %1920 = vmatprep.subr.mxu0 0.0
    %1921 = vmatpush2.msra.mxu0 0.0
    %1922 = vmatprep.subr.mxu0 0.0
    %1923 = vmatpush2.msra.mxu0 0.0
    %1924 = vmatprep.subr.mxu0 0.0
    %1925 = vmatpush2.msra.mxu0 0.0
    %1926 = vmatprep.subr.mxu0 0.0
    %1927 = vmatpush2.msra.mxu0 0.0
    %1928 = vmatprep.subr.mxu0 0.0
    %1929 = vmatpush2.msra.mxu0 0.0
    %1930 = vmatprep.mubr.f32.mxu0 0.0
    %1931 = vmatmul.mubr.f32.gmra.mxu0 %v1864
    %v1932 = vpop.f32.mrf.mxu0
    %v1933 = vadd.f32 0.0, %v1932
    %v1934 = vpop.f32.mrf.mxu0
    %1935 = vdwg.mxu0
    %v1937 = vrot.slane %v1933, 5
    %v1938 = vrot.slane %v1933, 6
    %v1941 = vadd.f32 %v1420, %v1937
    %v1942 = vadd.f32 %v1425, %v1938
    %v1943 = vxor.u32 %v1941, 2147483648
    %v1944 = vxor.u32 %v1942, 2147483648
    %v1945 = vmul.f32 %v1943, 1.442695
    %v1946 = vpow.pop %v1945
    %v1947 = vmul.f32 %v1944, 1.442695
    %v1948 = vpow.pop %v1947
    %v1949 = vadd.f32 %v1946, 1.0
    %v1950 = vadd.f32 %v1948, 1.0
    %v1951 = vrcp.pop %v1949
    %v1952 = vmul.f32 1.0, %v1951
    %v1953 = vrcp.pop %v1950
    %v1954 = vmul.f32 1.0, %v1953
    %v1955 = vtanh.pop %v1941
    %v1956 = vtanh.pop %v1942
    %v1959 = vrot.slane %v1835, 7
    %v1960 = vrot.slane %v1836, 7
    %v1963 = vmul.f32 %v1952, %v1959
    %v1964 = vmul.f32 %v1954, %v1960
    %1967 = vrot.lane.b32.xlu0 %v1955, 64
    %v1968 = vpop.permute.xlu0 %1967
    %1969 = vrot.lane.b32.xlu0 %v1956, 64
    %v1970 = vpop.permute.xlu0 %1969
    %v1973 = vmul.f32 %v1952, %v1968
    %v1974 = vmul.f32 %v1954, %v1970
    %1977 = vrot.lane.b32.xlu0 %v1973, 32
    %v1978 = vpop.permute.xlu0 %1977
    %1979 = vrot.lane.b32.xlu0 %v1974, 32
    %v1980 = vpop.permute.xlu0 %1979
    %v1983 = vadd.f32 %v1963, %v1978
    %v1984 = vadd.f32 %v1964, %v1980
    %v1985 = vtanh.pop %v1983
    %v1986 = vtanh.pop %v1984
    %1989 = vrot.lane.b32.xlu0 %v1985, 64
    %v1990 = vpop.permute.xlu0 %1989
    %1991 = vrot.lane.b32.xlu0 %v1986, 64
    %v1992 = vpop.permute.xlu0 %1991
    %v1995 = vmul.f32 %v1952, %v1990
    %v1996 = vmul.f32 %v1954, %v1992
    %1999 = vrot.lane.b32.xlu0 %v1995, 32
    %v2000 = vpop.permute.xlu0 %1999
    %2001 = vrot.lane.b32.xlu0 %v1996, 32
    %v2002 = vpop.permute.xlu0 %2001
    %2005 = vst.msk [vmem:[#allocation3] sm:$0x8] %vm735, %v2000
    %2006 = vst.msk [vmem:[#allocation3 + $0x8] sm:$0x8] %vm735, %v2002
    %v2007 = vrot.slane %v1995, 3
    %v2008 = vrot.slane %v1996, 2
    %v2009 = vsel %vm294, %v2008, %v2007
    %2010 = vrot.lane.b32.xlu0 %v2009, 32
    %v2011 = vpop.permute.xlu0 %2010
    %v2012 = vsel %vm154, %v2011, 0
    %2014 = vmatprep.subr.mxu0 0.0
    %2015 = vmatpush1.msra.mxu0 0.0
    %2016 = vmatprep.subr.mxu0 0.0
    %2017 = vmatpush1.msra.mxu0 0.0
    %2018 = vmatprep.subr.mxu0 0.0
    %2019 = vmatpush1.msra.mxu0 0.0
    %2020 = vmatprep.subr.mxu0 0.0
    %2021 = vmatpush1.msra.mxu0 0.0
    %2022 = vmatprep.subr.mxu0 0.0
    %2023 = vmatpush1.msra.mxu0 0.0
    %2024 = vmatprep.subr.mxu0 0.0
    %2025 = vmatpush1.msra.mxu0 0.0
    %2026 = vmatprep.subr.mxu0 0.0
    %2027 = vmatpush1.msra.mxu0 0.0
    %2028 = vmatprep.subr.mxu0 0.0
    %2029 = vmatpush1.msra.mxu0 0.0
    %2030 = vmatprep.subr.mxu0 0.0
    %2031 = vmatpush1.msra.mxu0 0.0
    %2032 = vmatprep.subr.mxu0 0.0
    %2033 = vmatpush1.msra.mxu0 0.0
    %2034 = vmatprep.subr.mxu0 0.0
    %2035 = vmatpush1.msra.mxu0 0.0
    %2036 = vmatprep.subr.mxu0 0.0
    %2037 = vmatpush1.msra.mxu0 0.0
    %2038 = vmatprep.subr.mxu0 0.0
    %2039 = vmatpush1.msra.mxu0 %v1431
    %2040 = vmatprep.subr.mxu0 0.0
    %2041 = vmatpush1.msra.mxu0 %v1430
    %2042 = vmatprep.subr.mxu0 0.0
    %2043 = vmatpush1.msra.mxu0 %v1429
    %2044 = vmatprep.subr.mxu0 0.0
    %2045 = vmatpush1.msra.mxu0 %v1428
    %2046 = vmatprep.subr.mxu0 0.0
    %2047 = vmatpush2.msra.mxu0 0.0
    %2048 = vmatprep.subr.mxu0 0.0
    %2049 = vmatpush2.msra.mxu0 0.0
    %2050 = vmatprep.subr.mxu0 0.0
    %2051 = vmatpush2.msra.mxu0 0.0
    %2052 = vmatprep.subr.mxu0 0.0
    %2053 = vmatpush2.msra.mxu0 0.0
    %2054 = vmatprep.subr.mxu0 0.0
    %2055 = vmatpush2.msra.mxu0 0.0
    %2056 = vmatprep.subr.mxu0 0.0
    %2057 = vmatpush2.msra.mxu0 0.0
    %2058 = vmatprep.subr.mxu0 0.0
    %2059 = vmatpush2.msra.mxu0 0.0
    %2060 = vmatprep.subr.mxu0 0.0
    %2061 = vmatpush2.msra.mxu0 0.0
    %2062 = vmatprep.subr.mxu0 0.0
    %2063 = vmatpush2.msra.mxu0 0.0
    %2064 = vmatprep.subr.mxu0 0.0
    %2065 = vmatpush2.msra.mxu0 0.0
    %2066 = vmatprep.subr.mxu0 0.0
    %2067 = vmatpush2.msra.mxu0 0.0
    %2068 = vmatprep.subr.mxu0 0.0
    %2069 = vmatpush2.msra.mxu0 0.0
    %2070 = vmatprep.subr.mxu0 0.0
    %2071 = vmatpush2.msra.mxu0 0.0
    %2072 = vmatprep.subr.mxu0 0.0
    %2073 = vmatpush2.msra.mxu0 0.0
    %2074 = vmatprep.subr.mxu0 0.0
    %2075 = vmatpush2.msra.mxu0 0.0
    %2076 = vmatprep.subr.mxu0 0.0
    %2077 = vmatpush2.msra.mxu0 0.0
    %2078 = vmatprep.mubr.f32.mxu0 0.0
    %2079 = vmatmul.mubr.f32.gmra.mxu0 %v2012
    %v2080 = vpop.f32.mrf.mxu0
    %v2081 = vadd.f32 0.0, %v2080
    %v2082 = vpop.f32.mrf.mxu0
    %2083 = vdwg.mxu0
    %v2085 = vrot.slane %v2081, 4
    %v2086 = vrot.slane %v2081, 5
    %v2089 = vadd.f32 %v1420, %v2085
    %v2090 = vadd.f32 %v1425, %v2086
    %v2091 = vxor.u32 %v2089, 2147483648
    %v2092 = vxor.u32 %v2090, 2147483648
    %v2093 = vmul.f32 %v2091, 1.442695
    %v2094 = vpow.pop %v2093
    %v2095 = vmul.f32 %v2092, 1.442695
    %v2096 = vpow.pop %v2095
    %v2097 = vadd.f32 %v2094, 1.0
    %v2098 = vadd.f32 %v2096, 1.0
    %v2099 = vrcp.pop %v2097
    %v2100 = vmul.f32 1.0, %v2099
    %v2101 = vrcp.pop %v2098
    %v2102 = vmul.f32 1.0, %v2101
    %v2103 = vtanh.pop %v2089
    %v2104 = vtanh.pop %v2090
    %v2107 = vrot.slane %v1983, 7
    %v2108 = vrot.slane %v1984, 7
    %v2111 = vmul.f32 %v2100, %v2107
    %v2112 = vmul.f32 %v2102, %v2108
    %2115 = vrot.lane.b32.xlu0 %v2103, 64
    %v2116 = vpop.permute.xlu0 %2115
    %2117 = vrot.lane.b32.xlu0 %v2104, 64
    %v2118 = vpop.permute.xlu0 %2117
    %v2121 = vmul.f32 %v2100, %v2116
    %v2122 = vmul.f32 %v2102, %v2118
    %2125 = vrot.lane.b32.xlu0 %v2121, 32
    %v2126 = vpop.permute.xlu0 %2125
    %2127 = vrot.lane.b32.xlu0 %v2122, 32
    %v2128 = vpop.permute.xlu0 %2127
    %v2131 = vadd.f32 %v2111, %v2126
    %v2132 = vadd.f32 %v2112, %v2128
    %v2133 = vtanh.pop %v2131
    %v2134 = vtanh.pop %v2132
    %2137 = vrot.lane.b32.xlu0 %v2133, 64
    %v2138 = vpop.permute.xlu0 %2137
    %2139 = vrot.lane.b32.xlu0 %v2134, 64
    %v2140 = vpop.permute.xlu0 %2139
    %v2143 = vmul.f32 %v2100, %v2138
    %v2144 = vmul.f32 %v2102, %v2140
    %2147 = vrot.lane.b32.xlu0 %v2143, 32
    %v2148 = vpop.permute.xlu0 %2147
    %2149 = vrot.lane.b32.xlu0 %v2144, 32
    %v2150 = vpop.permute.xlu0 %2149
    %2153 = vst.msk [vmem:[#allocation3] sm:$0x10] %vm884, %v2148
    %2154 = vst.msk [vmem:[#allocation3 + $0x8] sm:$0x10] %vm884, %v2150
    %v2155 = vrot.slane %v2143, 4
    %v2156 = vrot.slane %v2144, 3
    %v2157 = vsel %vm294, %v2156, %v2155
    %2158 = vrot.lane.b32.xlu0 %v2157, 32
    %v2159 = vpop.permute.xlu0 %2158
    %v2160 = vsel %vm154, %v2159, 0
    %2162 = vmatprep.subr.mxu0 0.0
    %2163 = vmatpush1.msra.mxu0 0.0
    %2164 = vmatprep.subr.mxu0 0.0
    %2165 = vmatpush1.msra.mxu0 0.0
    %2166 = vmatprep.subr.mxu0 0.0
    %2167 = vmatpush1.msra.mxu0 0.0
    %2168 = vmatprep.subr.mxu0 0.0
    %2169 = vmatpush1.msra.mxu0 0.0
    %2170 = vmatprep.subr.mxu0 0.0
    %2171 = vmatpush1.msra.mxu0 0.0
    %2172 = vmatprep.subr.mxu0 0.0
    %2173 = vmatpush1.msra.mxu0 0.0
    %2174 = vmatprep.subr.mxu0 0.0
    %2175 = vmatpush1.msra.mxu0 0.0
    %2176 = vmatprep.subr.mxu0 0.0
    %2177 = vmatpush1.msra.mxu0 0.0
    %2178 = vmatprep.subr.mxu0 0.0
    %2179 = vmatpush1.msra.mxu0 0.0
    %2180 = vmatprep.subr.mxu0 0.0
    %2181 = vmatpush1.msra.mxu0 0.0
    %2182 = vmatprep.subr.mxu0 0.0
    %2183 = vmatpush1.msra.mxu0 0.0
    %2184 = vmatprep.subr.mxu0 0.0
    %2185 = vmatpush1.msra.mxu0 0.0
    %2186 = vmatprep.subr.mxu0 0.0
    %2187 = vmatpush1.msra.mxu0 %v1431
    %2188 = vmatprep.subr.mxu0 0.0
    %2189 = vmatpush1.msra.mxu0 %v1430
    %2190 = vmatprep.subr.mxu0 0.0
    %2191 = vmatpush1.msra.mxu0 %v1429
    %2192 = vmatprep.subr.mxu0 0.0
    %2193 = vmatpush1.msra.mxu0 %v1428
    %2194 = vmatprep.subr.mxu0 0.0
    %2195 = vmatpush2.msra.mxu0 0.0
    %2196 = vmatprep.subr.mxu0 0.0
    %2197 = vmatpush2.msra.mxu0 0.0
    %2198 = vmatprep.subr.mxu0 0.0
    %2199 = vmatpush2.msra.mxu0 0.0
    %2200 = vmatprep.subr.mxu0 0.0
    %2201 = vmatpush2.msra.mxu0 0.0
    %2202 = vmatprep.subr.mxu0 0.0
    %2203 = vmatpush2.msra.mxu0 0.0
    %2204 = vmatprep.subr.mxu0 0.0
    %2205 = vmatpush2.msra.mxu0 0.0
    %2206 = vmatprep.subr.mxu0 0.0
    %2207 = vmatpush2.msra.mxu0 0.0
    %2208 = vmatprep.subr.mxu0 0.0
    %2209 = vmatpush2.msra.mxu0 0.0
    %2210 = vmatprep.subr.mxu0 0.0
    %2211 = vmatpush2.msra.mxu0 0.0
    %2212 = vmatprep.subr.mxu0 0.0
    %2213 = vmatpush2.msra.mxu0 0.0
    %2214 = vmatprep.subr.mxu0 0.0
    %2215 = vmatpush2.msra.mxu0 0.0
    %2216 = vmatprep.subr.mxu0 0.0
    %2217 = vmatpush2.msra.mxu0 0.0
    %2218 = vmatprep.subr.mxu0 0.0
    %2219 = vmatpush2.msra.mxu0 0.0
    %2220 = vmatprep.subr.mxu0 0.0
    %2221 = vmatpush2.msra.mxu0 0.0
    %2222 = vmatprep.subr.mxu0 0.0
    %2223 = vmatpush2.msra.mxu0 0.0
    %2224 = vmatprep.subr.mxu0 0.0
    %2225 = vmatpush2.msra.mxu0 0.0
    %2226 = vmatprep.mubr.f32.mxu0 0.0
    %2227 = vmatmul.mubr.f32.gmra.mxu0 %v2160
    %v2228 = vpop.f32.mrf.mxu0
    %v2229 = vadd.f32 0.0, %v2228
    %v2230 = vpop.f32.mrf.mxu0
    %2231 = vdwg.mxu0
    %v2233 = vrot.slane %v2229, 3
    %v2234 = vrot.slane %v2229, 4
    %v2237 = vadd.f32 %v1420, %v2233
    %v2238 = vadd.f32 %v1425, %v2234
    %v2239 = vxor.u32 %v2237, 2147483648
    %v2240 = vxor.u32 %v2238, 2147483648
    %v2241 = vmul.f32 %v2239, 1.442695
    %v2242 = vpow.pop %v2241
    %v2243 = vmul.f32 %v2240, 1.442695
    %v2244 = vpow.pop %v2243
    %v2245 = vadd.f32 %v2242, 1.0
    %v2246 = vadd.f32 %v2244, 1.0
    %v2247 = vrcp.pop %v2245
    %v2248 = vmul.f32 1.0, %v2247
    %v2249 = vrcp.pop %v2246
    %v2250 = vmul.f32 1.0, %v2249
    %v2251 = vtanh.pop %v2237
    %v2252 = vtanh.pop %v2238
    %v2255 = vrot.slane %v2131, 7
    %v2256 = vrot.slane %v2132, 7
    %v2259 = vmul.f32 %v2248, %v2255
    %v2260 = vmul.f32 %v2250, %v2256
    %2263 = vrot.lane.b32.xlu0 %v2251, 64
    %v2264 = vpop.permute.xlu0 %2263
    %2265 = vrot.lane.b32.xlu0 %v2252, 64
    %v2266 = vpop.permute.xlu0 %2265
    %v2269 = vmul.f32 %v2248, %v2264
    %v2270 = vmul.f32 %v2250, %v2266
    %2273 = vrot.lane.b32.xlu0 %v2269, 32
    %v2274 = vpop.permute.xlu0 %2273
    %2275 = vrot.lane.b32.xlu0 %v2270, 32
    %v2276 = vpop.permute.xlu0 %2275
    %v2279 = vadd.f32 %v2259, %v2274
    %v2280 = vadd.f32 %v2260, %v2276
    %v2281 = vtanh.pop %v2279
    %v2282 = vtanh.pop %v2280
    %2285 = vrot.lane.b32.xlu0 %v2281, 64
    %v2286 = vpop.permute.xlu0 %2285
    %2287 = vrot.lane.b32.xlu0 %v2282, 64
    %v2288 = vpop.permute.xlu0 %2287
    %v2291 = vmul.f32 %v2248, %v2286
    %v2292 = vmul.f32 %v2250, %v2288
    %2295 = vrot.lane.b32.xlu0 %v2291, 32
    %v2296 = vpop.permute.xlu0 %2295
    %2297 = vrot.lane.b32.xlu0 %v2292, 32
    %v2298 = vpop.permute.xlu0 %2297
    %2301 = vst.msk [vmem:[#allocation3] sm:$0x20] %vm1033, %v2296
    %2302 = vst.msk [vmem:[#allocation3 + $0x8] sm:$0x20] %vm1033, %v2298
    %v2303 = vrot.slane %v2291, 5
    %v2304 = vrot.slane %v2292, 4
    %v2305 = vsel %vm294, %v2304, %v2303
    %2306 = vrot.lane.b32.xlu0 %v2305, 32
    %v2307 = vpop.permute.xlu0 %2306
    %v2308 = vsel %vm154, %v2307, 0
    %2310 = vmatprep.subr.mxu0 0.0
    %2311 = vmatpush1.msra.mxu0 0.0
    %2312 = vmatprep.subr.mxu0 0.0
    %2313 = vmatpush1.msra.mxu0 0.0
    %2314 = vmatprep.subr.mxu0 0.0
    %2315 = vmatpush1.msra.mxu0 0.0
    %2316 = vmatprep.subr.mxu0 0.0
    %2317 = vmatpush1.msra.mxu0 0.0
    %2318 = vmatprep.subr.mxu0 0.0
    %2319 = vmatpush1.msra.mxu0 0.0
    %2320 = vmatprep.subr.mxu0 0.0
    %2321 = vmatpush1.msra.mxu0 0.0
    %2322 = vmatprep.subr.mxu0 0.0
    %2323 = vmatpush1.msra.mxu0 0.0
    %2324 = vmatprep.subr.mxu0 0.0
    %2325 = vmatpush1.msra.mxu0 0.0
    %2326 = vmatprep.subr.mxu0 0.0
    %2327 = vmatpush1.msra.mxu0 0.0
    %2328 = vmatprep.subr.mxu0 0.0
    %2329 = vmatpush1.msra.mxu0 0.0
    %2330 = vmatprep.subr.mxu0 0.0
    %2331 = vmatpush1.msra.mxu0 0.0
    %2332 = vmatprep.subr.mxu0 0.0
    %2333 = vmatpush1.msra.mxu0 0.0
    %2334 = vmatprep.subr.mxu0 0.0
    %2335 = vmatpush1.msra.mxu0 %v1431
    %2336 = vmatprep.subr.mxu0 0.0
    %2337 = vmatpush1.msra.mxu0 %v1430
    %2338 = vmatprep.subr.mxu0 0.0
    %2339 = vmatpush1.msra.mxu0 %v1429
    %2340 = vmatprep.subr.mxu0 0.0
    %2341 = vmatpush1.msra.mxu0 %v1428
    %2342 = vmatprep.subr.mxu0 0.0
    %2343 = vmatpush2.msra.mxu0 0.0
    %2344 = vmatprep.subr.mxu0 0.0
    %2345 = vmatpush2.msra.mxu0 0.0
    %2346 = vmatprep.subr.mxu0 0.0
    %2347 = vmatpush2.msra.mxu0 0.0
    %2348 = vmatprep.subr.mxu0 0.0
    %2349 = vmatpush2.msra.mxu0 0.0
    %2350 = vmatprep.subr.mxu0 0.0
    %2351 = vmatpush2.msra.mxu0 0.0
    %2352 = vmatprep.subr.mxu0 0.0
    %2353 = vmatpush2.msra.mxu0 0.0
    %2354 = vmatprep.subr.mxu0 0.0
    %2355 = vmatpush2.msra.mxu0 0.0
    %2356 = vmatprep.subr.mxu0 0.0
    %2357 = vmatpush2.msra.mxu0 0.0
    %2358 = vmatprep.subr.mxu0 0.0
    %2359 = vmatpush2.msra.mxu0 0.0
    %2360 = vmatprep.subr.mxu0 0.0
    %2361 = vmatpush2.msra.mxu0 0.0
    %2362 = vmatprep.subr.mxu0 0.0
    %2363 = vmatpush2.msra.mxu0 0.0
    %2364 = vmatprep.subr.mxu0 0.0
    %2365 = vmatpush2.msra.mxu0 0.0
    %2366 = vmatprep.subr.mxu0 0.0
    %2367 = vmatpush2.msra.mxu0 0.0
    %2368 = vmatprep.subr.mxu0 0.0
    %2369 = vmatpush2.msra.mxu0 0.0
    %2370 = vmatprep.subr.mxu0 0.0
    %2371 = vmatpush2.msra.mxu0 0.0
    %2372 = vmatprep.subr.mxu0 0.0
    %2373 = vmatpush2.msra.mxu0 0.0
    %2374 = vmatprep.mubr.f32.mxu0 0.0
    %2375 = vmatmul.mubr.f32.gmra.mxu0 %v2308
    %v2376 = vpop.f32.mrf.mxu0
    %v2377 = vadd.f32 0.0, %v2376
    %v2378 = vpop.f32.mrf.mxu0
    %2379 = vdwg.mxu0
    %v2381 = vrot.slane %v2377, 2
    %v2382 = vrot.slane %v2377, 3
    %v2385 = vadd.f32 %v1420, %v2381
    %v2386 = vadd.f32 %v1425, %v2382
    %v2387 = vxor.u32 %v2385, 2147483648
    %v2388 = vxor.u32 %v2386, 2147483648
    %v2389 = vmul.f32 %v2387, 1.442695
    %v2390 = vpow.pop %v2389
    %v2391 = vmul.f32 %v2388, 1.442695
    %v2392 = vpow.pop %v2391
    %v2393 = vadd.f32 %v2390, 1.0
    %v2394 = vadd.f32 %v2392, 1.0
    %v2395 = vrcp.pop %v2393
    %v2396 = vmul.f32 1.0, %v2395
    %v2397 = vrcp.pop %v2394
    %v2398 = vmul.f32 1.0, %v2397
    %v2399 = vtanh.pop %v2385
    %v2400 = vtanh.pop %v2386
    %v2403 = vrot.slane %v2279, 7
    %v2404 = vrot.slane %v2280, 7
    %v2407 = vmul.f32 %v2396, %v2403
    %v2408 = vmul.f32 %v2398, %v2404
    %2411 = vrot.lane.b32.xlu0 %v2399, 64
    %v2412 = vpop.permute.xlu0 %2411
    %2413 = vrot.lane.b32.xlu0 %v2400, 64
    %v2414 = vpop.permute.xlu0 %2413
    %v2417 = vmul.f32 %v2396, %v2412
    %v2418 = vmul.f32 %v2398, %v2414
    %2421 = vrot.lane.b32.xlu0 %v2417, 32
    %v2422 = vpop.permute.xlu0 %2421
    %2423 = vrot.lane.b32.xlu0 %v2418, 32
    %v2424 = vpop.permute.xlu0 %2423
    %v2427 = vadd.f32 %v2407, %v2422
    %v2428 = vadd.f32 %v2408, %v2424
    %v2429 = vtanh.pop %v2427
    %v2430 = vtanh.pop %v2428
    %2433 = vrot.lane.b32.xlu0 %v2429, 64
    %v2434 = vpop.permute.xlu0 %2433
    %2435 = vrot.lane.b32.xlu0 %v2430, 64
    %v2436 = vpop.permute.xlu0 %2435
    %v2439 = vmul.f32 %v2396, %v2434
    %v2440 = vmul.f32 %v2398, %v2436
    %2443 = vrot.lane.b32.xlu0 %v2439, 32
    %v2444 = vpop.permute.xlu0 %2443
    %2445 = vrot.lane.b32.xlu0 %v2440, 32
    %v2446 = vpop.permute.xlu0 %2445
    %2449 = vst.msk [vmem:[#allocation3] sm:$0x40] %vm1182, %v2444
    %2450 = vst.msk [vmem:[#allocation3 + $0x8] sm:$0x40] %vm1182, %v2446
    %v2451 = vrot.slane %v2439, 6
    %v2452 = vrot.slane %v2440, 5
    %v2453 = vsel %vm294, %v2452, %v2451
    %2454 = vrot.lane.b32.xlu0 %v2453, 32
    %v2455 = vpop.permute.xlu0 %2454
    %v2456 = vsel %vm154, %v2455, 0
    %2458 = vmatprep.subr.mxu0 0.0
    %2459 = vmatpush1.msra.mxu0 0.0
    %2460 = vmatprep.subr.mxu0 0.0
    %2461 = vmatpush1.msra.mxu0 0.0
    %2462 = vmatprep.subr.mxu0 0.0
    %2463 = vmatpush1.msra.mxu0 0.0
    %2464 = vmatprep.subr.mxu0 0.0
    %2465 = vmatpush1.msra.mxu0 0.0
    %2466 = vmatprep.subr.mxu0 0.0
    %2467 = vmatpush1.msra.mxu0 0.0
    %2468 = vmatprep.subr.mxu0 0.0
    %2469 = vmatpush1.msra.mxu0 0.0
    %2470 = vmatprep.subr.mxu0 0.0
    %2471 = vmatpush1.msra.mxu0 0.0
    %2472 = vmatprep.subr.mxu0 0.0
    %2473 = vmatpush1.msra.mxu0 0.0
    %2474 = vmatprep.subr.mxu0 0.0
    %2475 = vmatpush1.msra.mxu0 0.0
    %2476 = vmatprep.subr.mxu0 0.0
    %2477 = vmatpush1.msra.mxu0 0.0
    %2478 = vmatprep.subr.mxu0 0.0
    %2479 = vmatpush1.msra.mxu0 0.0
    %2480 = vmatprep.subr.mxu0 0.0
    %2481 = vmatpush1.msra.mxu0 0.0
    %2482 = vmatprep.subr.mxu0 0.0
    %2483 = vmatpush1.msra.mxu0 %v1431
    %2484 = vmatprep.subr.mxu0 0.0
    %2485 = vmatpush1.msra.mxu0 %v1430
    %2486 = vmatprep.subr.mxu0 0.0
    %2487 = vmatpush1.msra.mxu0 %v1429
    %2488 = vmatprep.subr.mxu0 0.0
    %2489 = vmatpush1.msra.mxu0 %v1428
    %2490 = vmatprep.subr.mxu0 0.0
    %2491 = vmatpush2.msra.mxu0 0.0
    %2492 = vmatprep.subr.mxu0 0.0
    %2493 = vmatpush2.msra.mxu0 0.0
    %2494 = vmatprep.subr.mxu0 0.0
    %2495 = vmatpush2.msra.mxu0 0.0
    %2496 = vmatprep.subr.mxu0 0.0
    %2497 = vmatpush2.msra.mxu0 0.0
    %2498 = vmatprep.subr.mxu0 0.0
    %2499 = vmatpush2.msra.mxu0 0.0
    %2500 = vmatprep.subr.mxu0 0.0
    %2501 = vmatpush2.msra.mxu0 0.0
    %2502 = vmatprep.subr.mxu0 0.0
    %2503 = vmatpush2.msra.mxu0 0.0
    %2504 = vmatprep.subr.mxu0 0.0
    %2505 = vmatpush2.msra.mxu0 0.0
    %2506 = vmatprep.subr.mxu0 0.0
    %2507 = vmatpush2.msra.mxu0 0.0
    %2508 = vmatprep.subr.mxu0 0.0
    %2509 = vmatpush2.msra.mxu0 0.0
    %2510 = vmatprep.subr.mxu0 0.0
    %2511 = vmatpush2.msra.mxu0 0.0
    %2512 = vmatprep.subr.mxu0 0.0
    %2513 = vmatpush2.msra.mxu0 0.0
    %2514 = vmatprep.subr.mxu0 0.0
    %2515 = vmatpush2.msra.mxu0 0.0
    %2516 = vmatprep.subr.mxu0 0.0
    %2517 = vmatpush2.msra.mxu0 0.0
    %2518 = vmatprep.subr.mxu0 0.0
    %2519 = vmatpush2.msra.mxu0 0.0
    %2520 = vmatprep.subr.mxu0 0.0
    %2521 = vmatpush2.msra.mxu0 0.0
    %2522 = vmatprep.mubr.f32.mxu0 0.0
    %2523 = vmatmul.mubr.f32.gmra.mxu0 %v2456
    %v2524 = vpop.f32.mrf.mxu0
    %v2525 = vadd.f32 0.0, %v2524
    %v2526 = vpop.f32.mrf.mxu0
    %2527 = vdwg.mxu0
    %v2529 = vrot.slane %v2525, 1
    %v2530 = vrot.slane %v2525, 2
    %v2533 = vadd.f32 %v1420, %v2529
    %v2534 = vadd.f32 %v1425, %v2530
    %v2535 = vxor.u32 %v2533, 2147483648
    %v2536 = vxor.u32 %v2534, 2147483648
    %v2537 = vmul.f32 %v2535, 1.442695
    %v2538 = vpow.pop %v2537
    %v2539 = vmul.f32 %v2536, 1.442695
    %v2540 = vpow.pop %v2539
    %v2541 = vadd.f32 %v2538, 1.0
    %v2542 = vadd.f32 %v2540, 1.0
    %v2543 = vrcp.pop %v2541
    %v2544 = vmul.f32 1.0, %v2543
    %v2545 = vrcp.pop %v2542
    %v2546 = vmul.f32 1.0, %v2545
    %v2547 = vtanh.pop %v2533
    %v2548 = vtanh.pop %v2534
    %v2551 = vrot.slane %v2427, 7
    %v2552 = vrot.slane %v2428, 7
    %v2555 = vmul.f32 %v2544, %v2551
    %v2556 = vmul.f32 %v2546, %v2552
    %2559 = vrot.lane.b32.xlu0 %v2547, 64
    %v2560 = vpop.permute.xlu0 %2559
    %2561 = vrot.lane.b32.xlu0 %v2548, 64
    %v2562 = vpop.permute.xlu0 %2561
    %v2565 = vmul.f32 %v2544, %v2560
    %v2566 = vmul.f32 %v2546, %v2562
    %2569 = vrot.lane.b32.xlu0 %v2565, 32
    %v2570 = vpop.permute.xlu0 %2569
    %2571 = vrot.lane.b32.xlu0 %v2566, 32
    %v2572 = vpop.permute.xlu0 %2571
    %v2575 = vadd.f32 %v2555, %v2570
    %v2576 = vadd.f32 %v2556, %v2572
    %v2577 = vtanh.pop %v2575
    %v2578 = vtanh.pop %v2576
    %2581 = vrot.lane.b32.xlu0 %v2577, 64
    %v2582 = vpop.permute.xlu0 %2581
    %2583 = vrot.lane.b32.xlu0 %v2578, 64
    %v2584 = vpop.permute.xlu0 %2583
    %v2587 = vmul.f32 %v2544, %v2582
    %v2588 = vmul.f32 %v2546, %v2584
    %2591 = vrot.lane.b32.xlu0 %v2587, 32
    %v2592 = vpop.permute.xlu0 %2591
    %2593 = vrot.lane.b32.xlu0 %v2588, 32
    %v2594 = vpop.permute.xlu0 %2593
    %2597 = vst.msk [vmem:[#allocation3] sm:$0x80] %vm1331, %v2592
    %2598 = vst.msk [vmem:[#allocation3 + $0x8] sm:$0x80] %vm1331, %v2594
    %v2599 = vld [vmem:[#allocation3] sm:$0xff]
    %v2600 = vld [vmem:[#allocation3 + $0x8] sm:$0xff]
    %v2601 = vld [vmem:[%s9] sm:$0xff]
    %v2602 = vld [vmem:[%s9 + $0x8] sm:$0xff]
    %v2603 = vld [vmem:[%s9 + $0x10] sm:$0xff]
    %v2604 = vld [vmem:[%s9 + $0x18] sm:$0xff]
    %v2605 = vld [vmem:[%s10] sm:$0x1]
    %v2607 = vlaneseq
    %v2608 = vshrl.u32 %v2607, 7
    %v2609 = vsub.s32 0, %v2608
    %v2610 = vrot.slane %v2605, %v2609
    %v2613 = vsel %vm154, %v2599, 0
    %v2616 = vsel %vm154, %v2600, 0
    %2618 = vmatprep.subr.mxu0 0.0
    %2619 = vmatpush1.msra.mxu0 0.0
    %2620 = vmatprep.subr.mxu0 0.0
    %2621 = vmatpush1.msra.mxu0 0.0
    %2622 = vmatprep.subr.mxu0 0.0
    %2623 = vmatpush1.msra.mxu0 0.0
    %2624 = vmatprep.subr.mxu0 0.0
    %2625 = vmatpush1.msra.mxu0 0.0
    %2626 = vmatprep.subr.mxu0 0.0
    %2627 = vmatpush1.msra.mxu0 0.0
    %2628 = vmatprep.subr.mxu0 0.0
    %2629 = vmatpush1.msra.mxu0 0.0
    %2630 = vmatprep.subr.mxu0 0.0
    %2631 = vmatpush1.msra.mxu0 0.0
    %2632 = vmatprep.subr.mxu0 0.0
    %2633 = vmatpush1.msra.mxu0 0.0
    %2634 = vmatprep.subr.mxu0 0.0
    %2635 = vmatpush1.msra.mxu0 0.0
    %2636 = vmatprep.subr.mxu0 0.0
    %2637 = vmatpush1.msra.mxu0 0.0
    %2638 = vmatprep.subr.mxu0 0.0
    %2639 = vmatpush1.msra.mxu0 0.0
    %2640 = vmatprep.subr.mxu0 0.0
    %2641 = vmatpush1.msra.mxu0 0.0
    %2642 = vmatprep.subr.mxu0 0.0
    %2643 = vmatpush1.msra.mxu0 %v2604
    %2644 = vmatprep.subr.mxu0 0.0
    %2645 = vmatpush1.msra.mxu0 %v2603
    %2646 = vmatprep.subr.mxu0 0.0
    %2647 = vmatpush1.msra.mxu0 %v2602
    %2648 = vmatprep.subr.mxu0 0.0
    %2649 = vmatpush1.msra.mxu0 %v2601
    %2650 = vmatprep.subr.mxu0 0.0
    %2651 = vmatpush2.msra.mxu0 0.0
    %2652 = vmatprep.subr.mxu0 0.0
    %2653 = vmatpush2.msra.mxu0 0.0
    %2654 = vmatprep.subr.mxu0 0.0
    %2655 = vmatpush2.msra.mxu0 0.0
    %2656 = vmatprep.subr.mxu0 0.0
    %2657 = vmatpush2.msra.mxu0 0.0
    %2658 = vmatprep.subr.mxu0 0.0
    %2659 = vmatpush2.msra.mxu0 0.0
    %2660 = vmatprep.subr.mxu0 0.0
    %2661 = vmatpush2.msra.mxu0 0.0
    %2662 = vmatprep.subr.mxu0 0.0
    %2663 = vmatpush2.msra.mxu0 0.0
    %2664 = vmatprep.subr.mxu0 0.0
    %2665 = vmatpush2.msra.mxu0 0.0
    %2666 = vmatprep.subr.mxu0 0.0
    %2667 = vmatpush2.msra.mxu0 0.0
    %2668 = vmatprep.subr.mxu0 0.0
    %2669 = vmatpush2.msra.mxu0 0.0
    %2670 = vmatprep.subr.mxu0 0.0
    %2671 = vmatpush2.msra.mxu0 0.0
    %2672 = vmatprep.subr.mxu0 0.0
    %2673 = vmatpush2.msra.mxu0 0.0
    %2674 = vmatprep.subr.mxu0 0.0
    %2675 = vmatpush2.msra.mxu0 0.0
    %2676 = vmatprep.subr.mxu0 0.0
    %2677 = vmatpush2.msra.mxu0 0.0
    %2678 = vmatprep.subr.mxu0 0.0
    %2679 = vmatpush2.msra.mxu0 0.0
    %2680 = vmatprep.subr.mxu0 0.0
    %2681 = vmatpush2.msra.mxu0 0.0
    %2682 = vmatprep.mubr.f32.mxu0 0.0
    %2683 = vmatmul.mubr.f32.gmra.mxu0 %v2613
    %v2684 = vpop.f32.mrf.mxu0
    %v2685 = vadd.f32 %v2610, %v2684
    %v2686 = vpop.f32.mrf.mxu0
    %2687 = vmatprep.mubr.f32.mxu0 0.0
    %2688 = vmatmul.mubr.f32.gmra.mxu0 %v2616
    %v2689 = vpop.f32.mrf.mxu0
    %v2690 = vadd.f32 %v2610, %v2689
    %v2691 = vpop.f32.mrf.mxu0
    %2692 = vdwg.mxu0
    %v2693 = vld [vmem:[%s7] sm:$0xff]
    %v2694 = vld [vmem:[%s7 + $0x8] sm:$0xff]
    %v2695 = vld [vmem:[%s7 + $0x10] sm:$0xff]
    %v2696 = vld [vmem:[%s7 + $0x18] sm:$0xff]
    %v2697 = vld [vmem:[%s8] sm:$0x1]
    %v2699 = vlaneseq
    %v2700 = vshrl.u32 %v2699, 7
    %v2701 = vsub.s32 0, %v2700
    %v2702 = vrot.slane %v2697, %v2701
    %v2704 = vrot.slane %v2587, 7
    %v2705 = vrot.slane %v2588, 6
    %v2706 = vsel %vm294, %v2705, %v2704
    %2707 = vrot.lane.b32.xlu0 %v2706, 32
    %v2708 = vpop.permute.xlu0 %2707
    %v2709 = vsel %vm154, %v2708, 0
    %2711 = vmatprep.subr.mxu0 0.0
    %2712 = vmatpush1.msra.mxu0 0.0
    %2713 = vmatprep.subr.mxu0 0.0
    %2714 = vmatpush1.msra.mxu0 0.0
    %2715 = vmatprep.subr.mxu0 0.0
    %2716 = vmatpush1.msra.mxu0 0.0
    %2717 = vmatprep.subr.mxu0 0.0
    %2718 = vmatpush1.msra.mxu0 0.0
    %2719 = vmatprep.subr.mxu0 0.0
    %2720 = vmatpush1.msra.mxu0 0.0
    %2721 = vmatprep.subr.mxu0 0.0
    %2722 = vmatpush1.msra.mxu0 0.0
    %2723 = vmatprep.subr.mxu0 0.0
    %2724 = vmatpush1.msra.mxu0 0.0
    %2725 = vmatprep.subr.mxu0 0.0
    %2726 = vmatpush1.msra.mxu0 0.0
    %2727 = vmatprep.subr.mxu0 0.0
    %2728 = vmatpush1.msra.mxu0 0.0
    %2729 = vmatprep.subr.mxu0 0.0
    %2730 = vmatpush1.msra.mxu0 0.0
    %2731 = vmatprep.subr.mxu0 0.0
    %2732 = vmatpush1.msra.mxu0 0.0
    %2733 = vmatprep.subr.mxu0 0.0
    %2734 = vmatpush1.msra.mxu0 0.0
    %2735 = vmatprep.subr.mxu0 0.0
    %2736 = vmatpush1.msra.mxu0 %v2696
    %2737 = vmatprep.subr.mxu0 0.0
    %2738 = vmatpush1.msra.mxu0 %v2695
    %2739 = vmatprep.subr.mxu0 0.0
    %2740 = vmatpush1.msra.mxu0 %v2694
    %2741 = vmatprep.subr.mxu0 0.0
    %2742 = vmatpush1.msra.mxu0 %v2693
    %2743 = vmatprep.subr.mxu0 0.0
    %2744 = vmatpush2.msra.mxu0 0.0
    %2745 = vmatprep.subr.mxu0 0.0
    %2746 = vmatpush2.msra.mxu0 0.0
    %2747 = vmatprep.subr.mxu0 0.0
    %2748 = vmatpush2.msra.mxu0 0.0
    %2749 = vmatprep.subr.mxu0 0.0
    %2750 = vmatpush2.msra.mxu0 0.0
    %2751 = vmatprep.subr.mxu0 0.0
    %2752 = vmatpush2.msra.mxu0 0.0
    %2753 = vmatprep.subr.mxu0 0.0
    %2754 = vmatpush2.msra.mxu0 0.0
    %2755 = vmatprep.subr.mxu0 0.0
    %2756 = vmatpush2.msra.mxu0 0.0
    %2757 = vmatprep.subr.mxu0 0.0
    %2758 = vmatpush2.msra.mxu0 0.0
    %2759 = vmatprep.subr.mxu0 0.0
    %2760 = vmatpush2.msra.mxu0 0.0
    %2761 = vmatprep.subr.mxu0 0.0
    %2762 = vmatpush2.msra.mxu0 0.0
    %2763 = vmatprep.subr.mxu0 0.0
    %2764 = vmatpush2.msra.mxu0 0.0
    %2765 = vmatprep.subr.mxu0 0.0
    %2766 = vmatpush2.msra.mxu0 0.0
    %2767 = vmatprep.subr.mxu0 0.0
    %2768 = vmatpush2.msra.mxu0 0.0
    %2769 = vmatprep.subr.mxu0 0.0
    %2770 = vmatpush2.msra.mxu0 0.0
    %2771 = vmatprep.subr.mxu0 0.0
    %2772 = vmatpush2.msra.mxu0 0.0
    %2773 = vmatprep.subr.mxu0 0.0
    %2774 = vmatpush2.msra.mxu0 0.0
    %2775 = vmatprep.mubr.f32.mxu0 0.0
    %2776 = vmatmul.mubr.f32.gmra.mxu0 %v2709
    %v2777 = vpop.f32.mrf.mxu0
    %v2778 = vadd.f32 %v2702, %v2777
    %v2779 = vpop.f32.mrf.mxu0
    %2780 = vdwg.mxu0
    %v2783 = vunpack.c.l.s4 1966171168
    %v2784 = vunpack.c.0.s8 %v2783
    %v2785 = vlaneseq
    %v2786 = vshrl.u32 %v2785, 7
    %v2787 = vsub.s32 %v2784, %v2786
    %v2788 = vrot.slane %v2778, %v2787
    %v2789 = vcombine.high %v2788, %v2788
    %v2791 = vunpack.c.l.s4 1966171168
    %v2792 = vunpack.c.0.s8 %v2791
    %v2793 = vlaneseq
    %v2794 = vshrl.u32 %v2793, 7
    %v2795 = vsub.s32 %v2792, %v2794
    %v2796 = vrot.slane %v2788, %v2795
    %v2798 = vunpack.c.l.s4 1966171168
    %v2799 = vunpack.c.0.s8 %v2798
    %v2800 = vlaneseq
    %v2801 = vshrl.u32 %v2800, 7
    %v2802 = vsub.s32 %v2799, %v2801
    %v2803 = vrot.slane %v2789, %v2802
    %v2804 = vlaneseq
    %v2805 = vshrl.u32 %v2804, 7
    %v2806 = vsub.s32 0, %v2805
    %v2807 = vrot.slane %v2796, %v2806
    %v2808 = vlaneseq
    %v2809 = vshrl.u32 %v2808, 7
    %v2810 = vsub.s32 0, %v2809
    %v2811 = vrot.slane %v2803, %v2810
    %v2814 = vmul.f32 %v2807, %v2685
    %v2815 = vmul.f32 %v2811, %v2690
    %v2816 = vld [vmem:[%s11] sm:$0xff]
    %v2817 = vld [vmem:[%s11 + $0x8] sm:$0xff]
    %v2818 = vld [vmem:[%s11 + $0x10] sm:$0xff]
    %v2819 = vld [vmem:[%s11 + $0x18] sm:$0xff]
    %v2821 = vsel %vm154, %v2814, 0
    %v2824 = vsel %vm154, %v2815, 0
    %2826 = vmatprep.subr.mxu0 0.0
    %2827 = vmatpush1.msra.mxu0 0.0
    %2828 = vmatprep.subr.mxu0 0.0
    %2829 = vmatpush1.msra.mxu0 0.0
    %2830 = vmatprep.subr.mxu0 0.0
    %2831 = vmatpush1.msra.mxu0 0.0
    %2832 = vmatprep.subr.mxu0 0.0
    %2833 = vmatpush1.msra.mxu0 0.0
    %2834 = vmatprep.subr.mxu0 0.0
    %2835 = vmatpush1.msra.mxu0 0.0
    %2836 = vmatprep.subr.mxu0 0.0
    %2837 = vmatpush1.msra.mxu0 0.0
    %2838 = vmatprep.subr.mxu0 0.0
    %2839 = vmatpush1.msra.mxu0 0.0
    %2840 = vmatprep.subr.mxu0 0.0
    %2841 = vmatpush1.msra.mxu0 0.0
    %2842 = vmatprep.subr.mxu0 0.0
    %2843 = vmatpush1.msra.mxu0 0.0
    %2844 = vmatprep.subr.mxu0 0.0
    %2845 = vmatpush1.msra.mxu0 0.0
    %2846 = vmatprep.subr.mxu0 0.0
    %2847 = vmatpush1.msra.mxu0 0.0
    %2848 = vmatprep.subr.mxu0 0.0
    %2849 = vmatpush1.msra.mxu0 0.0
    %2850 = vmatprep.subr.mxu0 0.0
    %2851 = vmatpush1.msra.mxu0 %v2819
    %2852 = vmatprep.subr.mxu0 0.0
    %2853 = vmatpush1.msra.mxu0 %v2818
    %2854 = vmatprep.subr.mxu0 0.0
    %2855 = vmatpush1.msra.mxu0 %v2817
    %2856 = vmatprep.subr.mxu0 0.0
    %2857 = vmatpush1.msra.mxu0 %v2816
    %2858 = vmatprep.subr.mxu0 0.0
    %2859 = vmatpush2.msra.mxu0 0.0
    %2860 = vmatprep.subr.mxu0 0.0
    %2861 = vmatpush2.msra.mxu0 0.0
    %2862 = vmatprep.subr.mxu0 0.0
    %2863 = vmatpush2.msra.mxu0 0.0
    %2864 = vmatprep.subr.mxu0 0.0
    %2865 = vmatpush2.msra.mxu0 0.0
    %2866 = vmatprep.subr.mxu0 0.0
    %2867 = vmatpush2.msra.mxu0 0.0
    %2868 = vmatprep.subr.mxu0 0.0
    %2869 = vmatpush2.msra.mxu0 0.0
    %2870 = vmatprep.subr.mxu0 0.0
    %2871 = vmatpush2.msra.mxu0 0.0
    %2872 = vmatprep.subr.mxu0 0.0
    %2873 = vmatpush2.msra.mxu0 0.0
    %2874 = vmatprep.subr.mxu0 0.0
    %2875 = vmatpush2.msra.mxu0 0.0
    %2876 = vmatprep.subr.mxu0 0.0
    %2877 = vmatpush2.msra.mxu0 0.0
    %2878 = vmatprep.subr.mxu0 0.0
    %2879 = vmatpush2.msra.mxu0 0.0
    %2880 = vmatprep.subr.mxu0 0.0
    %2881 = vmatpush2.msra.mxu0 0.0
    %2882 = vmatprep.subr.mxu0 0.0
    %2883 = vmatpush2.msra.mxu0 0.0
    %2884 = vmatprep.subr.mxu0 0.0
    %2885 = vmatpush2.msra.mxu0 0.0
    %2886 = vmatprep.subr.mxu0 0.0
    %2887 = vmatpush2.msra.mxu0 0.0
    %2888 = vmatprep.subr.mxu0 0.0
    %2889 = vmatpush2.msra.mxu0 0.0
    %2890 = vmatprep.mubr.f32.mxu0 0.0
    %2891 = vmatmul.mubr.f32.gmra.mxu0 %v2821
    %v2892 = vpop.f32.mrf.mxu0
    %v2893 = vadd.f32 0.0, %v2892
    %v2894 = vpop.f32.mrf.mxu0
    %2895 = vmatprep.mubr.f32.mxu0 0.0
    %2896 = vmatmul.mubr.f32.gmra.mxu0 %v2824
    %v2897 = vpop.f32.mrf.mxu0
    %v2898 = vadd.f32 0.0, %v2897
    %v2899 = vpop.f32.mrf.mxu0
    %2900 = vdwg.mxu0
    %vm2901 = vcmask 31744
    %v2902 = vsel %vm2901, %v2893, -inf
    %v2903 = vrot.slane %v2902, 4
    %v2904 = vmax.f32 %v2902, %v2903
    %v2905 = vrot.slane %v2904, 2
    %v2906 = vmax.f32 %v2904, %v2905
    %v2907 = vrot.slane %v2906, 1
    %v2908 = vmax.f32 %v2906, %v2907
    %v2909 = vsel %vm2901, %v2898, -inf
    %v2910 = vrot.slane %v2909, 4
    %v2911 = vmax.f32 %v2909, %v2910
    %v2912 = vrot.slane %v2911, 2
    %v2913 = vmax.f32 %v2911, %v2912
    %v2914 = vrot.slane %v2913, 1
    %v2915 = vmax.f32 %v2913, %v2914
    %v2916 = vsub.f32 %v2893, %v2908
    %v2917 = vsub.f32 %v2898, %v2915
    %v2918 = vmul.f32 %v2916, 1.442695
    %v2919 = vpow.pop %v2918
    %v2920 = vmul.f32 %v2917, 1.442695
    %v2921 = vpow.pop %v2920
    %v2922 = vsel %vm2901, %v2919, 0.0
    %v2923 = vrot.slane %v2922, 4
    %v2924 = vadd.f32 %v2922, %v2923
    %v2925 = vrot.slane %v2924, 2
    %v2926 = vadd.f32 %v2924, %v2925
    %v2927 = vrot.slane %v2926, 1
    %v2928 = vadd.f32 %v2926, %v2927
    %v2929 = vsel %vm2901, %v2921, 0.0
    %v2930 = vrot.slane %v2929, 4
    %v2931 = vadd.f32 %v2929, %v2930
    %v2932 = vrot.slane %v2931, 2
    %v2933 = vadd.f32 %v2931, %v2932
    %v2934 = vrot.slane %v2933, 1
    %v2935 = vadd.f32 %v2933, %v2934
    %v2936 = vrcp.pop %v2928
    %v2937 = vrcp.pop %v2935
    %v2938 = vmul.f32 %v2919, %v2936
    %v2939 = vmul.f32 %v2921, %v2937
    %v2940 = vld [vmem:[%s12] sm:$0xf]
    %v2942 = vsel %vm2901, %v2938, 0
    %v2945 = vsel %vm2901, %v2939, 0
    %vm2947 = vcmask 1043456
    %v2949 = vsel %vm2947, %v2940, 0
    %2951 = vmatprep.subr.mxu0 0.0
    %2952 = vmatpush1.msra.mxu0 0.0
    %2953 = vmatprep.subr.mxu0 0.0
    %2954 = vmatpush1.msra.mxu0 0.0
    %2955 = vmatprep.subr.mxu0 0.0
    %2956 = vmatpush1.msra.mxu0 0.0
    %2957 = vmatprep.subr.mxu0 0.0
    %2958 = vmatpush1.msra.mxu0 0.0
    %2959 = vmatprep.subr.mxu0 0.0
    %2960 = vmatpush1.msra.mxu0 0.0
    %2961 = vmatprep.subr.mxu0 0.0
    %2962 = vmatpush1.msra.mxu0 0.0
    %2963 = vmatprep.subr.mxu0 0.0
    %2964 = vmatpush1.msra.mxu0 0.0
    %2965 = vmatprep.subr.mxu0 0.0
    %2966 = vmatpush1.msra.mxu0 0.0
    %2967 = vmatprep.subr.mxu0 0.0
    %2968 = vmatpush1.msra.mxu0 0.0
    %2969 = vmatprep.subr.mxu0 0.0
    %2970 = vmatpush1.msra.mxu0 0.0
    %2971 = vmatprep.subr.mxu0 0.0
    %2972 = vmatpush1.msra.mxu0 0.0
    %2973 = vmatprep.subr.mxu0 0.0
    %2974 = vmatpush1.msra.mxu0 0.0
    %2975 = vmatprep.subr.mxu0 0.0
    %2976 = vmatpush1.msra.mxu0 0.0
    %2977 = vmatprep.subr.mxu0 0.0
    %2978 = vmatpush1.msra.mxu0 0.0
    %2979 = vmatprep.subr.mxu0 0.0
    %2980 = vmatpush1.msra.mxu0 0.0
    %2981 = vmatprep.subr.mxu0 0.0
    %2982 = vmatpush1.msra.mxu0 %v2949
    %2983 = vmatprep.subr.mxu0 0.0
    %2984 = vmatpush2.msra.mxu0 0.0
    %2985 = vmatprep.subr.mxu0 0.0
    %2986 = vmatpush2.msra.mxu0 0.0
    %2987 = vmatprep.subr.mxu0 0.0
    %2988 = vmatpush2.msra.mxu0 0.0
    %2989 = vmatprep.subr.mxu0 0.0
    %2990 = vmatpush2.msra.mxu0 0.0
    %2991 = vmatprep.subr.mxu0 0.0
    %2992 = vmatpush2.msra.mxu0 0.0
    %2993 = vmatprep.subr.mxu0 0.0
    %2994 = vmatpush2.msra.mxu0 0.0
    %2995 = vmatprep.subr.mxu0 0.0
    %2996 = vmatpush2.msra.mxu0 0.0
    %2997 = vmatprep.subr.mxu0 0.0
    %2998 = vmatpush2.msra.mxu0 0.0
    %2999 = vmatprep.subr.mxu0 0.0
    %3000 = vmatpush2.msra.mxu0 0.0
    %3001 = vmatprep.subr.mxu0 0.0
    %3002 = vmatpush2.msra.mxu0 0.0
    %3003 = vmatprep.subr.mxu0 0.0
    %3004 = vmatpush2.msra.mxu0 0.0
    %3005 = vmatprep.subr.mxu0 0.0
    %3006 = vmatpush2.msra.mxu0 0.0
    %3007 = vmatprep.subr.mxu0 0.0
    %3008 = vmatpush2.msra.mxu0 0.0
    %3009 = vmatprep.subr.mxu0 0.0
    %3010 = vmatpush2.msra.mxu0 0.0
    %3011 = vmatprep.subr.mxu0 0.0
    %3012 = vmatpush2.msra.mxu0 0.0
    %3013 = vmatprep.subr.mxu0 0.0
    %3014 = vmatpush2.msra.mxu0 0.0
    %3015 = vmatprep.mubr.f32.mxu0 0.0
    %3016 = vmatmul.mubr.f32.gmra.mxu0 %v2942
    %v3017 = vpop.f32.mrf.mxu0
    %v3018 = vadd.f32 0.0, %v3017
    %v3019 = vpop.f32.mrf.mxu0
    %3020 = vmatprep.mubr.f32.mxu0 0.0
    %3021 = vmatmul.mubr.f32.gmra.mxu0 %v2945
    %v3022 = vpop.f32.mrf.mxu0
    %v3023 = vadd.f32 0.0, %v3022
    %v3024 = vpop.f32.mrf.mxu0
    %3025 = vdwg.mxu0
    %3028 = vrot.lane.b32.xlu0 %v2685, 96
    %v3029 = vpop.permute.xlu0 %3028
    %3030 = vrot.lane.b32.xlu0 %v2690, 96
    %v3031 = vpop.permute.xlu0 %3030
    %v3034 = vmul.f32 %v3018, %v3029
    %v3035 = vmul.f32 %v3023, %v3031
    %v3036 = vsel %vm154, %v3034, 0.0
    %v3037 = vrot.slane %v3036, 4
    %v3038 = vadd.f32 %v3036, %v3037
    %v3039 = vrot.slane %v3038, 2
    %v3040 = vadd.f32 %v3038, %v3039
    %v3041 = vrot.slane %v3040, 1
    %v3042 = vadd.f32 %v3040, %v3041
    %v3043 = vsel %vm154, %v3035, 0.0
    %v3044 = vrot.slane %v3043, 4
    %v3045 = vadd.f32 %v3043, %v3044
    %v3046 = vrot.slane %v3045, 2
    %v3047 = vadd.f32 %v3045, %v3046
    %v3048 = vrot.slane %v3047, 1
    %v3049 = vadd.f32 %v3047, %v3048
    %v3050 = vld [vmem:[%s13] sm:$0xff]
    %v3051 = vld [vmem:[%s13 + $0x8] sm:$0xff]
    %v3052 = vld [vmem:[%s13 + $0x10] sm:$0xff]
    %v3053 = vld [vmem:[%s13 + $0x18] sm:$0xff]
    %v3054 = vld [vmem:[%s14] sm:$0x1]
    %v3056 = vlaneseq
    %v3057 = vshrl.u32 %v3056, 7
    %v3058 = vsub.s32 0, %v3057
    %v3059 = vrot.slane %v3054, %v3058
    %v3063 = vsel %vm294, %v3049, %v3042
    %v3064 = vsel %vm154, %v3063, 0
    %3066 = vmatprep.subr.mxu0 0.0
    %3067 = vmatpush1.msra.mxu0 0.0
    %3068 = vmatprep.subr.mxu0 0.0
    %3069 = vmatpush1.msra.mxu0 0.0
    %3070 = vmatprep.subr.mxu0 0.0
    %3071 = vmatpush1.msra.mxu0 0.0
    %3072 = vmatprep.subr.mxu0 0.0
    %3073 = vmatpush1.msra.mxu0 0.0
    %3074 = vmatprep.subr.mxu0 0.0
    %3075 = vmatpush1.msra.mxu0 0.0
    %3076 = vmatprep.subr.mxu0 0.0
    %3077 = vmatpush1.msra.mxu0 0.0
    %3078 = vmatprep.subr.mxu0 0.0
    %3079 = vmatpush1.msra.mxu0 0.0
    %3080 = vmatprep.subr.mxu0 0.0
    %3081 = vmatpush1.msra.mxu0 0.0
    %3082 = vmatprep.subr.mxu0 0.0
    %3083 = vmatpush1.msra.mxu0 0.0
    %3084 = vmatprep.subr.mxu0 0.0
    %3085 = vmatpush1.msra.mxu0 0.0
    %3086 = vmatprep.subr.mxu0 0.0
    %3087 = vmatpush1.msra.mxu0 0.0
    %3088 = vmatprep.subr.mxu0 0.0
    %3089 = vmatpush1.msra.mxu0 0.0
    %3090 = vmatprep.subr.mxu0 0.0
    %3091 = vmatpush1.msra.mxu0 %v3053
    %3092 = vmatprep.subr.mxu0 0.0
    %3093 = vmatpush1.msra.mxu0 %v3052
    %3094 = vmatprep.subr.mxu0 0.0
    %3095 = vmatpush1.msra.mxu0 %v3051
    %3096 = vmatprep.subr.mxu0 0.0
    %3097 = vmatpush1.msra.mxu0 %v3050
    %3098 = vmatprep.subr.mxu0 0.0
    %3099 = vmatpush2.msra.mxu0 0.0
    %3100 = vmatprep.subr.mxu0 0.0
    %3101 = vmatpush2.msra.mxu0 0.0
    %3102 = vmatprep.subr.mxu0 0.0
    %3103 = vmatpush2.msra.mxu0 0.0
    %3104 = vmatprep.subr.mxu0 0.0
    %3105 = vmatpush2.msra.mxu0 0.0
    %3106 = vmatprep.subr.mxu0 0.0
    %3107 = vmatpush2.msra.mxu0 0.0
    %3108 = vmatprep.subr.mxu0 0.0
    %3109 = vmatpush2.msra.mxu0 0.0
    %3110 = vmatprep.subr.mxu0 0.0
    %3111 = vmatpush2.msra.mxu0 0.0
    %3112 = vmatprep.subr.mxu0 0.0
    %3113 = vmatpush2.msra.mxu0 0.0
    %3114 = vmatprep.subr.mxu0 0.0
    %3115 = vmatpush2.msra.mxu0 0.0
    %3116 = vmatprep.subr.mxu0 0.0
    %3117 = vmatpush2.msra.mxu0 0.0
    %3118 = vmatprep.subr.mxu0 0.0
    %3119 = vmatpush2.msra.mxu0 0.0
    %3120 = vmatprep.subr.mxu0 0.0
    %3121 = vmatpush2.msra.mxu0 0.0
    %3122 = vmatprep.subr.mxu0 0.0
    %3123 = vmatpush2.msra.mxu0 0.0
    %3124 = vmatprep.subr.mxu0 0.0
    %3125 = vmatpush2.msra.mxu0 0.0
    %3126 = vmatprep.subr.mxu0 0.0
    %3127 = vmatpush2.msra.mxu0 0.0
    %3128 = vmatprep.subr.mxu0 0.0
    %3129 = vmatpush2.msra.mxu0 0.0
    %3130 = vmatprep.mubr.f32.mxu0 0.0
    %3131 = vmatmul.mubr.f32.gmra.mxu0 %v3064
    %v3132 = vpop.f32.mrf.mxu0
    %v3133 = vadd.f32 %v3059, %v3132
    %v3134 = vpop.f32.mrf.mxu0
    %3135 = vdwg.mxu0
    %v3136 = vmax.f32 %v3133, 0.0
    %v3137 = vld [vmem:[%s15] sm:$0xff]
    %v3138 = vld [vmem:[%s15 + $0x8] sm:$0xff]
    %v3139 = vld [vmem:[%s16] sm:$0x1]
    %v3141 = vlaneseq
    %v3142 = vshrl.u32 %v3141, 7
    %v3143 = vsub.s32 0, %v3142
    %v3144 = vrot.slane %v3139, %v3143
    %v3147 = vsel %vm68, %v3136, 0
    %3149 = vmatprep.subr.mxu0 0.0
    %3150 = vmatpush1.msra.mxu0 0.0
    %3151 = vmatprep.subr.mxu0 0.0
    %3152 = vmatpush1.msra.mxu0 0.0
    %3153 = vmatprep.subr.mxu0 0.0
    %3154 = vmatpush1.msra.mxu0 0.0
    %3155 = vmatprep.subr.mxu0 0.0
    %3156 = vmatpush1.msra.mxu0 0.0
    %3157 = vmatprep.subr.mxu0 0.0
    %3158 = vmatpush1.msra.mxu0 0.0
    %3159 = vmatprep.subr.mxu0 0.0
    %3160 = vmatpush1.msra.mxu0 0.0
    %3161 = vmatprep.subr.mxu0 0.0
    %3162 = vmatpush1.msra.mxu0 0.0
    %3163 = vmatprep.subr.mxu0 0.0
    %3164 = vmatpush1.msra.mxu0 0.0
    %3165 = vmatprep.subr.mxu0 0.0
    %3166 = vmatpush1.msra.mxu0 0.0
    %3167 = vmatprep.subr.mxu0 0.0
    %3168 = vmatpush1.msra.mxu0 0.0
    %3169 = vmatprep.subr.mxu0 0.0
    %3170 = vmatpush1.msra.mxu0 0.0
    %3171 = vmatprep.subr.mxu0 0.0
    %3172 = vmatpush1.msra.mxu0 0.0
    %3173 = vmatprep.subr.mxu0 0.0
    %3174 = vmatpush1.msra.mxu0 0.0
    %3175 = vmatprep.subr.mxu0 0.0
    %3176 = vmatpush1.msra.mxu0 0.0
    %3177 = vmatprep.subr.mxu0 0.0
    %3178 = vmatpush1.msra.mxu0 %v3138
    %3179 = vmatprep.subr.mxu0 0.0
    %3180 = vmatpush1.msra.mxu0 %v3137
    %3181 = vmatprep.subr.mxu0 0.0
    %3182 = vmatpush2.msra.mxu0 0.0
    %3183 = vmatprep.subr.mxu0 0.0
    %3184 = vmatpush2.msra.mxu0 0.0
    %3185 = vmatprep.subr.mxu0 0.0
    %3186 = vmatpush2.msra.mxu0 0.0
    %3187 = vmatprep.subr.mxu0 0.0
    %3188 = vmatpush2.msra.mxu0 0.0
    %3189 = vmatprep.subr.mxu0 0.0
    %3190 = vmatpush2.msra.mxu0 0.0
    %3191 = vmatprep.subr.mxu0 0.0
    %3192 = vmatpush2.msra.mxu0 0.0
    %3193 = vmatprep.subr.mxu0 0.0
    %3194 = vmatpush2.msra.mxu0 0.0
    %3195 = vmatprep.subr.mxu0 0.0
    %3196 = vmatpush2.msra.mxu0 0.0
    %3197 = vmatprep.subr.mxu0 0.0
    %3198 = vmatpush2.msra.mxu0 0.0
    %3199 = vmatprep.subr.mxu0 0.0
    %3200 = vmatpush2.msra.mxu0 0.0
    %3201 = vmatprep.subr.mxu0 0.0
    %3202 = vmatpush2.msra.mxu0 0.0
    %3203 = vmatprep.subr.mxu0 0.0
    %3204 = vmatpush2.msra.mxu0 0.0
    %3205 = vmatprep.subr.mxu0 0.0
    %3206 = vmatpush2.msra.mxu0 0.0
    %3207 = vmatprep.subr.mxu0 0.0
    %3208 = vmatpush2.msra.mxu0 0.0
    %3209 = vmatprep.subr.mxu0 0.0
    %3210 = vmatpush2.msra.mxu0 0.0
    %3211 = vmatprep.subr.mxu0 0.0
    %3212 = vmatpush2.msra.mxu0 0.0
    %3213 = vmatprep.mubr.f32.mxu0 0.0
    %3214 = vmatmul.mubr.f32.gmra.mxu0 %v3147
    %v3215 = vpop.f32.mrf.mxu0
    %v3216 = vadd.f32 %v3144, %v3215
    %v3217 = vpop.f32.mrf.mxu0
    %3218 = vdwg.mxu0
    %3219 = vst [vmem:[#allocation4] sm:$0x3] %v3216
    // Predicated region
    $region70: #{lstm_regime_predictor.1} parent=1 // pred_check
      _
    $region71: #{lstm_regime_predictor.1} parent=1 // pred_check_branch
      %3221 = sbr.rel (0) target = $region73
    $region72: #{lstm_regime_predictor.1} parent=1 // pred_region
      %s3223 = ssub.s32 32, 32
      %3224 = vsyncadd [#allocation5], %s3223
      %s3226 = sshll.u32 [#allocation4], 4
      %s3227 = int_to_ptr.vmem [resolvable:$true] %s3226
      %3229 = dma.vmem_to_hbm [thread:$0]  %s3227, 32, %s17, [#allocation5]
    $region73: #{lstm_regime_predictor.1} parent=1 // pred_fallthru
      _
    // Predicated region
    $region74: #{lstm_regime_predictor.1} parent=1 // pred_check
      _
    $region75: #{lstm_regime_predictor.1} parent=1 // pred_check_branch
      %3231 = sbr.rel (0) target = $region77
    $region76: #{lstm_regime_predictor.1} parent=1 // pred_region
      %3232 = dma.done [#allocation5], 32
    $region77: #{lstm_regime_predictor.1} parent=1 // pred_fallthru
      _
    %3233 = vsyncpa [#allocation5], 1

</llo_original>
